<compile_context>
chip_gen: v7x
topology: tpu7x:2x2x1
jax: 0.10.0
libtpu: 0.0.40
codegen_flags: <defaults>
</compile_context>

<pallas_src>
import functools
import math

import jax
import jax.numpy as jnp
from jax.experimental import pallas as pl
from jax.experimental.pallas import tpu as pltpu

LEAKY_SLOPE = 0.2
BN_EPS = 1e-5


# ----------------------------- in-kernel helpers -----------------------------
def _leaky(x):
    # one mul + max instead of compare + select (valid because slope < 1)
    return jnp.maximum(x, LEAKY_SLOPE * x)


def _bn(x, g, b):
    # BatchNorm1d, training mode: stats over the batch axis (axis 0), biased var.
    mean = jnp.mean(x, axis=0, keepdims=True)
    var = jnp.mean(jnp.square(x - mean), axis=0, keepdims=True)
    return (x - mean) * jax.lax.rsqrt(var + BN_EPS) * g + b


def _softmax(x):
    m = jnp.max(x, axis=-1, keepdims=True)
    e = jnp.exp(x - m)
    return e / jnp.sum(e, axis=-1, keepdims=True)


# --------------------------- wrapper-side packing -----------------------------
def _round_up(x, m):
    return ((x + m - 1) // m) * m


def _pack_rows(named_mats):
    """Stack 2-D arrays along sublanes, zero-padding lanes to a common 128-mult width."""
    lane = _round_up(max(128, max(m.shape[1] for _, m in named_mats)), 128)
    blocks, layout, row = [], {}, 0
    for name, m in named_mats:
        r, c = m.shape
        layout[name] = (row, r, c)
        blocks.append(jnp.pad(m.astype(jnp.float32), ((0, 0), (0, lane - c))))
        row += r
    pad = _round_up(row, 8) - row
    if pad:
        blocks.append(jnp.zeros((pad, lane), jnp.float32))
    return jnp.concatenate(blocks, axis=0), layout


# -------------------------------- wrapper -------------------------------------
def run_generator(z, params, num_steps, temperature, gumbel):
    """Greedy forward. z: (B, noise). gumbel: (B, num_steps, V). Returns (B, num_steps, V)."""
    f32 = jnp.float32
    B, _ = z.shape
    H = params["gru_whh"].shape[0]
    V = params["h2o_w"].shape[1]
    H8 = params["attn_qw"].shape[1]

    # fused q|k|v projection (one matmul in-kernel)
    qkv_w = jnp.concatenate([params["attn_qw"], params["attn_kw"], params["attn_vw"]], axis=1)
    qkv_b = jnp.concatenate([params["attn_qb"], params["attn_kb"], params["attn_vb"]], axis=1)

    # leaky-relu hoisted over the embedding table (exact: rows are selected by one-hots)
    emb_leaky = jnp.maximum(params["emb"], LEAKY_SLOPE * params["emb"])

    # stacked GRU gate weight: [e_n | h] @ w_stack -> columns [r | z | n_i | n_h]
    w_ih, w_hh = params["gru_wih"], params["gru_whh"]
    zero_h = jnp.zeros((H, H), f32)
    w_stack = jnp.concatenate(
        [jnp.concatenate([w_ih[:H, :], zero_h], axis=1),                      # x rows
         jnp.concatenate([w_hh[:, :2 * H], zero_h, w_hh[:, 2 * H:]], axis=1)],  # h rows
        axis=0)

    mat_slab, mat_layout = _pack_rows([
        ("z2h_w", params["z2h_w"]),
        ("qkv_w", qkv_w),
        ("emb_leaky", emb_leaky),
        ("w_ih_z", w_ih[H:, :]),      # z-half of the GRU input weights (hoisted gi_z)
        ("h2o_w", params["h2o_w"]),
        ("w_stack", w_stack),
    ])
    vec_slab, vec_layout = _pack_rows([
        ("z2h_b", params["z2h_b"]),
        ("bn1_g", params["bn1_g"]), ("bn1_b", params["bn1_b"]),
        ("qkv_b", qkv_b),
        ("bn2_g", params["bn2_g"]), ("bn2_b", params["bn2_b"]),
        ("bn3_g", params["bn3_g"]), ("bn3_b", params["bn3_b"]),
        ("gru_bih", params["gru_bih"]), ("gru_bhh", params["gru_bhh"]),
        ("bn4_g", params["bn4_g"]), ("bn4_b", params["bn4_b"]),
        ("h2o_b", params["h2o_b"]),
    ])

    scal = jnp.concatenate([jnp.full((1,), temperature, f32),
                            params["attn_gamma"].astype(f32).reshape(1)])
    gum2 = gumbel.astype(f32).reshape(B, num_steps * V)   # lane-dense, free reshape

    # --------------------------------- kernel ---------------------------------
    def gen_kernel(scal_ref, gum_ref, z_ref, vec_ref, mat_ref, out_ref):
        inv_t = 1.0 / scal_ref[0]
        gamma = scal_ref[1]

        def m_(name):
            off, nr, nc = mat_layout[name]
            return mat_ref[off:off + nr, :nc]

        def v_(name):
            off, nr, nc = vec_layout[name]
            return vec_ref[off:off + nr, :nc]

        w_z2h, w_qkv = m_("z2h_w"), m_("qkv_w")
        t_emb, w_ihz = m_("emb_leaky"), m_("w_ih_z")
        w_out, w_gru = m_("h2o_w"), m_("w_stack")

        b_z2h, g1, b1 = v_("z2h_b"), v_("bn1_g"), v_("bn1_b")
        b_qkv, g2, b2 = v_("qkv_b"), v_("bn2_g"), v_("bn2_b")
        g3, b3 = v_("bn3_g"), v_("bn3_b")
        bih, bhh = v_("gru_bih"), v_("gru_bhh")
        g4, b4, b_out = v_("bn4_g"), v_("bn4_b"), v_("h2o_b")

        # ---- conditioning: z = bn2(leaky(attn(bn1(leaky(z2h(z)))))) ; h = z ----
        zc = jnp.dot(z_ref[...], w_z2h, preferred_element_type=jnp.float32) + b_z2h
        zc = _bn(_leaky(zc), g1, b1)
        qkv = jnp.dot(zc, w_qkv, preferred_element_type=jnp.float32) + b_qkv
        q, k, v = qkv[:, :H8], qkv[:, H8:2 * H8], qkv[:, 2 * H8:]
        att = _softmax(jnp.dot(q, k.T, preferred_element_type=jnp.float32))
        attended = gamma * jnp.dot(att, v, preferred_element_type=jnp.float32) + zc
        zc = _bn(_leaky(attended), g2, b2)
        h = zc

        # ---- step-invariant hoists ----
        # BN3 is per-feature over the batch, so it splits exactly across [emb | z].
        g3e, g3z = g3[:, :H], g3[:, H:]
        b3e, b3z = b3[:, :H], b3[:, H:]
        z_n = _bn(zc, g3z, b3z)
        gi_z = jnp.dot(z_n, w_ihz, preferred_element_type=jnp.float32) + bih
        # constant addend for the fused gate matmul, columns [r | z | n_i | n_h]
        addend = jnp.concatenate(
            [gi_z[:, :2 * H] + bhh[:, :2 * H],
             gi_z[:, 2 * H:],
             jnp.broadcast_to(bhh[:, 2 * H:], (B, H))], axis=1)

        # temperature folded into the output projection + gumbel slab (exact rewrite)
        w_out_t = w_out * inv_t
        b_out_t = b_out * inv_t
        gum_s = gum_ref[...] * inv_t

        lane = jax.lax.broadcasted_iota(jnp.int32, (B, V), 1)
        prev = (lane == (V - 1)).astype(jnp.float32)       # previous_output[:] = SOS

        # ---- decode loop, fully unrolled (num_steps static & small) ----
        for step in range(num_steps):
            # input = leaky(embedding(prev))  (leaky pre-applied to the table)
            emb_in = jnp.dot(prev, t_emb, preferred_element_type=jnp.float32)
            e_n = _bn(emb_in, g3e, b3e)        # emb half of BN3; z half hoisted

            # GRUCell with a single fused gate matmul
            xh = jnp.concatenate([e_n, h], axis=1)                       # (B, 2H)
            gg = jnp.dot(xh, w_gru, preferred_element_type=jnp.float32) + addend
            r = jax.nn.sigmoid(gg[:, :H])
            u = jax.nn.sigmoid(gg[:, H:2 * H])
            n = jnp.tanh(gg[:, 2 * H:3 * H] + r * gg[:, 3 * H:])
            h = (1.0 - u) * n + u * h

            # out = GumbelSoftmax(h2o(bn4(leaky(h))), T), temperature pre-folded
            o = _bn(_leaky(h), g4, b4)
            pert = (jnp.dot(o, w_out_t, preferred_element_type=jnp.float32)
                    + b_out_t + gum_s[:, step * V:(step + 1) * V])

            # softmax max is shared with the greedy argmax (one fewer XLU reduce)
            mx = jnp.max(pert, axis=-1, keepdims=True)
            e = jnp.exp(pert - mx)
            out_ref[:, step * V:(step + 1) * V] = e / jnp.sum(e, axis=-1, keepdims=True)

            if step + 1 < num_steps:
                # first-max, index-based tie-break (matches torch.argmax), as one-hot
                idx = jnp.min(jnp.where(pert == mx, lane, V), axis=-1, keepdims=True)
                prev = (lane == idx).astype(jnp.float32)

    vmem = pl.BlockSpec(memory_space=pltpu.MemorySpace.VMEM)
    smem = pl.BlockSpec(memory_space=pltpu.MemorySpace.SMEM)

    out = pl.pallas_call(
        gen_kernel,
        out_shape=jax.ShapeDtypeStruct((B, num_steps * V), f32),
        in_specs=[smem, vmem, vmem, vmem, vmem],
        out_specs=vmem,
    )(scal, gum2, z.astype(f32), vec_slab, mat_slab)

    # lane-dense (B, num_steps*V) -> (B, num_steps, V): free reshape, no transpose
    return out.reshape(B, num_steps, V)


# ------------------------- deterministic parameter init -----------------------
def _spectral_normalize(w, n_iter=30):
    u0 = jnp.ones((w.shape[0],), jnp.float32)
    v0 = jnp.ones((w.shape[1],), jnp.float32)

    def body(_, carry):
        u, v = carry
        v = w.T @ u
        v = v / (jnp.linalg.norm(v) + 1e-12)
        u = w @ v
        u = u / (jnp.linalg.norm(u) + 1e-12)
        return (u, v)

    u, v = jax.lax.fori_loop(0, n_iter, body, (u0, v0))
    sigma = u @ (w @ v)
    return w / sigma


def init_params(key, noise_size, hidden_size, output_size):
    H, V, N = hidden_size, output_size, noise_size
    H8 = max(H // 8, 1)
    ks = jax.random.split(key, 12)

    def lin_w(k, fan_in, shape):
        bound = 1.0 / math.sqrt(fan_in)
        return jax.random.uniform(k, shape, jnp.float32, -bound, bound)

    params = {
        # spectral-norm linears (weights stored as (in, out) for x @ W)
        "z2h_w": _spectral_normalize(lin_w(ks[0], N, (N, H))),
        "z2h_b": lin_w(ks[1], N, (1, H)),
        "attn_qw": _spectral_normalize(lin_w(ks[2], H, (H, H8))),
        "attn_qb": jnp.zeros((1, H8), jnp.float32),
        "attn_kw": _spectral_normalize(lin_w(ks[3], H, (H, H8))),
        "attn_kb": jnp.zeros((1, H8), jnp.float32),
        "attn_vw": _spectral_normalize(lin_w(ks[4], H, (H, H))),
        "attn_vb": jnp.zeros((1, H), jnp.float32),
        "attn_gamma": jnp.asarray([0.5], jnp.float32),  # nonzero so attention path is exercised
        "emb": jax.random.normal(ks[5], (V, H), jnp.float32),
        "gru_wih": lin_w(ks[6], H, (2 * H, 3 * H)),
        "gru_bih": lin_w(ks[7], H, (1, 3 * H)),
        "gru_whh": lin_w(ks[8], H, (H, 3 * H)),
        "gru_bhh": lin_w(ks[9], H, (1, 3 * H)),
        "h2o_w": _spectral_normalize(lin_w(ks[10], H, (H, V))),
        "h2o_b": lin_w(ks[11], H, (1, V)),
        # batch norms: PyTorch default affine init (gamma=1, beta=0)
        "bn1_g": jnp.ones((1, H), jnp.float32), "bn1_b": jnp.zeros((1, H), jnp.float32),
        "bn2_g": jnp.ones((1, H), jnp.float32), "bn2_b": jnp.zeros((1, H), jnp.float32),
        "bn3_g": jnp.ones((1, 2 * H), jnp.float32), "bn3_b": jnp.zeros((1, 2 * H), jnp.float32),
        "bn4_g": jnp.ones((1, H), jnp.float32), "bn4_b": jnp.zeros((1, H), jnp.float32),
    }
    return params


# ----------------------------------- main --------------------------------------
if __name__ == "__main__":
    batch = 8
    noise_size = 16
    hidden_size = 32
    output_size = 16      # vocab; SOS_TOKEN = output_size - 1
    num_steps = 8
    temperature = 1.0

    root = jax.random.PRNGKey(0)
    k_param, k_z, k_gum = jax.random.split(root, 3)

    params = init_params(k_param, noise_size, hidden_size, output_size)
    z = jax.random.normal(k_z, (batch, noise_size), jnp.float32)
    # pre-drawn Gumbel noise for GumbelSoftmax, lane-dense per (batch, step)
    gumbel = jax.random.gumbel(k_gum, (batch, num_steps, output_size), jnp.float32)

    fn = jax.jit(functools.partial(run_generator, num_steps=num_steps,
                                   temperature=temperature))
    out = jax.block_until_ready(fn(z, params, gumbel=gumbel))

    assert out.shape == (batch, num_steps, output_size)
    # each step's output is a (gumbel-)softmax distribution -> rows sum to ~1 (exact softmax)
    row_sums = jnp.sum(out, axis=-1)
    assert jnp.allclose(row_sums, 1.0, atol=1e-4), row_sums
    assert bool(jnp.all(out >= 0.0)), "probabilities must be non-negative"
    print("KERNEL_OK")
</pallas_src>

<mosaic_0001>
module attributes {stable_mosaic.version = 11 : i64} {
  func.func @gen_kernel(%arg0: memref<2xf32, #tpu.memory_space<smem>>, %arg1: memref<8x128xf32, #tpu.memory_space<vmem>>, %arg2: memref<8x16xf32, #tpu.memory_space<vmem>>, %arg3: memref<16x128xf32, #tpu.memory_space<vmem>>, %arg4: memref<192x128xf32, #tpu.memory_space<vmem>>, %arg5: memref<8x128xf32, #tpu.memory_space<vmem>>) attributes {dimension_semantics = [], scalar_prefetch = 0 : i64, scratch_operands = 0 : i64, tpu.core_type = #tpu.core_type<tc>} {
    %c0 = arith.constant 0 : index
    %0 = memref.load %arg0[%c0] : memref<2xf32, #tpu.memory_space<smem>>
    %cst = arith.constant 1.000000e+00 : f32
    %1 = arith.divf %cst, %0 : f32
    %c1 = arith.constant 1 : index
    %2 = memref.load %arg0[%c1] : memref<2xf32, #tpu.memory_space<smem>>
    %c0_0 = arith.constant 0 : index
    %c0_1 = arith.constant 0 : index
    %3 = vector.load %arg4[%c0_0, %c0_1] : memref<192x128xf32, #tpu.memory_space<vmem>>, vector<16x32xf32>
    %c16 = arith.constant 16 : index
    %c0_2 = arith.constant 0 : index
    %4 = vector.load %arg4[%c16, %c0_2] : memref<192x128xf32, #tpu.memory_space<vmem>>, vector<32x40xf32>
    %c48 = arith.constant 48 : index
    %c0_3 = arith.constant 0 : index
    %5 = vector.load %arg4[%c48, %c0_3] : memref<192x128xf32, #tpu.memory_space<vmem>>, vector<16x32xf32>
    %c64 = arith.constant 64 : index
    %c0_4 = arith.constant 0 : index
    %6 = vector.load %arg4[%c64, %c0_4] : memref<192x128xf32, #tpu.memory_space<vmem>>, vector<32x96xf32>
    %c96 = arith.constant 96 : index
    %c0_5 = arith.constant 0 : index
    %7 = vector.load %arg4[%c96, %c0_5] : memref<192x128xf32, #tpu.memory_space<vmem>>, vector<32x16xf32>
    %c128 = arith.constant 128 : index
    %c0_6 = arith.constant 0 : index
    %8 = vector.load %arg4[%c128, %c0_6] : memref<192x128xf32, #tpu.memory_space<vmem>>, vector<64x128xf32>
    %c0_7 = arith.constant 0 : index
    %c0_8 = arith.constant 0 : index
    %9 = vector.load %arg3[%c0_7, %c0_8] : memref<16x128xf32, #tpu.memory_space<vmem>>, vector<1x32xf32>
    %c1_9 = arith.constant 1 : index
    %c0_10 = arith.constant 0 : index
    %10 = vector.load %arg3[%c1_9, %c0_10] : memref<16x128xf32, #tpu.memory_space<vmem>>, vector<1x32xf32>
    %c2 = arith.constant 2 : index
    %c0_11 = arith.constant 0 : index
    %11 = vector.load %arg3[%c2, %c0_11] : memref<16x128xf32, #tpu.memory_space<vmem>>, vector<1x32xf32>
    %c3 = arith.constant 3 : index
    %c0_12 = arith.constant 0 : index
    %12 = vector.load %arg3[%c3, %c0_12] : memref<16x128xf32, #tpu.memory_space<vmem>>, vector<1x40xf32>
    %c4 = arith.constant 4 : index
    %c0_13 = arith.constant 0 : index
    %13 = vector.load %arg3[%c4, %c0_13] : memref<16x128xf32, #tpu.memory_space<vmem>>, vector<1x32xf32>
    %c5 = arith.constant 5 : index
    %c0_14 = arith.constant 0 : index
    %14 = vector.load %arg3[%c5, %c0_14] : memref<16x128xf32, #tpu.memory_space<vmem>>, vector<1x32xf32>
    %c6 = arith.constant 6 : index
    %c0_15 = arith.constant 0 : index
    %15 = vector.load %arg3[%c6, %c0_15] : memref<16x128xf32, #tpu.memory_space<vmem>>, vector<1x64xf32>
    %c7 = arith.constant 7 : index
    %c0_16 = arith.constant 0 : index
    %16 = vector.load %arg3[%c7, %c0_16] : memref<16x128xf32, #tpu.memory_space<vmem>>, vector<1x64xf32>
    %c8 = arith.constant 8 : index
    %c0_17 = arith.constant 0 : index
    %17 = vector.load %arg3[%c8, %c0_17] : memref<16x128xf32, #tpu.memory_space<vmem>>, vector<1x96xf32>
    %c9 = arith.constant 9 : index
    %c0_18 = arith.constant 0 : index
    %18 = vector.load %arg3[%c9, %c0_18] : memref<16x128xf32, #tpu.memory_space<vmem>>, vector<1x96xf32>
    %c10 = arith.constant 10 : index
    %c0_19 = arith.constant 0 : index
    %19 = vector.load %arg3[%c10, %c0_19] : memref<16x128xf32, #tpu.memory_space<vmem>>, vector<1x32xf32>
    %c11 = arith.constant 11 : index
    %c0_20 = arith.constant 0 : index
    %20 = vector.load %arg3[%c11, %c0_20] : memref<16x128xf32, #tpu.memory_space<vmem>>, vector<1x32xf32>
    %c12 = arith.constant 12 : index
    %c0_21 = arith.constant 0 : index
    %21 = vector.load %arg3[%c12, %c0_21] : memref<16x128xf32, #tpu.memory_space<vmem>>, vector<1x16xf32>
    %c0_22 = arith.constant 0 : index
    %c0_23 = arith.constant 0 : index
    %22 = vector.load %arg2[%c0_22, %c0_23] : memref<8x16xf32, #tpu.memory_space<vmem>>, vector<8x16xf32>
    %cst_24 = arith.constant dense<0.000000e+00> : vector<8x32xf32>
    %23 = tpu.matmul %22, %3, %cst_24 {dimension_numbers = #tpu.dot_dimension_numbers<[1], [0], [0], [1], [0, 0, 1, 1], [], []>} : vector<8x16xf32>, vector<16x32xf32>, vector<8x32xf32> -> vector<8x32xf32>
    %24 = vector.broadcast %9 : vector<1x32xf32> to vector<8x32xf32>
    %25 = arith.addf %23, %24 : vector<8x32xf32>
    %cst_25 = arith.constant 2.000000e-01 : f32
    %26 = vector.broadcast %cst_25 : f32 to vector<8x32xf32>
    %27 = arith.mulf %26, %25 : vector<8x32xf32>
    %28 = arith.maximumf %25, %27 : vector<8x32xf32>
    %cst_26 = arith.constant dense<0.000000e+00> : vector<32xf32>
    %29 = vector.multi_reduction <add>, %28, %cst_26 [0] : vector<8x32xf32> to vector<32xf32>
    %30 = vector.shape_cast %29 : vector<32xf32> to vector<1x32xf32>
    %cst_27 = arith.constant 8.000000e+00 : f32
    %31 = vector.broadcast %cst_27 : f32 to vector<1x32xf32>
    %32 = arith.divf %30, %31 : vector<1x32xf32>
    %33 = vector.broadcast %32 : vector<1x32xf32> to vector<8x32xf32>
    %34 = arith.subf %28, %33 : vector<8x32xf32>
    %35 = arith.mulf %34, %34 : vector<8x32xf32>
    %cst_28 = arith.constant dense<0.000000e+00> : vector<32xf32>
    %36 = vector.multi_reduction <add>, %35, %cst_28 [0] : vector<8x32xf32> to vector<32xf32>
    %37 = vector.shape_cast %36 : vector<32xf32> to vector<1x32xf32>
    %cst_29 = arith.constant 8.000000e+00 : f32
    %38 = vector.broadcast %cst_29 : f32 to vector<1x32xf32>
    %39 = arith.divf %37, %38 : vector<1x32xf32>
    %40 = vector.broadcast %32 : vector<1x32xf32> to vector<8x32xf32>
    %41 = arith.subf %28, %40 : vector<8x32xf32>
    %cst_30 = arith.constant 9.99999974E-6 : f32
    %42 = vector.broadcast %cst_30 : f32 to vector<1x32xf32>
    %43 = arith.addf %39, %42 : vector<1x32xf32>
    %44 = math.rsqrt %43 : vector<1x32xf32>
    %45 = vector.broadcast %44 : vector<1x32xf32> to vector<8x32xf32>
    %46 = arith.mulf %41, %45 : vector<8x32xf32>
    %47 = vector.broadcast %10 : vector<1x32xf32> to vector<8x32xf32>
    %48 = arith.mulf %46, %47 : vector<8x32xf32>
    %49 = vector.broadcast %11 : vector<1x32xf32> to vector<8x32xf32>
    %50 = arith.addf %48, %49 : vector<8x32xf32>
    %cst_31 = arith.constant dense<0.000000e+00> : vector<8x40xf32>
    %51 = tpu.matmul %50, %4, %cst_31 {dimension_numbers = #tpu.dot_dimension_numbers<[1], [0], [0], [1], [0, 0, 1, 1], [], []>} : vector<8x32xf32>, vector<32x40xf32>, vector<8x40xf32> -> vector<8x40xf32>
    %52 = vector.broadcast %12 : vector<1x40xf32> to vector<8x40xf32>
    %53 = arith.addf %51, %52 : vector<8x40xf32>
    %54 = vector.extract_strided_slice %53 {offsets = [0, 0], sizes = [8, 4], strides = [1, 1]} : vector<8x40xf32> to vector<8x4xf32>
    %55 = vector.extract_strided_slice %53 {offsets = [0, 4], sizes = [8, 4], strides = [1, 1]} : vector<8x40xf32> to vector<8x4xf32>
    %56 = vector.extract_strided_slice %53 {offsets = [0, 8], sizes = [8, 32], strides = [1, 1]} : vector<8x40xf32> to vector<8x32xf32>
    %57 = tpu.transpose %55, [1, 0] : vector<8x4xf32> -> vector<4x8xf32>
    %cst_32 = arith.constant dense<0.000000e+00> : vector<8x8xf32>
    %58 = tpu.matmul %54, %57, %cst_32 {dimension_numbers = #tpu.dot_dimension_numbers<[1], [0], [0], [1], [0, 0, 1, 1], [], []>} : vector<8x4xf32>, vector<4x8xf32>, vector<8x8xf32> -> vector<8x8xf32>
    %cst_33 = arith.constant dense<0xFF800000> : vector<8xf32>
    %59 = vector.multi_reduction <maximumf>, %58, %cst_33 [1] : vector<8x8xf32> to vector<8xf32>
    %60 = vector.shape_cast %59 : vector<8xf32> to vector<8x1xf32>
    %61 = vector.broadcast %60 : vector<8x1xf32> to vector<8x8xf32>
    %62 = arith.subf %58, %61 : vector<8x8xf32>
    %63 = math.exp %62 : vector<8x8xf32>
    %cst_34 = arith.constant dense<0.000000e+00> : vector<8xf32>
    %64 = vector.multi_reduction <add>, %63, %cst_34 [1] : vector<8x8xf32> to vector<8xf32>
    %65 = vector.shape_cast %64 : vector<8xf32> to vector<8x1xf32>
    %66 = vector.broadcast %65 : vector<8x1xf32> to vector<8x8xf32>
    %67 = arith.divf %63, %66 : vector<8x8xf32>
    %cst_35 = arith.constant dense<0.000000e+00> : vector<8x32xf32>
    %68 = tpu.matmul %67, %56, %cst_35 {dimension_numbers = #tpu.dot_dimension_numbers<[1], [0], [0], [1], [0, 0, 1, 1], [], []>} : vector<8x8xf32>, vector<8x32xf32>, vector<8x32xf32> -> vector<8x32xf32>
    %69 = vector.broadcast %2 : f32 to vector<8x32xf32>
    %70 = arith.mulf %69, %68 : vector<8x32xf32>
    %71 = arith.addf %70, %50 : vector<8x32xf32>
    %cst_36 = arith.constant 2.000000e-01 : f32
    %72 = vector.broadcast %cst_36 : f32 to vector<8x32xf32>
    %73 = arith.mulf %72, %71 : vector<8x32xf32>
    %74 = arith.maximumf %71, %73 : vector<8x32xf32>
    %cst_37 = arith.constant dense<0.000000e+00> : vector<32xf32>
    %75 = vector.multi_reduction <add>, %74, %cst_37 [0] : vector<8x32xf32> to vector<32xf32>
    %76 = vector.shape_cast %75 : vector<32xf32> to vector<1x32xf32>
    %cst_38 = arith.constant 8.000000e+00 : f32
    %77 = vector.broadcast %cst_38 : f32 to vector<1x32xf32>
    %78 = arith.divf %76, %77 : vector<1x32xf32>
    %79 = vector.broadcast %78 : vector<1x32xf32> to vector<8x32xf32>
    %80 = arith.subf %74, %79 : vector<8x32xf32>
    %81 = arith.mulf %80, %80 : vector<8x32xf32>
    %cst_39 = arith.constant dense<0.000000e+00> : vector<32xf32>
    %82 = vector.multi_reduction <add>, %81, %cst_39 [0] : vector<8x32xf32> to vector<32xf32>
    %83 = vector.shape_cast %82 : vector<32xf32> to vector<1x32xf32>
    %cst_40 = arith.constant 8.000000e+00 : f32
    %84 = vector.broadcast %cst_40 : f32 to vector<1x32xf32>
    %85 = arith.divf %83, %84 : vector<1x32xf32>
    %86 = vector.broadcast %78 : vector<1x32xf32> to vector<8x32xf32>
    %87 = arith.subf %74, %86 : vector<8x32xf32>
    %cst_41 = arith.constant 9.99999974E-6 : f32
    %88 = vector.broadcast %cst_41 : f32 to vector<1x32xf32>
    %89 = arith.addf %85, %88 : vector<1x32xf32>
    %90 = math.rsqrt %89 : vector<1x32xf32>
    %91 = vector.broadcast %90 : vector<1x32xf32> to vector<8x32xf32>
    %92 = arith.mulf %87, %91 : vector<8x32xf32>
    %93 = vector.broadcast %13 : vector<1x32xf32> to vector<8x32xf32>
    %94 = arith.mulf %92, %93 : vector<8x32xf32>
    %95 = vector.broadcast %14 : vector<1x32xf32> to vector<8x32xf32>
    %96 = arith.addf %94, %95 : vector<8x32xf32>
    %97 = vector.extract_strided_slice %15 {offsets = [0, 0], sizes = [1, 32], strides = [1, 1]} : vector<1x64xf32> to vector<1x32xf32>
    %98 = vector.extract_strided_slice %15 {offsets = [0, 32], sizes = [1, 32], strides = [1, 1]} : vector<1x64xf32> to vector<1x32xf32>
    %99 = vector.extract_strided_slice %16 {offsets = [0, 0], sizes = [1, 32], strides = [1, 1]} : vector<1x64xf32> to vector<1x32xf32>
    %100 = vector.extract_strided_slice %16 {offsets = [0, 32], sizes = [1, 32], strides = [1, 1]} : vector<1x64xf32> to vector<1x32xf32>
    %cst_42 = arith.constant dense<0.000000e+00> : vector<32xf32>
    %101 = vector.multi_reduction <add>, %96, %cst_42 [0] : vector<8x32xf32> to vector<32xf32>
    %102 = vector.shape_cast %101 : vector<32xf32> to vector<1x32xf32>
    %cst_43 = arith.constant 8.000000e+00 : f32
    %103 = vector.broadcast %cst_43 : f32 to vector<1x32xf32>
    %104 = arith.divf %102, %103 : vector<1x32xf32>
    %105 = vector.broadcast %104 : vector<1x32xf32> to vector<8x32xf32>
    %106 = arith.subf %96, %105 : vector<8x32xf32>
    %107 = arith.mulf %106, %106 : vector<8x32xf32>
    %cst_44 = arith.constant dense<0.000000e+00> : vector<32xf32>
    %108 = vector.multi_reduction <add>, %107, %cst_44 [0] : vector<8x32xf32> to vector<32xf32>
    %109 = vector.shape_cast %108 : vector<32xf32> to vector<1x32xf32>
    %cst_45 = arith.constant 8.000000e+00 : f32
    %110 = vector.broadcast %cst_45 : f32 to vector<1x32xf32>
    %111 = arith.divf %109, %110 : vector<1x32xf32>
    %112 = vector.broadcast %104 : vector<1x32xf32> to vector<8x32xf32>
    %113 = arith.subf %96, %112 : vector<8x32xf32>
    %cst_46 = arith.constant 9.99999974E-6 : f32
    %114 = vector.broadcast %cst_46 : f32 to vector<1x32xf32>
    %115 = arith.addf %111, %114 : vector<1x32xf32>
    %116 = math.rsqrt %115 : vector<1x32xf32>
    %117 = vector.broadcast %116 : vector<1x32xf32> to vector<8x32xf32>
    %118 = arith.mulf %113, %117 : vector<8x32xf32>
    %119 = vector.broadcast %98 : vector<1x32xf32> to vector<8x32xf32>
    %120 = arith.mulf %118, %119 : vector<8x32xf32>
    %121 = vector.broadcast %100 : vector<1x32xf32> to vector<8x32xf32>
    %122 = arith.addf %120, %121 : vector<8x32xf32>
    %cst_47 = arith.constant dense<0.000000e+00> : vector<8x96xf32>
    %123 = tpu.matmul %122, %6, %cst_47 {dimension_numbers = #tpu.dot_dimension_numbers<[1], [0], [0], [1], [0, 0, 1, 1], [], []>} : vector<8x32xf32>, vector<32x96xf32>, vector<8x96xf32> -> vector<8x96xf32>
    %124 = vector.broadcast %17 : vector<1x96xf32> to vector<8x96xf32>
    %125 = arith.addf %123, %124 : vector<8x96xf32>
    %126 = vector.extract_strided_slice %125 {offsets = [0, 0], sizes = [8, 64], strides = [1, 1]} : vector<8x96xf32> to vector<8x64xf32>
    %127 = vector.extract_strided_slice %18 {offsets = [0, 0], sizes = [1, 64], strides = [1, 1]} : vector<1x96xf32> to vector<1x64xf32>
    %128 = vector.broadcast %127 : vector<1x64xf32> to vector<8x64xf32>
    %129 = arith.addf %126, %128 : vector<8x64xf32>
    %130 = vector.extract_strided_slice %125 {offsets = [0, 64], sizes = [8, 32], strides = [1, 1]} : vector<8x96xf32> to vector<8x32xf32>
    %131 = vector.extract_strided_slice %18 {offsets = [0, 64], sizes = [1, 32], strides = [1, 1]} : vector<1x96xf32> to vector<1x32xf32>
    %132 = vector.shape_cast %131 : vector<1x32xf32> to vector<1x32xf32>
    %133 = vector.broadcast %132 : vector<1x32xf32> to vector<8x32xf32>
    %134 = tpu.concatenate %129, %130, %133 in 1 : vector<8x64xf32>, vector<8x32xf32>, vector<8x32xf32> -> vector<8x128xf32>
    %135 = vector.broadcast %1 : f32 to vector<32x16xf32>
    %136 = arith.mulf %7, %135 : vector<32x16xf32>
    %137 = vector.broadcast %1 : f32 to vector<1x16xf32>
    %138 = arith.mulf %21, %137 : vector<1x16xf32>
    %c0_48 = arith.constant 0 : index
    %c0_49 = arith.constant 0 : index
    %139 = vector.load %arg1[%c0_48, %c0_49] : memref<8x128xf32, #tpu.memory_space<vmem>>, vector<8x128xf32>
    %140 = vector.broadcast %1 : f32 to vector<8x128xf32>
    %141 = arith.mulf %139, %140 : vector<8x128xf32>
    %142 = tpu.iota {dimensions = array<i32: 1>} : vector<8x16xi32>
    %c15_i32 = arith.constant 15 : i32
    %143 = vector.broadcast %c15_i32 : i32 to vector<8x16xi32>
    %144 = arith.cmpi eq, %142, %143 : vector<8x16xi32>
    %145 = arith.extui %144 : vector<8x16xi1> to vector<8x16xi32>
    %146 = arith.sitofp %145 : vector<8x16xi32> to vector<8x16xf32>
    %cst_50 = arith.constant dense<0.000000e+00> : vector<8x32xf32>
    %147 = tpu.matmul %146, %5, %cst_50 {dimension_numbers = #tpu.dot_dimension_numbers<[1], [0], [0], [1], [0, 0, 1, 1], [], []>} : vector<8x16xf32>, vector<16x32xf32>, vector<8x32xf32> -> vector<8x32xf32>
    %cst_51 = arith.constant dense<0.000000e+00> : vector<32xf32>
    %148 = vector.multi_reduction <add>, %147, %cst_51 [0] : vector<8x32xf32> to vector<32xf32>
    %149 = vector.shape_cast %148 : vector<32xf32> to vector<1x32xf32>
    %cst_52 = arith.constant 8.000000e+00 : f32
    %150 = vector.broadcast %cst_52 : f32 to vector<1x32xf32>
    %151 = arith.divf %149, %150 : vector<1x32xf32>
    %152 = vector.broadcast %151 : vector<1x32xf32> to vector<8x32xf32>
    %153 = arith.subf %147, %152 : vector<8x32xf32>
    %154 = arith.mulf %153, %153 : vector<8x32xf32>
    %cst_53 = arith.constant dense<0.000000e+00> : vector<32xf32>
    %155 = vector.multi_reduction <add>, %154, %cst_53 [0] : vector<8x32xf32> to vector<32xf32>
    %156 = vector.shape_cast %155 : vector<32xf32> to vector<1x32xf32>
    %cst_54 = arith.constant 8.000000e+00 : f32
    %157 = vector.broadcast %cst_54 : f32 to vector<1x32xf32>
    %158 = arith.divf %156, %157 : vector<1x32xf32>
    %159 = vector.broadcast %151 : vector<1x32xf32> to vector<8x32xf32>
    %160 = arith.subf %147, %159 : vector<8x32xf32>
    %cst_55 = arith.constant 9.99999974E-6 : f32
    %161 = vector.broadcast %cst_55 : f32 to vector<1x32xf32>
    %162 = arith.addf %158, %161 : vector<1x32xf32>
    %163 = math.rsqrt %162 : vector<1x32xf32>
    %164 = vector.broadcast %163 : vector<1x32xf32> to vector<8x32xf32>
    %165 = arith.mulf %160, %164 : vector<8x32xf32>
    %166 = vector.broadcast %97 : vector<1x32xf32> to vector<8x32xf32>
    %167 = arith.mulf %165, %166 : vector<8x32xf32>
    %168 = vector.broadcast %99 : vector<1x32xf32> to vector<8x32xf32>
    %169 = arith.addf %167, %168 : vector<8x32xf32>
    %170 = tpu.concatenate %169, %96 in 1 : vector<8x32xf32>, vector<8x32xf32> -> vector<8x64xf32>
    %cst_56 = arith.constant dense<0.000000e+00> : vector<8x128xf32>
    %171 = tpu.matmul %170, %8, %cst_56 {dimension_numbers = #tpu.dot_dimension_numbers<[1], [0], [0], [1], [0, 0, 1, 1], [], []>} : vector<8x64xf32>, vector<64x128xf32>, vector<8x128xf32> -> vector<8x128xf32>
    %172 = arith.addf %171, %134 : vector<8x128xf32>
    %173 = vector.extract_strided_slice %172 {offsets = [0, 0], sizes = [8, 32], strides = [1, 1]} : vector<8x128xf32> to vector<8x32xf32>
    %174 = arith.negf %173 : vector<8x32xf32>
    %175 = math.exp %174 : vector<8x32xf32>
    %cst_57 = arith.constant 1.000000e+00 : f32
    %176 = vector.broadcast %cst_57 : f32 to vector<8x32xf32>
    %177 = arith.addf %176, %175 : vector<8x32xf32>
    %178 = arith.divf %176, %177 : vector<8x32xf32>
    %179 = vector.extract_strided_slice %172 {offsets = [0, 32], sizes = [8, 32], strides = [1, 1]} : vector<8x128xf32> to vector<8x32xf32>
    %180 = arith.negf %179 : vector<8x32xf32>
    %181 = math.exp %180 : vector<8x32xf32>
    %cst_58 = arith.constant 1.000000e+00 : f32
    %182 = vector.broadcast %cst_58 : f32 to vector<8x32xf32>
    %183 = arith.addf %182, %181 : vector<8x32xf32>
    %184 = arith.divf %182, %183 : vector<8x32xf32>
    %185 = vector.extract_strided_slice %172 {offsets = [0, 64], sizes = [8, 32], strides = [1, 1]} : vector<8x128xf32> to vector<8x32xf32>
    %186 = vector.extract_strided_slice %172 {offsets = [0, 96], sizes = [8, 32], strides = [1, 1]} : vector<8x128xf32> to vector<8x32xf32>
    %187 = arith.mulf %178, %186 : vector<8x32xf32>
    %188 = arith.addf %185, %187 : vector<8x32xf32>
    %189 = math.tanh %188 : vector<8x32xf32>
    %cst_59 = arith.constant 1.000000e+00 : f32
    %190 = vector.broadcast %cst_59 : f32 to vector<8x32xf32>
    %191 = arith.subf %190, %184 : vector<8x32xf32>
    %192 = arith.mulf %191, %189 : vector<8x32xf32>
    %193 = arith.mulf %184, %96 : vector<8x32xf32>
    %194 = arith.addf %192, %193 : vector<8x32xf32>
    %cst_60 = arith.constant 2.000000e-01 : f32
    %195 = vector.broadcast %cst_60 : f32 to vector<8x32xf32>
    %196 = arith.mulf %195, %194 : vector<8x32xf32>
    %197 = arith.maximumf %194, %196 : vector<8x32xf32>
    %cst_61 = arith.constant dense<0.000000e+00> : vector<32xf32>
    %198 = vector.multi_reduction <add>, %197, %cst_61 [0] : vector<8x32xf32> to vector<32xf32>
    %199 = vector.shape_cast %198 : vector<32xf32> to vector<1x32xf32>
    %cst_62 = arith.constant 8.000000e+00 : f32
    %200 = vector.broadcast %cst_62 : f32 to vector<1x32xf32>
    %201 = arith.divf %199, %200 : vector<1x32xf32>
    %202 = vector.broadcast %201 : vector<1x32xf32> to vector<8x32xf32>
    %203 = arith.subf %197, %202 : vector<8x32xf32>
    %204 = arith.mulf %203, %203 : vector<8x32xf32>
    %cst_63 = arith.constant dense<0.000000e+00> : vector<32xf32>
    %205 = vector.multi_reduction <add>, %204, %cst_63 [0] : vector<8x32xf32> to vector<32xf32>
    %206 = vector.shape_cast %205 : vector<32xf32> to vector<1x32xf32>
    %cst_64 = arith.constant 8.000000e+00 : f32
    %207 = vector.broadcast %cst_64 : f32 to vector<1x32xf32>
    %208 = arith.divf %206, %207 : vector<1x32xf32>
    %209 = vector.broadcast %201 : vector<1x32xf32> to vector<8x32xf32>
    %210 = arith.subf %197, %209 : vector<8x32xf32>
    %cst_65 = arith.constant 9.99999974E-6 : f32
    %211 = vector.broadcast %cst_65 : f32 to vector<1x32xf32>
    %212 = arith.addf %208, %211 : vector<1x32xf32>
    %213 = math.rsqrt %212 : vector<1x32xf32>
    %214 = vector.broadcast %213 : vector<1x32xf32> to vector<8x32xf32>
    %215 = arith.mulf %210, %214 : vector<8x32xf32>
    %216 = vector.broadcast %19 : vector<1x32xf32> to vector<8x32xf32>
    %217 = arith.mulf %215, %216 : vector<8x32xf32>
    %218 = vector.broadcast %20 : vector<1x32xf32> to vector<8x32xf32>
    %219 = arith.addf %217, %218 : vector<8x32xf32>
    %cst_66 = arith.constant dense<0.000000e+00> : vector<8x16xf32>
    %220 = tpu.matmul %219, %136, %cst_66 {dimension_numbers = #tpu.dot_dimension_numbers<[1], [0], [0], [1], [0, 0, 1, 1], [], []>} : vector<8x32xf32>, vector<32x16xf32>, vector<8x16xf32> -> vector<8x16xf32>
    %221 = vector.broadcast %138 : vector<1x16xf32> to vector<8x16xf32>
    %222 = arith.addf %220, %221 : vector<8x16xf32>
    %223 = vector.extract_strided_slice %141 {offsets = [0, 0], sizes = [8, 16], strides = [1, 1]} : vector<8x128xf32> to vector<8x16xf32>
    %224 = arith.addf %222, %223 : vector<8x16xf32>
    %cst_67 = arith.constant dense<0xFF800000> : vector<8xf32>
    %225 = vector.multi_reduction <maximumf>, %224, %cst_67 [1] : vector<8x16xf32> to vector<8xf32>
    %226 = vector.shape_cast %225 : vector<8xf32> to vector<8x1xf32>
    %227 = vector.broadcast %226 : vector<8x1xf32> to vector<8x16xf32>
    %228 = arith.subf %224, %227 : vector<8x16xf32>
    %229 = math.exp %228 : vector<8x16xf32>
    %cst_68 = arith.constant dense<0.000000e+00> : vector<8xf32>
    %230 = vector.multi_reduction <add>, %229, %cst_68 [1] : vector<8x16xf32> to vector<8xf32>
    %231 = vector.shape_cast %230 : vector<8xf32> to vector<8x1xf32>
    %232 = vector.broadcast %231 : vector<8x1xf32> to vector<8x16xf32>
    %233 = arith.divf %229, %232 : vector<8x16xf32>
    %c0_69 = arith.constant 0 : index
    %c0_70 = arith.constant 0 : index
    %234 = vector.load %arg5[%c0_69, %c0_70] : memref<8x128xf32, #tpu.memory_space<vmem>>, vector<8x16xf32>
    tpu.vector_store %arg5[%c0_69, %c0_70], %233 {strides = array<i32>} : memref<8x128xf32, #tpu.memory_space<vmem>>, vector<8x16xf32>,
    %235 = vector.broadcast %226 : vector<8x1xf32> to vector<8x16xf32>
    %236 = arith.cmpf oeq, %224, %235 : vector<8x16xf32>
    %c16_i32 = arith.constant 16 : i32
    %237 = vector.broadcast %c16_i32 : i32 to vector<8x16xi32>
    %238 = arith.select %236, %142, %237 : vector<8x16xi1>, vector<8x16xi32>
    %cst_71 = arith.constant dense<2147483647> : vector<8xi32>
    %239 = vector.multi_reduction <minsi>, %238, %cst_71 [1] : vector<8x16xi32> to vector<8xi32>
    %240 = vector.shape_cast %239 : vector<8xi32> to vector<8x1xi32>
    %241 = vector.broadcast %240 : vector<8x1xi32> to vector<8x16xi32>
    %242 = arith.cmpi eq, %142, %241 : vector<8x16xi32>
    %243 = arith.extui %242 : vector<8x16xi1> to vector<8x16xi32>
    %244 = arith.sitofp %243 : vector<8x16xi32> to vector<8x16xf32>
    %cst_72 = arith.constant dense<0.000000e+00> : vector<8x32xf32>
    %245 = tpu.matmul %244, %5, %cst_72 {dimension_numbers = #tpu.dot_dimension_numbers<[1], [0], [0], [1], [0, 0, 1, 1], [], []>} : vector<8x16xf32>, vector<16x32xf32>, vector<8x32xf32> -> vector<8x32xf32>
    %cst_73 = arith.constant dense<0.000000e+00> : vector<32xf32>
    %246 = vector.multi_reduction <add>, %245, %cst_73 [0] : vector<8x32xf32> to vector<32xf32>
    %247 = vector.shape_cast %246 : vector<32xf32> to vector<1x32xf32>
    %cst_74 = arith.constant 8.000000e+00 : f32
    %248 = vector.broadcast %cst_74 : f32 to vector<1x32xf32>
    %249 = arith.divf %247, %248 : vector<1x32xf32>
    %250 = vector.broadcast %249 : vector<1x32xf32> to vector<8x32xf32>
    %251 = arith.subf %245, %250 : vector<8x32xf32>
    %252 = arith.mulf %251, %251 : vector<8x32xf32>
    %cst_75 = arith.constant dense<0.000000e+00> : vector<32xf32>
    %253 = vector.multi_reduction <add>, %252, %cst_75 [0] : vector<8x32xf32> to vector<32xf32>
    %254 = vector.shape_cast %253 : vector<32xf32> to vector<1x32xf32>
    %cst_76 = arith.constant 8.000000e+00 : f32
    %255 = vector.broadcast %cst_76 : f32 to vector<1x32xf32>
    %256 = arith.divf %254, %255 : vector<1x32xf32>
    %257 = vector.broadcast %249 : vector<1x32xf32> to vector<8x32xf32>
    %258 = arith.subf %245, %257 : vector<8x32xf32>
    %cst_77 = arith.constant 9.99999974E-6 : f32
    %259 = vector.broadcast %cst_77 : f32 to vector<1x32xf32>
    %260 = arith.addf %256, %259 : vector<1x32xf32>
    %261 = math.rsqrt %260 : vector<1x32xf32>
    %262 = vector.broadcast %261 : vector<1x32xf32> to vector<8x32xf32>
    %263 = arith.mulf %258, %262 : vector<8x32xf32>
    %264 = vector.broadcast %97 : vector<1x32xf32> to vector<8x32xf32>
    %265 = arith.mulf %263, %264 : vector<8x32xf32>
    %266 = vector.broadcast %99 : vector<1x32xf32> to vector<8x32xf32>
    %267 = arith.addf %265, %266 : vector<8x32xf32>
    %268 = tpu.concatenate %267, %194 in 1 : vector<8x32xf32>, vector<8x32xf32> -> vector<8x64xf32>
    %cst_78 = arith.constant dense<0.000000e+00> : vector<8x128xf32>
    %269 = tpu.matmul %268, %8, %cst_78 {dimension_numbers = #tpu.dot_dimension_numbers<[1], [0], [0], [1], [0, 0, 1, 1], [], []>} : vector<8x64xf32>, vector<64x128xf32>, vector<8x128xf32> -> vector<8x128xf32>
    %270 = arith.addf %269, %134 : vector<8x128xf32>
    %271 = vector.extract_strided_slice %270 {offsets = [0, 0], sizes = [8, 32], strides = [1, 1]} : vector<8x128xf32> to vector<8x32xf32>
    %272 = arith.negf %271 : vector<8x32xf32>
    %273 = math.exp %272 : vector<8x32xf32>
    %cst_79 = arith.constant 1.000000e+00 : f32
    %274 = vector.broadcast %cst_79 : f32 to vector<8x32xf32>
    %275 = arith.addf %274, %273 : vector<8x32xf32>
    %276 = arith.divf %274, %275 : vector<8x32xf32>
    %277 = vector.extract_strided_slice %270 {offsets = [0, 32], sizes = [8, 32], strides = [1, 1]} : vector<8x128xf32> to vector<8x32xf32>
    %278 = arith.negf %277 : vector<8x32xf32>
    %279 = math.exp %278 : vector<8x32xf32>
    %cst_80 = arith.constant 1.000000e+00 : f32
    %280 = vector.broadcast %cst_80 : f32 to vector<8x32xf32>
    %281 = arith.addf %280, %279 : vector<8x32xf32>
    %282 = arith.divf %280, %281 : vector<8x32xf32>
    %283 = vector.extract_strided_slice %270 {offsets = [0, 64], sizes = [8, 32], strides = [1, 1]} : vector<8x128xf32> to vector<8x32xf32>
    %284 = vector.extract_strided_slice %270 {offsets = [0, 96], sizes = [8, 32], strides = [1, 1]} : vector<8x128xf32> to vector<8x32xf32>
    %285 = arith.mulf %276, %284 : vector<8x32xf32>
    %286 = arith.addf %283, %285 : vector<8x32xf32>
    %287 = math.tanh %286 : vector<8x32xf32>
    %cst_81 = arith.constant 1.000000e+00 : f32
    %288 = vector.broadcast %cst_81 : f32 to vector<8x32xf32>
    %289 = arith.subf %288, %282 : vector<8x32xf32>
    %290 = arith.mulf %289, %287 : vector<8x32xf32>
    %291 = arith.mulf %282, %194 : vector<8x32xf32>
    %292 = arith.addf %290, %291 : vector<8x32xf32>
    %cst_82 = arith.constant 2.000000e-01 : f32
    %293 = vector.broadcast %cst_82 : f32 to vector<8x32xf32>
    %294 = arith.mulf %293, %292 : vector<8x32xf32>
    %295 = arith.maximumf %292, %294 : vector<8x32xf32>
    %cst_83 = arith.constant dense<0.000000e+00> : vector<32xf32>
    %296 = vector.multi_reduction <add>, %295, %cst_83 [0] : vector<8x32xf32> to vector<32xf32>
    %297 = vector.shape_cast %296 : vector<32xf32> to vector<1x32xf32>
    %cst_84 = arith.constant 8.000000e+00 : f32
    %298 = vector.broadcast %cst_84 : f32 to vector<1x32xf32>
    %299 = arith.divf %297, %298 : vector<1x32xf32>
    %300 = vector.broadcast %299 : vector<1x32xf32> to vector<8x32xf32>
    %301 = arith.subf %295, %300 : vector<8x32xf32>
    %302 = arith.mulf %301, %301 : vector<8x32xf32>
    %cst_85 = arith.constant dense<0.000000e+00> : vector<32xf32>
    %303 = vector.multi_reduction <add>, %302, %cst_85 [0] : vector<8x32xf32> to vector<32xf32>
    %304 = vector.shape_cast %303 : vector<32xf32> to vector<1x32xf32>
    %cst_86 = arith.constant 8.000000e+00 : f32
    %305 = vector.broadcast %cst_86 : f32 to vector<1x32xf32>
    %306 = arith.divf %304, %305 : vector<1x32xf32>
    %307 = vector.broadcast %299 : vector<1x32xf32> to vector<8x32xf32>
    %308 = arith.subf %295, %307 : vector<8x32xf32>
    %cst_87 = arith.constant 9.99999974E-6 : f32
    %309 = vector.broadcast %cst_87 : f32 to vector<1x32xf32>
    %310 = arith.addf %306, %309 : vector<1x32xf32>
    %311 = math.rsqrt %310 : vector<1x32xf32>
    %312 = vector.broadcast %311 : vector<1x32xf32> to vector<8x32xf32>
    %313 = arith.mulf %308, %312 : vector<8x32xf32>
    %314 = vector.broadcast %19 : vector<1x32xf32> to vector<8x32xf32>
    %315 = arith.mulf %313, %314 : vector<8x32xf32>
    %316 = vector.broadcast %20 : vector<1x32xf32> to vector<8x32xf32>
    %317 = arith.addf %315, %316 : vector<8x32xf32>
    %cst_88 = arith.constant dense<0.000000e+00> : vector<8x16xf32>
    %318 = tpu.matmul %317, %136, %cst_88 {dimension_numbers = #tpu.dot_dimension_numbers<[1], [0], [0], [1], [0, 0, 1, 1], [], []>} : vector<8x32xf32>, vector<32x16xf32>, vector<8x16xf32> -> vector<8x16xf32>
    %319 = vector.broadcast %138 : vector<1x16xf32> to vector<8x16xf32>
    %320 = arith.addf %318, %319 : vector<8x16xf32>
    %321 = vector.extract_strided_slice %141 {offsets = [0, 16], sizes = [8, 16], strides = [1, 1]} : vector<8x128xf32> to vector<8x16xf32>
    %322 = arith.addf %320, %321 : vector<8x16xf32>
    %cst_89 = arith.constant dense<0xFF800000> : vector<8xf32>
    %323 = vector.multi_reduction <maximumf>, %322, %cst_89 [1] : vector<8x16xf32> to vector<8xf32>
    %324 = vector.shape_cast %323 : vector<8xf32> to vector<8x1xf32>
    %325 = vector.broadcast %324 : vector<8x1xf32> to vector<8x16xf32>
    %326 = arith.subf %322, %325 : vector<8x16xf32>
    %327 = math.exp %326 : vector<8x16xf32>
    %cst_90 = arith.constant dense<0.000000e+00> : vector<8xf32>
    %328 = vector.multi_reduction <add>, %327, %cst_90 [1] : vector<8x16xf32> to vector<8xf32>
    %329 = vector.shape_cast %328 : vector<8xf32> to vector<8x1xf32>
    %330 = vector.broadcast %329 : vector<8x1xf32> to vector<8x16xf32>
    %331 = arith.divf %327, %330 : vector<8x16xf32>
    %c0_91 = arith.constant 0 : index
    %c16_92 = arith.constant 16 : index
    %332 = vector.load %arg5[%c0_91, %c16_92] : memref<8x128xf32, #tpu.memory_space<vmem>>, vector<8x16xf32>
    tpu.vector_store %arg5[%c0_91, %c16_92], %331 {strides = array<i32>} : memref<8x128xf32, #tpu.memory_space<vmem>>, vector<8x16xf32>,
    %333 = vector.broadcast %324 : vector<8x1xf32> to vector<8x16xf32>
    %334 = arith.cmpf oeq, %322, %333 : vector<8x16xf32>
    %c16_i32_93 = arith.constant 16 : i32
    %335 = vector.broadcast %c16_i32_93 : i32 to vector<8x16xi32>
    %336 = arith.select %334, %142, %335 : vector<8x16xi1>, vector<8x16xi32>
    %cst_94 = arith.constant dense<2147483647> : vector<8xi32>
    %337 = vector.multi_reduction <minsi>, %336, %cst_94 [1] : vector<8x16xi32> to vector<8xi32>
    %338 = vector.shape_cast %337 : vector<8xi32> to vector<8x1xi32>
    %339 = vector.broadcast %338 : vector<8x1xi32> to vector<8x16xi32>
    %340 = arith.cmpi eq, %142, %339 : vector<8x16xi32>
    %341 = arith.extui %340 : vector<8x16xi1> to vector<8x16xi32>
    %342 = arith.sitofp %341 : vector<8x16xi32> to vector<8x16xf32>
    %cst_95 = arith.constant dense<0.000000e+00> : vector<8x32xf32>
    %343 = tpu.matmul %342, %5, %cst_95 {dimension_numbers = #tpu.dot_dimension_numbers<[1], [0], [0], [1], [0, 0, 1, 1], [], []>} : vector<8x16xf32>, vector<16x32xf32>, vector<8x32xf32> -> vector<8x32xf32>
    %cst_96 = arith.constant dense<0.000000e+00> : vector<32xf32>
    %344 = vector.multi_reduction <add>, %343, %cst_96 [0] : vector<8x32xf32> to vector<32xf32>
    %345 = vector.shape_cast %344 : vector<32xf32> to vector<1x32xf32>
    %cst_97 = arith.constant 8.000000e+00 : f32
    %346 = vector.broadcast %cst_97 : f32 to vector<1x32xf32>
    %347 = arith.divf %345, %346 : vector<1x32xf32>
    %348 = vector.broadcast %347 : vector<1x32xf32> to vector<8x32xf32>
    %349 = arith.subf %343, %348 : vector<8x32xf32>
    %350 = arith.mulf %349, %349 : vector<8x32xf32>
    %cst_98 = arith.constant dense<0.000000e+00> : vector<32xf32>
    %351 = vector.multi_reduction <add>, %350, %cst_98 [0] : vector<8x32xf32> to vector<32xf32>
    %352 = vector.shape_cast %351 : vector<32xf32> to vector<1x32xf32>
    %cst_99 = arith.constant 8.000000e+00 : f32
    %353 = vector.broadcast %cst_99 : f32 to vector<1x32xf32>
    %354 = arith.divf %352, %353 : vector<1x32xf32>
    %355 = vector.broadcast %347 : vector<1x32xf32> to vector<8x32xf32>
    %356 = arith.subf %343, %355 : vector<8x32xf32>
    %cst_100 = arith.constant 9.99999974E-6 : f32
    %357 = vector.broadcast %cst_100 : f32 to vector<1x32xf32>
    %358 = arith.addf %354, %357 : vector<1x32xf32>
    %359 = math.rsqrt %358 : vector<1x32xf32>
    %360 = vector.broadcast %359 : vector<1x32xf32> to vector<8x32xf32>
    %361 = arith.mulf %356, %360 : vector<8x32xf32>
    %362 = vector.broadcast %97 : vector<1x32xf32> to vector<8x32xf32>
    %363 = arith.mulf %361, %362 : vector<8x32xf32>
    %364 = vector.broadcast %99 : vector<1x32xf32> to vector<8x32xf32>
    %365 = arith.addf %363, %364 : vector<8x32xf32>
    %366 = tpu.concatenate %365, %292 in 1 : vector<8x32xf32>, vector<8x32xf32> -> vector<8x64xf32>
    %cst_101 = arith.constant dense<0.000000e+00> : vector<8x128xf32>
    %367 = tpu.matmul %366, %8, %cst_101 {dimension_numbers = #tpu.dot_dimension_numbers<[1], [0], [0], [1], [0, 0, 1, 1], [], []>} : vector<8x64xf32>, vector<64x128xf32>, vector<8x128xf32> -> vector<8x128xf32>
    %368 = arith.addf %367, %134 : vector<8x128xf32>
    %369 = vector.extract_strided_slice %368 {offsets = [0, 0], sizes = [8, 32], strides = [1, 1]} : vector<8x128xf32> to vector<8x32xf32>
    %370 = arith.negf %369 : vector<8x32xf32>
    %371 = math.exp %370 : vector<8x32xf32>
    %cst_102 = arith.constant 1.000000e+00 : f32
    %372 = vector.broadcast %cst_102 : f32 to vector<8x32xf32>
    %373 = arith.addf %372, %371 : vector<8x32xf32>
    %374 = arith.divf %372, %373 : vector<8x32xf32>
    %375 = vector.extract_strided_slice %368 {offsets = [0, 32], sizes = [8, 32], strides = [1, 1]} : vector<8x128xf32> to vector<8x32xf32>
    %376 = arith.negf %375 : vector<8x32xf32>
    %377 = math.exp %376 : vector<8x32xf32>
    %cst_103 = arith.constant 1.000000e+00 : f32
    %378 = vector.broadcast %cst_103 : f32 to vector<8x32xf32>
    %379 = arith.addf %378, %377 : vector<8x32xf32>
    %380 = arith.divf %378, %379 : vector<8x32xf32>
    %381 = vector.extract_strided_slice %368 {offsets = [0, 64], sizes = [8, 32], strides = [1, 1]} : vector<8x128xf32> to vector<8x32xf32>
    %382 = vector.extract_strided_slice %368 {offsets = [0, 96], sizes = [8, 32], strides = [1, 1]} : vector<8x128xf32> to vector<8x32xf32>
    %383 = arith.mulf %374, %382 : vector<8x32xf32>
    %384 = arith.addf %381, %383 : vector<8x32xf32>
    %385 = math.tanh %384 : vector<8x32xf32>
    %cst_104 = arith.constant 1.000000e+00 : f32
    %386 = vector.broadcast %cst_104 : f32 to vector<8x32xf32>
    %387 = arith.subf %386, %380 : vector<8x32xf32>
    %388 = arith.mulf %387, %385 : vector<8x32xf32>
    %389 = arith.mulf %380, %292 : vector<8x32xf32>
    %390 = arith.addf %388, %389 : vector<8x32xf32>
    %cst_105 = arith.constant 2.000000e-01 : f32
    %391 = vector.broadcast %cst_105 : f32 to vector<8x32xf32>
    %392 = arith.mulf %391, %390 : vector<8x32xf32>
    %393 = arith.maximumf %390, %392 : vector<8x32xf32>
    %cst_106 = arith.constant dense<0.000000e+00> : vector<32xf32>
    %394 = vector.multi_reduction <add>, %393, %cst_106 [0] : vector<8x32xf32> to vector<32xf32>
    %395 = vector.shape_cast %394 : vector<32xf32> to vector<1x32xf32>
    %cst_107 = arith.constant 8.000000e+00 : f32
    %396 = vector.broadcast %cst_107 : f32 to vector<1x32xf32>
    %397 = arith.divf %395, %396 : vector<1x32xf32>
    %398 = vector.broadcast %397 : vector<1x32xf32> to vector<8x32xf32>
    %399 = arith.subf %393, %398 : vector<8x32xf32>
    %400 = arith.mulf %399, %399 : vector<8x32xf32>
    %cst_108 = arith.constant dense<0.000000e+00> : vector<32xf32>
    %401 = vector.multi_reduction <add>, %400, %cst_108 [0] : vector<8x32xf32> to vector<32xf32>
    %402 = vector.shape_cast %401 : vector<32xf32> to vector<1x32xf32>
    %cst_109 = arith.constant 8.000000e+00 : f32
    %403 = vector.broadcast %cst_109 : f32 to vector<1x32xf32>
    %404 = arith.divf %402, %403 : vector<1x32xf32>
    %405 = vector.broadcast %397 : vector<1x32xf32> to vector<8x32xf32>
    %406 = arith.subf %393, %405 : vector<8x32xf32>
    %cst_110 = arith.constant 9.99999974E-6 : f32
    %407 = vector.broadcast %cst_110 : f32 to vector<1x32xf32>
    %408 = arith.addf %404, %407 : vector<1x32xf32>
    %409 = math.rsqrt %408 : vector<1x32xf32>
    %410 = vector.broadcast %409 : vector<1x32xf32> to vector<8x32xf32>
    %411 = arith.mulf %406, %410 : vector<8x32xf32>
    %412 = vector.broadcast %19 : vector<1x32xf32> to vector<8x32xf32>
    %413 = arith.mulf %411, %412 : vector<8x32xf32>
    %414 = vector.broadcast %20 : vector<1x32xf32> to vector<8x32xf32>
    %415 = arith.addf %413, %414 : vector<8x32xf32>
    %cst_111 = arith.constant dense<0.000000e+00> : vector<8x16xf32>
    %416 = tpu.matmul %415, %136, %cst_111 {dimension_numbers = #tpu.dot_dimension_numbers<[1], [0], [0], [1], [0, 0, 1, 1], [], []>} : vector<8x32xf32>, vector<32x16xf32>, vector<8x16xf32> -> vector<8x16xf32>
    %417 = vector.broadcast %138 : vector<1x16xf32> to vector<8x16xf32>
    %418 = arith.addf %416, %417 : vector<8x16xf32>
    %419 = vector.extract_strided_slice %141 {offsets = [0, 32], sizes = [8, 16], strides = [1, 1]} : vector<8x128xf32> to vector<8x16xf32>
    %420 = arith.addf %418, %419 : vector<8x16xf32>
    %cst_112 = arith.constant dense<0xFF800000> : vector<8xf32>
    %421 = vector.multi_reduction <maximumf>, %420, %cst_112 [1] : vector<8x16xf32> to vector<8xf32>
    %422 = vector.shape_cast %421 : vector<8xf32> to vector<8x1xf32>
    %423 = vector.broadcast %422 : vector<8x1xf32> to vector<8x16xf32>
    %424 = arith.subf %420, %423 : vector<8x16xf32>
    %425 = math.exp %424 : vector<8x16xf32>
    %cst_113 = arith.constant dense<0.000000e+00> : vector<8xf32>
    %426 = vector.multi_reduction <add>, %425, %cst_113 [1] : vector<8x16xf32> to vector<8xf32>
    %427 = vector.shape_cast %426 : vector<8xf32> to vector<8x1xf32>
    %428 = vector.broadcast %427 : vector<8x1xf32> to vector<8x16xf32>
    %429 = arith.divf %425, %428 : vector<8x16xf32>
    %c0_114 = arith.constant 0 : index
    %c32 = arith.constant 32 : index
    %430 = vector.load %arg5[%c0_114, %c32] : memref<8x128xf32, #tpu.memory_space<vmem>>, vector<8x16xf32>
    tpu.vector_store %arg5[%c0_114, %c32], %429 {strides = array<i32>} : memref<8x128xf32, #tpu.memory_space<vmem>>, vector<8x16xf32>,
    %431 = vector.broadcast %422 : vector<8x1xf32> to vector<8x16xf32>
    %432 = arith.cmpf oeq, %420, %431 : vector<8x16xf32>
    %c16_i32_115 = arith.constant 16 : i32
    %433 = vector.broadcast %c16_i32_115 : i32 to vector<8x16xi32>
    %434 = arith.select %432, %142, %433 : vector<8x16xi1>, vector<8x16xi32>
    %cst_116 = arith.constant dense<2147483647> : vector<8xi32>
    %435 = vector.multi_reduction <minsi>, %434, %cst_116 [1] : vector<8x16xi32> to vector<8xi32>
    %436 = vector.shape_cast %435 : vector<8xi32> to vector<8x1xi32>
    %437 = vector.broadcast %436 : vector<8x1xi32> to vector<8x16xi32>
    %438 = arith.cmpi eq, %142, %437 : vector<8x16xi32>
    %439 = arith.extui %438 : vector<8x16xi1> to vector<8x16xi32>
    %440 = arith.sitofp %439 : vector<8x16xi32> to vector<8x16xf32>
    %cst_117 = arith.constant dense<0.000000e+00> : vector<8x32xf32>
    %441 = tpu.matmul %440, %5, %cst_117 {dimension_numbers = #tpu.dot_dimension_numbers<[1], [0], [0], [1], [0, 0, 1, 1], [], []>} : vector<8x16xf32>, vector<16x32xf32>, vector<8x32xf32> -> vector<8x32xf32>
    %cst_118 = arith.constant dense<0.000000e+00> : vector<32xf32>
    %442 = vector.multi_reduction <add>, %441, %cst_118 [0] : vector<8x32xf32> to vector<32xf32>
    %443 = vector.shape_cast %442 : vector<32xf32> to vector<1x32xf32>
    %cst_119 = arith.constant 8.000000e+00 : f32
    %444 = vector.broadcast %cst_119 : f32 to vector<1x32xf32>
    %445 = arith.divf %443, %444 : vector<1x32xf32>
    %446 = vector.broadcast %445 : vector<1x32xf32> to vector<8x32xf32>
    %447 = arith.subf %441, %446 : vector<8x32xf32>
    %448 = arith.mulf %447, %447 : vector<8x32xf32>
    %cst_120 = arith.constant dense<0.000000e+00> : vector<32xf32>
    %449 = vector.multi_reduction <add>, %448, %cst_120 [0] : vector<8x32xf32> to vector<32xf32>
    %450 = vector.shape_cast %449 : vector<32xf32> to vector<1x32xf32>
    %cst_121 = arith.constant 8.000000e+00 : f32
    %451 = vector.broadcast %cst_121 : f32 to vector<1x32xf32>
    %452 = arith.divf %450, %451 : vector<1x32xf32>
    %453 = vector.broadcast %445 : vector<1x32xf32> to vector<8x32xf32>
    %454 = arith.subf %441, %453 : vector<8x32xf32>
    %cst_122 = arith.constant 9.99999974E-6 : f32
    %455 = vector.broadcast %cst_122 : f32 to vector<1x32xf32>
    %456 = arith.addf %452, %455 : vector<1x32xf32>
    %457 = math.rsqrt %456 : vector<1x32xf32>
    %458 = vector.broadcast %457 : vector<1x32xf32> to vector<8x32xf32>
    %459 = arith.mulf %454, %458 : vector<8x32xf32>
    %460 = vector.broadcast %97 : vector<1x32xf32> to vector<8x32xf32>
    %461 = arith.mulf %459, %460 : vector<8x32xf32>
    %462 = vector.broadcast %99 : vector<1x32xf32> to vector<8x32xf32>
    %463 = arith.addf %461, %462 : vector<8x32xf32>
    %464 = tpu.concatenate %463, %390 in 1 : vector<8x32xf32>, vector<8x32xf32> -> vector<8x64xf32>
    %cst_123 = arith.constant dense<0.000000e+00> : vector<8x128xf32>
    %465 = tpu.matmul %464, %8, %cst_123 {dimension_numbers = #tpu.dot_dimension_numbers<[1], [0], [0], [1], [0, 0, 1, 1], [], []>} : vector<8x64xf32>, vector<64x128xf32>, vector<8x128xf32> -> vector<8x128xf32>
    %466 = arith.addf %465, %134 : vector<8x128xf32>
    %467 = vector.extract_strided_slice %466 {offsets = [0, 0], sizes = [8, 32], strides = [1, 1]} : vector<8x128xf32> to vector<8x32xf32>
    %468 = arith.negf %467 : vector<8x32xf32>
    %469 = math.exp %468 : vector<8x32xf32>
    %cst_124 = arith.constant 1.000000e+00 : f32
    %470 = vector.broadcast %cst_124 : f32 to vector<8x32xf32>
    %471 = arith.addf %470, %469 : vector<8x32xf32>
    %472 = arith.divf %470, %471 : vector<8x32xf32>
    %473 = vector.extract_strided_slice %466 {offsets = [0, 32], sizes = [8, 32], strides = [1, 1]} : vector<8x128xf32> to vector<8x32xf32>
    %474 = arith.negf %473 : vector<8x32xf32>
    %475 = math.exp %474 : vector<8x32xf32>
    %cst_125 = arith.constant 1.000000e+00 : f32
    %476 = vector.broadcast %cst_125 : f32 to vector<8x32xf32>
    %477 = arith.addf %476, %475 : vector<8x32xf32>
    %478 = arith.divf %476, %477 : vector<8x32xf32>
    %479 = vector.extract_strided_slice %466 {offsets = [0, 64], sizes = [8, 32], strides = [1, 1]} : vector<8x128xf32> to vector<8x32xf32>
    %480 = vector.extract_strided_slice %466 {offsets = [0, 96], sizes = [8, 32], strides = [1, 1]} : vector<8x128xf32> to vector<8x32xf32>
    %481 = arith.mulf %472, %480 : vector<8x32xf32>
    %482 = arith.addf %479, %481 : vector<8x32xf32>
    %483 = math.tanh %482 : vector<8x32xf32>
    %cst_126 = arith.constant 1.000000e+00 : f32
    %484 = vector.broadcast %cst_126 : f32 to vector<8x32xf32>
    %485 = arith.subf %484, %478 : vector<8x32xf32>
    %486 = arith.mulf %485, %483 : vector<8x32xf32>
    %487 = arith.mulf %478, %390 : vector<8x32xf32>
    %488 = arith.addf %486, %487 : vector<8x32xf32>
    %cst_127 = arith.constant 2.000000e-01 : f32
    %489 = vector.broadcast %cst_127 : f32 to vector<8x32xf32>
    %490 = arith.mulf %489, %488 : vector<8x32xf32>
    %491 = arith.maximumf %488, %490 : vector<8x32xf32>
    %cst_128 = arith.constant dense<0.000000e+00> : vector<32xf32>
    %492 = vector.multi_reduction <add>, %491, %cst_128 [0] : vector<8x32xf32> to vector<32xf32>
    %493 = vector.shape_cast %492 : vector<32xf32> to vector<1x32xf32>
    %cst_129 = arith.constant 8.000000e+00 : f32
    %494 = vector.broadcast %cst_129 : f32 to vector<1x32xf32>
    %495 = arith.divf %493, %494 : vector<1x32xf32>
    %496 = vector.broadcast %495 : vector<1x32xf32> to vector<8x32xf32>
    %497 = arith.subf %491, %496 : vector<8x32xf32>
    %498 = arith.mulf %497, %497 : vector<8x32xf32>
    %cst_130 = arith.constant dense<0.000000e+00> : vector<32xf32>
    %499 = vector.multi_reduction <add>, %498, %cst_130 [0] : vector<8x32xf32> to vector<32xf32>
    %500 = vector.shape_cast %499 : vector<32xf32> to vector<1x32xf32>
    %cst_131 = arith.constant 8.000000e+00 : f32
    %501 = vector.broadcast %cst_131 : f32 to vector<1x32xf32>
    %502 = arith.divf %500, %501 : vector<1x32xf32>
    %503 = vector.broadcast %495 : vector<1x32xf32> to vector<8x32xf32>
    %504 = arith.subf %491, %503 : vector<8x32xf32>
    %cst_132 = arith.constant 9.99999974E-6 : f32
    %505 = vector.broadcast %cst_132 : f32 to vector<1x32xf32>
    %506 = arith.addf %502, %505 : vector<1x32xf32>
    %507 = math.rsqrt %506 : vector<1x32xf32>
    %508 = vector.broadcast %507 : vector<1x32xf32> to vector<8x32xf32>
    %509 = arith.mulf %504, %508 : vector<8x32xf32>
    %510 = vector.broadcast %19 : vector<1x32xf32> to vector<8x32xf32>
    %511 = arith.mulf %509, %510 : vector<8x32xf32>
    %512 = vector.broadcast %20 : vector<1x32xf32> to vector<8x32xf32>
    %513 = arith.addf %511, %512 : vector<8x32xf32>
    %cst_133 = arith.constant dense<0.000000e+00> : vector<8x16xf32>
    %514 = tpu.matmul %513, %136, %cst_133 {dimension_numbers = #tpu.dot_dimension_numbers<[1], [0], [0], [1], [0, 0, 1, 1], [], []>} : vector<8x32xf32>, vector<32x16xf32>, vector<8x16xf32> -> vector<8x16xf32>
    %515 = vector.broadcast %138 : vector<1x16xf32> to vector<8x16xf32>
    %516 = arith.addf %514, %515 : vector<8x16xf32>
    %517 = vector.extract_strided_slice %141 {offsets = [0, 48], sizes = [8, 16], strides = [1, 1]} : vector<8x128xf32> to vector<8x16xf32>
    %518 = arith.addf %516, %517 : vector<8x16xf32>
    %cst_134 = arith.constant dense<0xFF800000> : vector<8xf32>
    %519 = vector.multi_reduction <maximumf>, %518, %cst_134 [1] : vector<8x16xf32> to vector<8xf32>
    %520 = vector.shape_cast %519 : vector<8xf32> to vector<8x1xf32>
    %521 = vector.broadcast %520 : vector<8x1xf32> to vector<8x16xf32>
    %522 = arith.subf %518, %521 : vector<8x16xf32>
    %523 = math.exp %522 : vector<8x16xf32>
    %cst_135 = arith.constant dense<0.000000e+00> : vector<8xf32>
    %524 = vector.multi_reduction <add>, %523, %cst_135 [1] : vector<8x16xf32> to vector<8xf32>
    %525 = vector.shape_cast %524 : vector<8xf32> to vector<8x1xf32>
    %526 = vector.broadcast %525 : vector<8x1xf32> to vector<8x16xf32>
    %527 = arith.divf %523, %526 : vector<8x16xf32>
    %c0_136 = arith.constant 0 : index
    %c48_137 = arith.constant 48 : index
    %528 = vector.load %arg5[%c0_136, %c48_137] : memref<8x128xf32, #tpu.memory_space<vmem>>, vector<8x16xf32>
    tpu.vector_store %arg5[%c0_136, %c48_137], %527 {strides = array<i32>} : memref<8x128xf32, #tpu.memory_space<vmem>>, vector<8x16xf32>,
    %529 = vector.broadcast %520 : vector<8x1xf32> to vector<8x16xf32>
    %530 = arith.cmpf oeq, %518, %529 : vector<8x16xf32>
    %c16_i32_138 = arith.constant 16 : i32
    %531 = vector.broadcast %c16_i32_138 : i32 to vector<8x16xi32>
    %532 = arith.select %530, %142, %531 : vector<8x16xi1>, vector<8x16xi32>
    %cst_139 = arith.constant dense<2147483647> : vector<8xi32>
    %533 = vector.multi_reduction <minsi>, %532, %cst_139 [1] : vector<8x16xi32> to vector<8xi32>
    %534 = vector.shape_cast %533 : vector<8xi32> to vector<8x1xi32>
    %535 = vector.broadcast %534 : vector<8x1xi32> to vector<8x16xi32>
    %536 = arith.cmpi eq, %142, %535 : vector<8x16xi32>
    %537 = arith.extui %536 : vector<8x16xi1> to vector<8x16xi32>
    %538 = arith.sitofp %537 : vector<8x16xi32> to vector<8x16xf32>
    %cst_140 = arith.constant dense<0.000000e+00> : vector<8x32xf32>
    %539 = tpu.matmul %538, %5, %cst_140 {dimension_numbers = #tpu.dot_dimension_numbers<[1], [0], [0], [1], [0, 0, 1, 1], [], []>} : vector<8x16xf32>, vector<16x32xf32>, vector<8x32xf32> -> vector<8x32xf32>
    %cst_141 = arith.constant dense<0.000000e+00> : vector<32xf32>
    %540 = vector.multi_reduction <add>, %539, %cst_141 [0] : vector<8x32xf32> to vector<32xf32>
    %541 = vector.shape_cast %540 : vector<32xf32> to vector<1x32xf32>
    %cst_142 = arith.constant 8.000000e+00 : f32
    %542 = vector.broadcast %cst_142 : f32 to vector<1x32xf32>
    %543 = arith.divf %541, %542 : vector<1x32xf32>
    %544 = vector.broadcast %543 : vector<1x32xf32> to vector<8x32xf32>
    %545 = arith.subf %539, %544 : vector<8x32xf32>
    %546 = arith.mulf %545, %545 : vector<8x32xf32>
    %cst_143 = arith.constant dense<0.000000e+00> : vector<32xf32>
    %547 = vector.multi_reduction <add>, %546, %cst_143 [0] : vector<8x32xf32> to vector<32xf32>
    %548 = vector.shape_cast %547 : vector<32xf32> to vector<1x32xf32>
    %cst_144 = arith.constant 8.000000e+00 : f32
    %549 = vector.broadcast %cst_144 : f32 to vector<1x32xf32>
    %550 = arith.divf %548, %549 : vector<1x32xf32>
    %551 = vector.broadcast %543 : vector<1x32xf32> to vector<8x32xf32>
    %552 = arith.subf %539, %551 : vector<8x32xf32>
    %cst_145 = arith.constant 9.99999974E-6 : f32
    %553 = vector.broadcast %cst_145 : f32 to vector<1x32xf32>
    %554 = arith.addf %550, %553 : vector<1x32xf32>
    %555 = math.rsqrt %554 : vector<1x32xf32>
    %556 = vector.broadcast %555 : vector<1x32xf32> to vector<8x32xf32>
    %557 = arith.mulf %552, %556 : vector<8x32xf32>
    %558 = vector.broadcast %97 : vector<1x32xf32> to vector<8x32xf32>
    %559 = arith.mulf %557, %558 : vector<8x32xf32>
    %560 = vector.broadcast %99 : vector<1x32xf32> to vector<8x32xf32>
    %561 = arith.addf %559, %560 : vector<8x32xf32>
    %562 = tpu.concatenate %561, %488 in 1 : vector<8x32xf32>, vector<8x32xf32> -> vector<8x64xf32>
    %cst_146 = arith.constant dense<0.000000e+00> : vector<8x128xf32>
    %563 = tpu.matmul %562, %8, %cst_146 {dimension_numbers = #tpu.dot_dimension_numbers<[1], [0], [0], [1], [0, 0, 1, 1], [], []>} : vector<8x64xf32>, vector<64x128xf32>, vector<8x128xf32> -> vector<8x128xf32>
    %564 = arith.addf %563, %134 : vector<8x128xf32>
    %565 = vector.extract_strided_slice %564 {offsets = [0, 0], sizes = [8, 32], strides = [1, 1]} : vector<8x128xf32> to vector<8x32xf32>
    %566 = arith.negf %565 : vector<8x32xf32>
    %567 = math.exp %566 : vector<8x32xf32>
    %cst_147 = arith.constant 1.000000e+00 : f32
    %568 = vector.broadcast %cst_147 : f32 to vector<8x32xf32>
    %569 = arith.addf %568, %567 : vector<8x32xf32>
    %570 = arith.divf %568, %569 : vector<8x32xf32>
    %571 = vector.extract_strided_slice %564 {offsets = [0, 32], sizes = [8, 32], strides = [1, 1]} : vector<8x128xf32> to vector<8x32xf32>
    %572 = arith.negf %571 : vector<8x32xf32>
    %573 = math.exp %572 : vector<8x32xf32>
    %cst_148 = arith.constant 1.000000e+00 : f32
    %574 = vector.broadcast %cst_148 : f32 to vector<8x32xf32>
    %575 = arith.addf %574, %573 : vector<8x32xf32>
    %576 = arith.divf %574, %575 : vector<8x32xf32>
    %577 = vector.extract_strided_slice %564 {offsets = [0, 64], sizes = [8, 32], strides = [1, 1]} : vector<8x128xf32> to vector<8x32xf32>
    %578 = vector.extract_strided_slice %564 {offsets = [0, 96], sizes = [8, 32], strides = [1, 1]} : vector<8x128xf32> to vector<8x32xf32>
    %579 = arith.mulf %570, %578 : vector<8x32xf32>
    %580 = arith.addf %577, %579 : vector<8x32xf32>
    %581 = math.tanh %580 : vector<8x32xf32>
    %cst_149 = arith.constant 1.000000e+00 : f32
    %582 = vector.broadcast %cst_149 : f32 to vector<8x32xf32>
    %583 = arith.subf %582, %576 : vector<8x32xf32>
    %584 = arith.mulf %583, %581 : vector<8x32xf32>
    %585 = arith.mulf %576, %488 : vector<8x32xf32>
    %586 = arith.addf %584, %585 : vector<8x32xf32>
    %cst_150 = arith.constant 2.000000e-01 : f32
    %587 = vector.broadcast %cst_150 : f32 to vector<8x32xf32>
    %588 = arith.mulf %587, %586 : vector<8x32xf32>
    %589 = arith.maximumf %586, %588 : vector<8x32xf32>
    %cst_151 = arith.constant dense<0.000000e+00> : vector<32xf32>
    %590 = vector.multi_reduction <add>, %589, %cst_151 [0] : vector<8x32xf32> to vector<32xf32>
    %591 = vector.shape_cast %590 : vector<32xf32> to vector<1x32xf32>
    %cst_152 = arith.constant 8.000000e+00 : f32
    %592 = vector.broadcast %cst_152 : f32 to vector<1x32xf32>
    %593 = arith.divf %591, %592 : vector<1x32xf32>
    %594 = vector.broadcast %593 : vector<1x32xf32> to vector<8x32xf32>
    %595 = arith.subf %589, %594 : vector<8x32xf32>
    %596 = arith.mulf %595, %595 : vector<8x32xf32>
    %cst_153 = arith.constant dense<0.000000e+00> : vector<32xf32>
    %597 = vector.multi_reduction <add>, %596, %cst_153 [0] : vector<8x32xf32> to vector<32xf32>
    %598 = vector.shape_cast %597 : vector<32xf32> to vector<1x32xf32>
    %cst_154 = arith.constant 8.000000e+00 : f32
    %599 = vector.broadcast %cst_154 : f32 to vector<1x32xf32>
    %600 = arith.divf %598, %599 : vector<1x32xf32>
    %601 = vector.broadcast %593 : vector<1x32xf32> to vector<8x32xf32>
    %602 = arith.subf %589, %601 : vector<8x32xf32>
    %cst_155 = arith.constant 9.99999974E-6 : f32
    %603 = vector.broadcast %cst_155 : f32 to vector<1x32xf32>
    %604 = arith.addf %600, %603 : vector<1x32xf32>
    %605 = math.rsqrt %604 : vector<1x32xf32>
    %606 = vector.broadcast %605 : vector<1x32xf32> to vector<8x32xf32>
    %607 = arith.mulf %602, %606 : vector<8x32xf32>
    %608 = vector.broadcast %19 : vector<1x32xf32> to vector<8x32xf32>
    %609 = arith.mulf %607, %608 : vector<8x32xf32>
    %610 = vector.broadcast %20 : vector<1x32xf32> to vector<8x32xf32>
    %611 = arith.addf %609, %610 : vector<8x32xf32>
    %cst_156 = arith.constant dense<0.000000e+00> : vector<8x16xf32>
    %612 = tpu.matmul %611, %136, %cst_156 {dimension_numbers = #tpu.dot_dimension_numbers<[1], [0], [0], [1], [0, 0, 1, 1], [], []>} : vector<8x32xf32>, vector<32x16xf32>, vector<8x16xf32> -> vector<8x16xf32>
    %613 = vector.broadcast %138 : vector<1x16xf32> to vector<8x16xf32>
    %614 = arith.addf %612, %613 : vector<8x16xf32>
    %615 = vector.extract_strided_slice %141 {offsets = [0, 64], sizes = [8, 16], strides = [1, 1]} : vector<8x128xf32> to vector<8x16xf32>
    %616 = arith.addf %614, %615 : vector<8x16xf32>
    %cst_157 = arith.constant dense<0xFF800000> : vector<8xf32>
    %617 = vector.multi_reduction <maximumf>, %616, %cst_157 [1] : vector<8x16xf32> to vector<8xf32>
    %618 = vector.shape_cast %617 : vector<8xf32> to vector<8x1xf32>
    %619 = vector.broadcast %618 : vector<8x1xf32> to vector<8x16xf32>
    %620 = arith.subf %616, %619 : vector<8x16xf32>
    %621 = math.exp %620 : vector<8x16xf32>
    %cst_158 = arith.constant dense<0.000000e+00> : vector<8xf32>
    %622 = vector.multi_reduction <add>, %621, %cst_158 [1] : vector<8x16xf32> to vector<8xf32>
    %623 = vector.shape_cast %622 : vector<8xf32> to vector<8x1xf32>
    %624 = vector.broadcast %623 : vector<8x1xf32> to vector<8x16xf32>
    %625 = arith.divf %621, %624 : vector<8x16xf32>
    %c0_159 = arith.constant 0 : index
    %c64_160 = arith.constant 64 : index
    %626 = vector.load %arg5[%c0_159, %c64_160] : memref<8x128xf32, #tpu.memory_space<vmem>>, vector<8x16xf32>
    tpu.vector_store %arg5[%c0_159, %c64_160], %625 {strides = array<i32>} : memref<8x128xf32, #tpu.memory_space<vmem>>, vector<8x16xf32>,
    %627 = vector.broadcast %618 : vector<8x1xf32> to vector<8x16xf32>
    %628 = arith.cmpf oeq, %616, %627 : vector<8x16xf32>
    %c16_i32_161 = arith.constant 16 : i32
    %629 = vector.broadcast %c16_i32_161 : i32 to vector<8x16xi32>
    %630 = arith.select %628, %142, %629 : vector<8x16xi1>, vector<8x16xi32>
    %cst_162 = arith.constant dense<2147483647> : vector<8xi32>
    %631 = vector.multi_reduction <minsi>, %630, %cst_162 [1] : vector<8x16xi32> to vector<8xi32>
    %632 = vector.shape_cast %631 : vector<8xi32> to vector<8x1xi32>
    %633 = vector.broadcast %632 : vector<8x1xi32> to vector<8x16xi32>
    %634 = arith.cmpi eq, %142, %633 : vector<8x16xi32>
    %635 = arith.extui %634 : vector<8x16xi1> to vector<8x16xi32>
    %636 = arith.sitofp %635 : vector<8x16xi32> to vector<8x16xf32>
    %cst_163 = arith.constant dense<0.000000e+00> : vector<8x32xf32>
    %637 = tpu.matmul %636, %5, %cst_163 {dimension_numbers = #tpu.dot_dimension_numbers<[1], [0], [0], [1], [0, 0, 1, 1], [], []>} : vector<8x16xf32>, vector<16x32xf32>, vector<8x32xf32> -> vector<8x32xf32>
    %cst_164 = arith.constant dense<0.000000e+00> : vector<32xf32>
    %638 = vector.multi_reduction <add>, %637, %cst_164 [0] : vector<8x32xf32> to vector<32xf32>
    %639 = vector.shape_cast %638 : vector<32xf32> to vector<1x32xf32>
    %cst_165 = arith.constant 8.000000e+00 : f32
    %640 = vector.broadcast %cst_165 : f32 to vector<1x32xf32>
    %641 = arith.divf %639, %640 : vector<1x32xf32>
    %642 = vector.broadcast %641 : vector<1x32xf32> to vector<8x32xf32>
    %643 = arith.subf %637, %642 : vector<8x32xf32>
    %644 = arith.mulf %643, %643 : vector<8x32xf32>
    %cst_166 = arith.constant dense<0.000000e+00> : vector<32xf32>
    %645 = vector.multi_reduction <add>, %644, %cst_166 [0] : vector<8x32xf32> to vector<32xf32>
    %646 = vector.shape_cast %645 : vector<32xf32> to vector<1x32xf32>
    %cst_167 = arith.constant 8.000000e+00 : f32
    %647 = vector.broadcast %cst_167 : f32 to vector<1x32xf32>
    %648 = arith.divf %646, %647 : vector<1x32xf32>
    %649 = vector.broadcast %641 : vector<1x32xf32> to vector<8x32xf32>
    %650 = arith.subf %637, %649 : vector<8x32xf32>
    %cst_168 = arith.constant 9.99999974E-6 : f32
    %651 = vector.broadcast %cst_168 : f32 to vector<1x32xf32>
    %652 = arith.addf %648, %651 : vector<1x32xf32>
    %653 = math.rsqrt %652 : vector<1x32xf32>
    %654 = vector.broadcast %653 : vector<1x32xf32> to vector<8x32xf32>
    %655 = arith.mulf %650, %654 : vector<8x32xf32>
    %656 = vector.broadcast %97 : vector<1x32xf32> to vector<8x32xf32>
    %657 = arith.mulf %655, %656 : vector<8x32xf32>
    %658 = vector.broadcast %99 : vector<1x32xf32> to vector<8x32xf32>
    %659 = arith.addf %657, %658 : vector<8x32xf32>
    %660 = tpu.concatenate %659, %586 in 1 : vector<8x32xf32>, vector<8x32xf32> -> vector<8x64xf32>
    %cst_169 = arith.constant dense<0.000000e+00> : vector<8x128xf32>
    %661 = tpu.matmul %660, %8, %cst_169 {dimension_numbers = #tpu.dot_dimension_numbers<[1], [0], [0], [1], [0, 0, 1, 1], [], []>} : vector<8x64xf32>, vector<64x128xf32>, vector<8x128xf32> -> vector<8x128xf32>
    %662 = arith.addf %661, %134 : vector<8x128xf32>
    %663 = vector.extract_strided_slice %662 {offsets = [0, 0], sizes = [8, 32], strides = [1, 1]} : vector<8x128xf32> to vector<8x32xf32>
    %664 = arith.negf %663 : vector<8x32xf32>
    %665 = math.exp %664 : vector<8x32xf32>
    %cst_170 = arith.constant 1.000000e+00 : f32
    %666 = vector.broadcast %cst_170 : f32 to vector<8x32xf32>
    %667 = arith.addf %666, %665 : vector<8x32xf32>
    %668 = arith.divf %666, %667 : vector<8x32xf32>
    %669 = vector.extract_strided_slice %662 {offsets = [0, 32], sizes = [8, 32], strides = [1, 1]} : vector<8x128xf32> to vector<8x32xf32>
    %670 = arith.negf %669 : vector<8x32xf32>
    %671 = math.exp %670 : vector<8x32xf32>
    %cst_171 = arith.constant 1.000000e+00 : f32
    %672 = vector.broadcast %cst_171 : f32 to vector<8x32xf32>
    %673 = arith.addf %672, %671 : vector<8x32xf32>
    %674 = arith.divf %672, %673 : vector<8x32xf32>
    %675 = vector.extract_strided_slice %662 {offsets = [0, 64], sizes = [8, 32], strides = [1, 1]} : vector<8x128xf32> to vector<8x32xf32>
    %676 = vector.extract_strided_slice %662 {offsets = [0, 96], sizes = [8, 32], strides = [1, 1]} : vector<8x128xf32> to vector<8x32xf32>
    %677 = arith.mulf %668, %676 : vector<8x32xf32>
    %678 = arith.addf %675, %677 : vector<8x32xf32>
    %679 = math.tanh %678 : vector<8x32xf32>
    %cst_172 = arith.constant 1.000000e+00 : f32
    %680 = vector.broadcast %cst_172 : f32 to vector<8x32xf32>
    %681 = arith.subf %680, %674 : vector<8x32xf32>
    %682 = arith.mulf %681, %679 : vector<8x32xf32>
    %683 = arith.mulf %674, %586 : vector<8x32xf32>
    %684 = arith.addf %682, %683 : vector<8x32xf32>
    %cst_173 = arith.constant 2.000000e-01 : f32
    %685 = vector.broadcast %cst_173 : f32 to vector<8x32xf32>
    %686 = arith.mulf %685, %684 : vector<8x32xf32>
    %687 = arith.maximumf %684, %686 : vector<8x32xf32>
    %cst_174 = arith.constant dense<0.000000e+00> : vector<32xf32>
    %688 = vector.multi_reduction <add>, %687, %cst_174 [0] : vector<8x32xf32> to vector<32xf32>
    %689 = vector.shape_cast %688 : vector<32xf32> to vector<1x32xf32>
    %cst_175 = arith.constant 8.000000e+00 : f32
    %690 = vector.broadcast %cst_175 : f32 to vector<1x32xf32>
    %691 = arith.divf %689, %690 : vector<1x32xf32>
    %692 = vector.broadcast %691 : vector<1x32xf32> to vector<8x32xf32>
    %693 = arith.subf %687, %692 : vector<8x32xf32>
    %694 = arith.mulf %693, %693 : vector<8x32xf32>
    %cst_176 = arith.constant dense<0.000000e+00> : vector<32xf32>
    %695 = vector.multi_reduction <add>, %694, %cst_176 [0] : vector<8x32xf32> to vector<32xf32>
    %696 = vector.shape_cast %695 : vector<32xf32> to vector<1x32xf32>
    %cst_177 = arith.constant 8.000000e+00 : f32
    %697 = vector.broadcast %cst_177 : f32 to vector<1x32xf32>
    %698 = arith.divf %696, %697 : vector<1x32xf32>
    %699 = vector.broadcast %691 : vector<1x32xf32> to vector<8x32xf32>
    %700 = arith.subf %687, %699 : vector<8x32xf32>
    %cst_178 = arith.constant 9.99999974E-6 : f32
    %701 = vector.broadcast %cst_178 : f32 to vector<1x32xf32>
    %702 = arith.addf %698, %701 : vector<1x32xf32>
    %703 = math.rsqrt %702 : vector<1x32xf32>
    %704 = vector.broadcast %703 : vector<1x32xf32> to vector<8x32xf32>
    %705 = arith.mulf %700, %704 : vector<8x32xf32>
    %706 = vector.broadcast %19 : vector<1x32xf32> to vector<8x32xf32>
    %707 = arith.mulf %705, %706 : vector<8x32xf32>
    %708 = vector.broadcast %20 : vector<1x32xf32> to vector<8x32xf32>
    %709 = arith.addf %707, %708 : vector<8x32xf32>
    %cst_179 = arith.constant dense<0.000000e+00> : vector<8x16xf32>
    %710 = tpu.matmul %709, %136, %cst_179 {dimension_numbers = #tpu.dot_dimension_numbers<[1], [0], [0], [1], [0, 0, 1, 1], [], []>} : vector<8x32xf32>, vector<32x16xf32>, vector<8x16xf32> -> vector<8x16xf32>
    %711 = vector.broadcast %138 : vector<1x16xf32> to vector<8x16xf32>
    %712 = arith.addf %710, %711 : vector<8x16xf32>
    %713 = vector.extract_strided_slice %141 {offsets = [0, 80], sizes = [8, 16], strides = [1, 1]} : vector<8x128xf32> to vector<8x16xf32>
    %714 = arith.addf %712, %713 : vector<8x16xf32>
    %cst_180 = arith.constant dense<0xFF800000> : vector<8xf32>
    %715 = vector.multi_reduction <maximumf>, %714, %cst_180 [1] : vector<8x16xf32> to vector<8xf32>
    %716 = vector.shape_cast %715 : vector<8xf32> to vector<8x1xf32>
    %717 = vector.broadcast %716 : vector<8x1xf32> to vector<8x16xf32>
    %718 = arith.subf %714, %717 : vector<8x16xf32>
    %719 = math.exp %718 : vector<8x16xf32>
    %cst_181 = arith.constant dense<0.000000e+00> : vector<8xf32>
    %720 = vector.multi_reduction <add>, %719, %cst_181 [1] : vector<8x16xf32> to vector<8xf32>
    %721 = vector.shape_cast %720 : vector<8xf32> to vector<8x1xf32>
    %722 = vector.broadcast %721 : vector<8x1xf32> to vector<8x16xf32>
    %723 = arith.divf %719, %722 : vector<8x16xf32>
    %c0_182 = arith.constant 0 : index
    %c80 = arith.constant 80 : index
    %724 = vector.load %arg5[%c0_182, %c80] : memref<8x128xf32, #tpu.memory_space<vmem>>, vector<8x16xf32>
    tpu.vector_store %arg5[%c0_182, %c80], %723 {strides = array<i32>} : memref<8x128xf32, #tpu.memory_space<vmem>>, vector<8x16xf32>,
    %725 = vector.broadcast %716 : vector<8x1xf32> to vector<8x16xf32>
    %726 = arith.cmpf oeq, %714, %725 : vector<8x16xf32>
    %c16_i32_183 = arith.constant 16 : i32
    %727 = vector.broadcast %c16_i32_183 : i32 to vector<8x16xi32>
    %728 = arith.select %726, %142, %727 : vector<8x16xi1>, vector<8x16xi32>
    %cst_184 = arith.constant dense<2147483647> : vector<8xi32>
    %729 = vector.multi_reduction <minsi>, %728, %cst_184 [1] : vector<8x16xi32> to vector<8xi32>
    %730 = vector.shape_cast %729 : vector<8xi32> to vector<8x1xi32>
    %731 = vector.broadcast %730 : vector<8x1xi32> to vector<8x16xi32>
    %732 = arith.cmpi eq, %142, %731 : vector<8x16xi32>
    %733 = arith.extui %732 : vector<8x16xi1> to vector<8x16xi32>
    %734 = arith.sitofp %733 : vector<8x16xi32> to vector<8x16xf32>
    %cst_185 = arith.constant dense<0.000000e+00> : vector<8x32xf32>
    %735 = tpu.matmul %734, %5, %cst_185 {dimension_numbers = #tpu.dot_dimension_numbers<[1], [0], [0], [1], [0, 0, 1, 1], [], []>} : vector<8x16xf32>, vector<16x32xf32>, vector<8x32xf32> -> vector<8x32xf32>
    %cst_186 = arith.constant dense<0.000000e+00> : vector<32xf32>
    %736 = vector.multi_reduction <add>, %735, %cst_186 [0] : vector<8x32xf32> to vector<32xf32>
    %737 = vector.shape_cast %736 : vector<32xf32> to vector<1x32xf32>
    %cst_187 = arith.constant 8.000000e+00 : f32
    %738 = vector.broadcast %cst_187 : f32 to vector<1x32xf32>
    %739 = arith.divf %737, %738 : vector<1x32xf32>
    %740 = vector.broadcast %739 : vector<1x32xf32> to vector<8x32xf32>
    %741 = arith.subf %735, %740 : vector<8x32xf32>
    %742 = arith.mulf %741, %741 : vector<8x32xf32>
    %cst_188 = arith.constant dense<0.000000e+00> : vector<32xf32>
    %743 = vector.multi_reduction <add>, %742, %cst_188 [0] : vector<8x32xf32> to vector<32xf32>
    %744 = vector.shape_cast %743 : vector<32xf32> to vector<1x32xf32>
    %cst_189 = arith.constant 8.000000e+00 : f32
    %745 = vector.broadcast %cst_189 : f32 to vector<1x32xf32>
    %746 = arith.divf %744, %745 : vector<1x32xf32>
    %747 = vector.broadcast %739 : vector<1x32xf32> to vector<8x32xf32>
    %748 = arith.subf %735, %747 : vector<8x32xf32>
    %cst_190 = arith.constant 9.99999974E-6 : f32
    %749 = vector.broadcast %cst_190 : f32 to vector<1x32xf32>
    %750 = arith.addf %746, %749 : vector<1x32xf32>
    %751 = math.rsqrt %750 : vector<1x32xf32>
    %752 = vector.broadcast %751 : vector<1x32xf32> to vector<8x32xf32>
    %753 = arith.mulf %748, %752 : vector<8x32xf32>
    %754 = vector.broadcast %97 : vector<1x32xf32> to vector<8x32xf32>
    %755 = arith.mulf %753, %754 : vector<8x32xf32>
    %756 = vector.broadcast %99 : vector<1x32xf32> to vector<8x32xf32>
    %757 = arith.addf %755, %756 : vector<8x32xf32>
    %758 = tpu.concatenate %757, %684 in 1 : vector<8x32xf32>, vector<8x32xf32> -> vector<8x64xf32>
    %cst_191 = arith.constant dense<0.000000e+00> : vector<8x128xf32>
    %759 = tpu.matmul %758, %8, %cst_191 {dimension_numbers = #tpu.dot_dimension_numbers<[1], [0], [0], [1], [0, 0, 1, 1], [], []>} : vector<8x64xf32>, vector<64x128xf32>, vector<8x128xf32> -> vector<8x128xf32>
    %760 = arith.addf %759, %134 : vector<8x128xf32>
    %761 = vector.extract_strided_slice %760 {offsets = [0, 0], sizes = [8, 32], strides = [1, 1]} : vector<8x128xf32> to vector<8x32xf32>
    %762 = arith.negf %761 : vector<8x32xf32>
    %763 = math.exp %762 : vector<8x32xf32>
    %cst_192 = arith.constant 1.000000e+00 : f32
    %764 = vector.broadcast %cst_192 : f32 to vector<8x32xf32>
    %765 = arith.addf %764, %763 : vector<8x32xf32>
    %766 = arith.divf %764, %765 : vector<8x32xf32>
    %767 = vector.extract_strided_slice %760 {offsets = [0, 32], sizes = [8, 32], strides = [1, 1]} : vector<8x128xf32> to vector<8x32xf32>
    %768 = arith.negf %767 : vector<8x32xf32>
    %769 = math.exp %768 : vector<8x32xf32>
    %cst_193 = arith.constant 1.000000e+00 : f32
    %770 = vector.broadcast %cst_193 : f32 to vector<8x32xf32>
    %771 = arith.addf %770, %769 : vector<8x32xf32>
    %772 = arith.divf %770, %771 : vector<8x32xf32>
    %773 = vector.extract_strided_slice %760 {offsets = [0, 64], sizes = [8, 32], strides = [1, 1]} : vector<8x128xf32> to vector<8x32xf32>
    %774 = vector.extract_strided_slice %760 {offsets = [0, 96], sizes = [8, 32], strides = [1, 1]} : vector<8x128xf32> to vector<8x32xf32>
    %775 = arith.mulf %766, %774 : vector<8x32xf32>
    %776 = arith.addf %773, %775 : vector<8x32xf32>
    %777 = math.tanh %776 : vector<8x32xf32>
    %cst_194 = arith.constant 1.000000e+00 : f32
    %778 = vector.broadcast %cst_194 : f32 to vector<8x32xf32>
    %779 = arith.subf %778, %772 : vector<8x32xf32>
    %780 = arith.mulf %779, %777 : vector<8x32xf32>
    %781 = arith.mulf %772, %684 : vector<8x32xf32>
    %782 = arith.addf %780, %781 : vector<8x32xf32>
    %cst_195 = arith.constant 2.000000e-01 : f32
    %783 = vector.broadcast %cst_195 : f32 to vector<8x32xf32>
    %784 = arith.mulf %783, %782 : vector<8x32xf32>
    %785 = arith.maximumf %782, %784 : vector<8x32xf32>
    %cst_196 = arith.constant dense<0.000000e+00> : vector<32xf32>
    %786 = vector.multi_reduction <add>, %785, %cst_196 [0] : vector<8x32xf32> to vector<32xf32>
    %787 = vector.shape_cast %786 : vector<32xf32> to vector<1x32xf32>
    %cst_197 = arith.constant 8.000000e+00 : f32
    %788 = vector.broadcast %cst_197 : f32 to vector<1x32xf32>
    %789 = arith.divf %787, %788 : vector<1x32xf32>
    %790 = vector.broadcast %789 : vector<1x32xf32> to vector<8x32xf32>
    %791 = arith.subf %785, %790 : vector<8x32xf32>
    %792 = arith.mulf %791, %791 : vector<8x32xf32>
    %cst_198 = arith.constant dense<0.000000e+00> : vector<32xf32>
    %793 = vector.multi_reduction <add>, %792, %cst_198 [0] : vector<8x32xf32> to vector<32xf32>
    %794 = vector.shape_cast %793 : vector<32xf32> to vector<1x32xf32>
    %cst_199 = arith.constant 8.000000e+00 : f32
    %795 = vector.broadcast %cst_199 : f32 to vector<1x32xf32>
    %796 = arith.divf %794, %795 : vector<1x32xf32>
    %797 = vector.broadcast %789 : vector<1x32xf32> to vector<8x32xf32>
    %798 = arith.subf %785, %797 : vector<8x32xf32>
    %cst_200 = arith.constant 9.99999974E-6 : f32
    %799 = vector.broadcast %cst_200 : f32 to vector<1x32xf32>
    %800 = arith.addf %796, %799 : vector<1x32xf32>
    %801 = math.rsqrt %800 : vector<1x32xf32>
    %802 = vector.broadcast %801 : vector<1x32xf32> to vector<8x32xf32>
    %803 = arith.mulf %798, %802 : vector<8x32xf32>
    %804 = vector.broadcast %19 : vector<1x32xf32> to vector<8x32xf32>
    %805 = arith.mulf %803, %804 : vector<8x32xf32>
    %806 = vector.broadcast %20 : vector<1x32xf32> to vector<8x32xf32>
    %807 = arith.addf %805, %806 : vector<8x32xf32>
    %cst_201 = arith.constant dense<0.000000e+00> : vector<8x16xf32>
    %808 = tpu.matmul %807, %136, %cst_201 {dimension_numbers = #tpu.dot_dimension_numbers<[1], [0], [0], [1], [0, 0, 1, 1], [], []>} : vector<8x32xf32>, vector<32x16xf32>, vector<8x16xf32> -> vector<8x16xf32>
    %809 = vector.broadcast %138 : vector<1x16xf32> to vector<8x16xf32>
    %810 = arith.addf %808, %809 : vector<8x16xf32>
    %811 = vector.extract_strided_slice %141 {offsets = [0, 96], sizes = [8, 16], strides = [1, 1]} : vector<8x128xf32> to vector<8x16xf32>
    %812 = arith.addf %810, %811 : vector<8x16xf32>
    %cst_202 = arith.constant dense<0xFF800000> : vector<8xf32>
    %813 = vector.multi_reduction <maximumf>, %812, %cst_202 [1] : vector<8x16xf32> to vector<8xf32>
    %814 = vector.shape_cast %813 : vector<8xf32> to vector<8x1xf32>
    %815 = vector.broadcast %814 : vector<8x1xf32> to vector<8x16xf32>
    %816 = arith.subf %812, %815 : vector<8x16xf32>
    %817 = math.exp %816 : vector<8x16xf32>
    %cst_203 = arith.constant dense<0.000000e+00> : vector<8xf32>
    %818 = vector.multi_reduction <add>, %817, %cst_203 [1] : vector<8x16xf32> to vector<8xf32>
    %819 = vector.shape_cast %818 : vector<8xf32> to vector<8x1xf32>
    %820 = vector.broadcast %819 : vector<8x1xf32> to vector<8x16xf32>
    %821 = arith.divf %817, %820 : vector<8x16xf32>
    %c0_204 = arith.constant 0 : index
    %c96_205 = arith.constant 96 : index
    %822 = vector.load %arg5[%c0_204, %c96_205] : memref<8x128xf32, #tpu.memory_space<vmem>>, vector<8x16xf32>
    tpu.vector_store %arg5[%c0_204, %c96_205], %821 {strides = array<i32>} : memref<8x128xf32, #tpu.memory_space<vmem>>, vector<8x16xf32>,
    %823 = vector.broadcast %814 : vector<8x1xf32> to vector<8x16xf32>
    %824 = arith.cmpf oeq, %812, %823 : vector<8x16xf32>
    %c16_i32_206 = arith.constant 16 : i32
    %825 = vector.broadcast %c16_i32_206 : i32 to vector<8x16xi32>
    %826 = arith.select %824, %142, %825 : vector<8x16xi1>, vector<8x16xi32>
    %cst_207 = arith.constant dense<2147483647> : vector<8xi32>
    %827 = vector.multi_reduction <minsi>, %826, %cst_207 [1] : vector<8x16xi32> to vector<8xi32>
    %828 = vector.shape_cast %827 : vector<8xi32> to vector<8x1xi32>
    %829 = vector.broadcast %828 : vector<8x1xi32> to vector<8x16xi32>
    %830 = arith.cmpi eq, %142, %829 : vector<8x16xi32>
    %831 = arith.extui %830 : vector<8x16xi1> to vector<8x16xi32>
    %832 = arith.sitofp %831 : vector<8x16xi32> to vector<8x16xf32>
    %cst_208 = arith.constant dense<0.000000e+00> : vector<8x32xf32>
    %833 = tpu.matmul %832, %5, %cst_208 {dimension_numbers = #tpu.dot_dimension_numbers<[1], [0], [0], [1], [0, 0, 1, 1], [], []>} : vector<8x16xf32>, vector<16x32xf32>, vector<8x32xf32> -> vector<8x32xf32>
    %cst_209 = arith.constant dense<0.000000e+00> : vector<32xf32>
    %834 = vector.multi_reduction <add>, %833, %cst_209 [0] : vector<8x32xf32> to vector<32xf32>
    %835 = vector.shape_cast %834 : vector<32xf32> to vector<1x32xf32>
    %cst_210 = arith.constant 8.000000e+00 : f32
    %836 = vector.broadcast %cst_210 : f32 to vector<1x32xf32>
    %837 = arith.divf %835, %836 : vector<1x32xf32>
    %838 = vector.broadcast %837 : vector<1x32xf32> to vector<8x32xf32>
    %839 = arith.subf %833, %838 : vector<8x32xf32>
    %840 = arith.mulf %839, %839 : vector<8x32xf32>
    %cst_211 = arith.constant dense<0.000000e+00> : vector<32xf32>
    %841 = vector.multi_reduction <add>, %840, %cst_211 [0] : vector<8x32xf32> to vector<32xf32>
    %842 = vector.shape_cast %841 : vector<32xf32> to vector<1x32xf32>
    %cst_212 = arith.constant 8.000000e+00 : f32
    %843 = vector.broadcast %cst_212 : f32 to vector<1x32xf32>
    %844 = arith.divf %842, %843 : vector<1x32xf32>
    %845 = vector.broadcast %837 : vector<1x32xf32> to vector<8x32xf32>
    %846 = arith.subf %833, %845 : vector<8x32xf32>
    %cst_213 = arith.constant 9.99999974E-6 : f32
    %847 = vector.broadcast %cst_213 : f32 to vector<1x32xf32>
    %848 = arith.addf %844, %847 : vector<1x32xf32>
    %849 = math.rsqrt %848 : vector<1x32xf32>
    %850 = vector.broadcast %849 : vector<1x32xf32> to vector<8x32xf32>
    %851 = arith.mulf %846, %850 : vector<8x32xf32>
    %852 = vector.broadcast %97 : vector<1x32xf32> to vector<8x32xf32>
    %853 = arith.mulf %851, %852 : vector<8x32xf32>
    %854 = vector.broadcast %99 : vector<1x32xf32> to vector<8x32xf32>
    %855 = arith.addf %853, %854 : vector<8x32xf32>
    %856 = tpu.concatenate %855, %782 in 1 : vector<8x32xf32>, vector<8x32xf32> -> vector<8x64xf32>
    %cst_214 = arith.constant dense<0.000000e+00> : vector<8x128xf32>
    %857 = tpu.matmul %856, %8, %cst_214 {dimension_numbers = #tpu.dot_dimension_numbers<[1], [0], [0], [1], [0, 0, 1, 1], [], []>} : vector<8x64xf32>, vector<64x128xf32>, vector<8x128xf32> -> vector<8x128xf32>
    %858 = arith.addf %857, %134 : vector<8x128xf32>
    %859 = vector.extract_strided_slice %858 {offsets = [0, 0], sizes = [8, 32], strides = [1, 1]} : vector<8x128xf32> to vector<8x32xf32>
    %860 = arith.negf %859 : vector<8x32xf32>
    %861 = math.exp %860 : vector<8x32xf32>
    %cst_215 = arith.constant 1.000000e+00 : f32
    %862 = vector.broadcast %cst_215 : f32 to vector<8x32xf32>
    %863 = arith.addf %862, %861 : vector<8x32xf32>
    %864 = arith.divf %862, %863 : vector<8x32xf32>
    %865 = vector.extract_strided_slice %858 {offsets = [0, 32], sizes = [8, 32], strides = [1, 1]} : vector<8x128xf32> to vector<8x32xf32>
    %866 = arith.negf %865 : vector<8x32xf32>
    %867 = math.exp %866 : vector<8x32xf32>
    %cst_216 = arith.constant 1.000000e+00 : f32
    %868 = vector.broadcast %cst_216 : f32 to vector<8x32xf32>
    %869 = arith.addf %868, %867 : vector<8x32xf32>
    %870 = arith.divf %868, %869 : vector<8x32xf32>
    %871 = vector.extract_strided_slice %858 {offsets = [0, 64], sizes = [8, 32], strides = [1, 1]} : vector<8x128xf32> to vector<8x32xf32>
    %872 = vector.extract_strided_slice %858 {offsets = [0, 96], sizes = [8, 32], strides = [1, 1]} : vector<8x128xf32> to vector<8x32xf32>
    %873 = arith.mulf %864, %872 : vector<8x32xf32>
    %874 = arith.addf %871, %873 : vector<8x32xf32>
    %875 = math.tanh %874 : vector<8x32xf32>
    %cst_217 = arith.constant 1.000000e+00 : f32
    %876 = vector.broadcast %cst_217 : f32 to vector<8x32xf32>
    %877 = arith.subf %876, %870 : vector<8x32xf32>
    %878 = arith.mulf %877, %875 : vector<8x32xf32>
    %879 = arith.mulf %870, %782 : vector<8x32xf32>
    %880 = arith.addf %878, %879 : vector<8x32xf32>
    %cst_218 = arith.constant 2.000000e-01 : f32
    %881 = vector.broadcast %cst_218 : f32 to vector<8x32xf32>
    %882 = arith.mulf %881, %880 : vector<8x32xf32>
    %883 = arith.maximumf %880, %882 : vector<8x32xf32>
    %cst_219 = arith.constant dense<0.000000e+00> : vector<32xf32>
    %884 = vector.multi_reduction <add>, %883, %cst_219 [0] : vector<8x32xf32> to vector<32xf32>
    %885 = vector.shape_cast %884 : vector<32xf32> to vector<1x32xf32>
    %cst_220 = arith.constant 8.000000e+00 : f32
    %886 = vector.broadcast %cst_220 : f32 to vector<1x32xf32>
    %887 = arith.divf %885, %886 : vector<1x32xf32>
    %888 = vector.broadcast %887 : vector<1x32xf32> to vector<8x32xf32>
    %889 = arith.subf %883, %888 : vector<8x32xf32>
    %890 = arith.mulf %889, %889 : vector<8x32xf32>
    %cst_221 = arith.constant dense<0.000000e+00> : vector<32xf32>
    %891 = vector.multi_reduction <add>, %890, %cst_221 [0] : vector<8x32xf32> to vector<32xf32>
    %892 = vector.shape_cast %891 : vector<32xf32> to vector<1x32xf32>
    %cst_222 = arith.constant 8.000000e+00 : f32
    %893 = vector.broadcast %cst_222 : f32 to vector<1x32xf32>
    %894 = arith.divf %892, %893 : vector<1x32xf32>
    %895 = vector.broadcast %887 : vector<1x32xf32> to vector<8x32xf32>
    %896 = arith.subf %883, %895 : vector<8x32xf32>
    %cst_223 = arith.constant 9.99999974E-6 : f32
    %897 = vector.broadcast %cst_223 : f32 to vector<1x32xf32>
    %898 = arith.addf %894, %897 : vector<1x32xf32>
    %899 = math.rsqrt %898 : vector<1x32xf32>
    %900 = vector.broadcast %899 : vector<1x32xf32> to vector<8x32xf32>
    %901 = arith.mulf %896, %900 : vector<8x32xf32>
    %902 = vector.broadcast %19 : vector<1x32xf32> to vector<8x32xf32>
    %903 = arith.mulf %901, %902 : vector<8x32xf32>
    %904 = vector.broadcast %20 : vector<1x32xf32> to vector<8x32xf32>
    %905 = arith.addf %903, %904 : vector<8x32xf32>
    %cst_224 = arith.constant dense<0.000000e+00> : vector<8x16xf32>
    %906 = tpu.matmul %905, %136, %cst_224 {dimension_numbers = #tpu.dot_dimension_numbers<[1], [0], [0], [1], [0, 0, 1, 1], [], []>} : vector<8x32xf32>, vector<32x16xf32>, vector<8x16xf32> -> vector<8x16xf32>
    %907 = vector.broadcast %138 : vector<1x16xf32> to vector<8x16xf32>
    %908 = arith.addf %906, %907 : vector<8x16xf32>
    %909 = vector.extract_strided_slice %141 {offsets = [0, 112], sizes = [8, 16], strides = [1, 1]} : vector<8x128xf32> to vector<8x16xf32>
    %910 = arith.addf %908, %909 : vector<8x16xf32>
    %cst_225 = arith.constant dense<0xFF800000> : vector<8xf32>
    %911 = vector.multi_reduction <maximumf>, %910, %cst_225 [1] : vector<8x16xf32> to vector<8xf32>
    %912 = vector.shape_cast %911 : vector<8xf32> to vector<8x1xf32>
    %913 = vector.broadcast %912 : vector<8x1xf32> to vector<8x16xf32>
    %914 = arith.subf %910, %913 : vector<8x16xf32>
    %915 = math.exp %914 : vector<8x16xf32>
    %cst_226 = arith.constant dense<0.000000e+00> : vector<8xf32>
    %916 = vector.multi_reduction <add>, %915, %cst_226 [1] : vector<8x16xf32> to vector<8xf32>
    %917 = vector.shape_cast %916 : vector<8xf32> to vector<8x1xf32>
    %918 = vector.broadcast %917 : vector<8x1xf32> to vector<8x16xf32>
    %919 = arith.divf %915, %918 : vector<8x16xf32>
    %c0_227 = arith.constant 0 : index
    %c112 = arith.constant 112 : index
    %920 = vector.load %arg5[%c0_227, %c112] : memref<8x128xf32, #tpu.memory_space<vmem>>, vector<8x16xf32>
    tpu.vector_store %arg5[%c0_227, %c112], %919 {strides = array<i32>} : memref<8x128xf32, #tpu.memory_space<vmem>>, vector<8x16xf32>,
    return
  }
}

</mosaic_0001>

<llo_original>
// kernel: run_generator.1
$region0: #{run_generator.1}
  #allocation0 [shape = 'u32[]', space=smem, size = 0x4, offset = 0x4, fixed_abs, tag = 'smem constant byte address 0x4 - core index']
  #allocation1 [shape = 'u32[144,128]{1,0:T(1,128)}', space=vmem, size = 0x12000, scoped, tag = 'internal scratch']
  %s0 = inlined_call_operand.vmem [shape: f32[2], index: 0, kind: input, shape index: {}]
  %s1 = inlined_call_operand.vmem [shape: f32[8,128], index: 1, kind: input, shape index: {}]
  %s2 = inlined_call_operand.vmem [shape: f32[8,16], index: 2, kind: input, shape index: {}]
  %s3 = inlined_call_operand.vmem [shape: f32[16,128], index: 3, kind: input, shape index: {}]
  %s4 = inlined_call_operand.vmem [shape: f32[192,128], index: 4, kind: input, shape index: {}]
  %s5 = inlined_call_operand.vmem [shape: f32[8,128], index: 5, kind: output, shape index: {}]
  %s6 = sld [smem:[#allocation0]]
  $region34: #{run_generator.1} parent=0
    _
  %s8 = ssub.s32 1, %s6
  %s9 = scalar_select 0, %s8, %s6
  $region1: #{run_generator.1} parent=0
    #allocation2 [shape = 'u8[512]{0}', space=smem, size = 0x200, scoped, tag = 'input window, operand 0, single buffered']
    #allocation3 [shape = 's32[1]{0}', space=sflag, size = 0x4, scoped, tag = 'scoped memory for run_generator.1']
    %10 = vsyncpa [#allocation3], 0
    // Predicated region
    $region2: #{run_generator.1} parent=1 // pred_check
      _
    $region3: #{run_generator.1} parent=1 // pred_check_branch
      %12 = sbr.rel (0) target = $region5
    $region4: #{run_generator.1} parent=1 // pred_region
      %s14 = ssub.s32 16, 16
      %15 = vsyncadd [#allocation3], %s14
      %s17 = sshll.u32 %s0, 4
      %s18 = int_to_ptr.vmem [resolvable:$true] %s17
      %20 = dma.vmem_to_smem %s18, 16, [#allocation2], [#allocation3]
    $region5: #{run_generator.1} parent=1 // pred_fallthru
      _
    // Predicated region
    $region6: #{run_generator.1} parent=1 // pred_check
      _
    $region7: #{run_generator.1} parent=1 // pred_check_branch
      %22 = sbr.rel (0) target = $region9
    $region8: #{run_generator.1} parent=1 // pred_region
      _
    $region9: #{run_generator.1} parent=1 // pred_fallthru
      _
    // Predicated region
    $region10: #{run_generator.1} parent=1 // pred_check
      _
    $region11: #{run_generator.1} parent=1 // pred_check_branch
      %24 = sbr.rel (0) target = $region13
    $region12: #{run_generator.1} parent=1 // pred_region
      _
    $region13: #{run_generator.1} parent=1 // pred_fallthru
      _
    // Predicated region
    $region14: #{run_generator.1} parent=1 // pred_check
      _
    $region15: #{run_generator.1} parent=1 // pred_check_branch
      %26 = sbr.rel (0) target = $region17
    $region16: #{run_generator.1} parent=1 // pred_region
      _
    $region17: #{run_generator.1} parent=1 // pred_fallthru
      _
    // Predicated region
    $region18: #{run_generator.1} parent=1 // pred_check
      _
    $region19: #{run_generator.1} parent=1 // pred_check_branch
      %28 = sbr.rel (0) target = $region21
    $region20: #{run_generator.1} parent=1 // pred_region
      _
    $region21: #{run_generator.1} parent=1 // pred_fallthru
      _
    // Predicated region
    $region22: #{run_generator.1} parent=1 // pred_check
      _
    $region23: #{run_generator.1} parent=1 // pred_check_branch
      %30 = sbr.rel (0) target = $region25
    $region24: #{run_generator.1} parent=1 // pred_region
      %31 = dma.done [#allocation3], 16
    $region25: #{run_generator.1} parent=1 // pred_fallthru
      _
    %32 = sfence
    %s33 = sld [smem:[#allocation2]]
    %v34 = vstv %s33
    %v35 = vrcp.pop %v34
    %s36 = vtos %v35
    %s37 = sld [smem:[#allocation2 + $0x1]]
    %v38 = vld [vmem:[%s4] sm:$0xff]
    %v39 = vld [vmem:[%s4 + $0x8] sm:$0xff]
    %v40 = vld [vmem:[%s4 + $0x10] sm:$0xff]
    %v41 = vld [vmem:[%s4 + $0x18] sm:$0xff]
    %v42 = vld [vmem:[%s4 + $0x20] sm:$0xff]
    %v43 = vld [vmem:[%s4 + $0x28] sm:$0xff]
    %v44 = vld [vmem:[%s4 + $0x30] sm:$0xff]
    %v45 = vld [vmem:[%s4 + $0x38] sm:$0xff]
    %v46 = vld [vmem:[%s4 + $0x40] sm:$0xff]
    %v47 = vld [vmem:[%s4 + $0x48] sm:$0xff]
    %v48 = vld [vmem:[%s4 + $0x50] sm:$0xff]
    %v49 = vld [vmem:[%s4 + $0x58] sm:$0xff]
    %v50 = vld [vmem:[%s4 + $0x60] sm:$0xff]
    %v51 = vld [vmem:[%s4 + $0x68] sm:$0xff]
    %v52 = vld [vmem:[%s4 + $0x70] sm:$0xff]
    %v53 = vld [vmem:[%s4 + $0x78] sm:$0xff]
    %v54 = vld [vmem:[%s4 + $0x80] sm:$0xff]
    %v55 = vld [vmem:[%s4 + $0x88] sm:$0xff]
    %v56 = vld [vmem:[%s4 + $0x90] sm:$0xff]
    %v57 = vld [vmem:[%s4 + $0x98] sm:$0xff]
    %v58 = vld [vmem:[%s4 + $0xa0] sm:$0xff]
    %v59 = vld [vmem:[%s4 + $0xa8] sm:$0xff]
    %v60 = vld [vmem:[%s4 + $0xb0] sm:$0xff]
    %v61 = vld [vmem:[%s4 + $0xb8] sm:$0xff]
    %v62 = vld [vmem:[%s3] sm:$0x1]
    %v63 = vld [vmem:[%s3 + $0x1] sm:$0x1]
    %v64 = vld [vmem:[%s3 + $0x2] sm:$0x1]
    %v65 = vld [vmem:[%s3 + $0x3] sm:$0x1]
    %v66 = vld [vmem:[%s3 + $0x4] sm:$0x1]
    %v67 = vld [vmem:[%s3 + $0x5] sm:$0x1]
    %v68 = vld [vmem:[%s3 + $0x6] sm:$0x1]
    %v69 = vld [vmem:[%s3 + $0x7] sm:$0x1]
    %v70 = vld [vmem:[%s3 + $0x8] sm:$0x1]
    %v71 = vld [vmem:[%s3 + $0x9] sm:$0x1]
    %v72 = vld [vmem:[%s3 + $0xa] sm:$0x1]
    %v73 = vld [vmem:[%s3 + $0xb] sm:$0x1]
    %v74 = vld [vmem:[%s3 + $0xc] sm:$0x1]
    %v75 = vld [vmem:[%s2] sm:$0xff]
    %v76 = vlaneseq
    %v77 = vshrl.u32 %v76, 7
    %v78 = vsub.s32 0, %v77
    %v79 = vrot.slane %v62, %v78
    %vm80 = vcmask 130048
    %v82 = vsel %vm80, %v75, 0
    %84 = vmatprep.subr.mxu0 0.0
    %85 = vmatpush1.msra.mxu0 %v38
    %86 = vmatprep.subr.mxu0 0.0
    %87 = vmatpush1.msra.mxu0 %v39
    %88 = vmatprep.subr.mxu0 0.0
    %89 = vmatpush1.msra.mxu0 0.0
    %90 = vmatprep.subr.mxu0 0.0
    %91 = vmatpush1.msra.mxu0 0.0
    %92 = vmatprep.subr.mxu0 0.0
    %93 = vmatpush1.msra.mxu0 0.0
    %94 = vmatprep.subr.mxu0 0.0
    %95 = vmatpush1.msra.mxu0 0.0
    %96 = vmatprep.subr.mxu0 0.0
    %97 = vmatpush1.msra.mxu0 0.0
    %98 = vmatprep.subr.mxu0 0.0
    %99 = vmatpush1.msra.mxu0 0.0
    %100 = vmatprep.subr.mxu0 0.0
    %101 = vmatpush1.msra.mxu0 0.0
    %102 = vmatprep.subr.mxu0 0.0
    %103 = vmatpush1.msra.mxu0 0.0
    %104 = vmatprep.subr.mxu0 0.0
    %105 = vmatpush1.msra.mxu0 0.0
    %106 = vmatprep.subr.mxu0 0.0
    %107 = vmatpush1.msra.mxu0 0.0
    %108 = vmatprep.subr.mxu0 0.0
    %109 = vmatpush1.msra.mxu0 0.0
    %110 = vmatprep.subr.mxu0 0.0
    %111 = vmatpush1.msra.mxu0 0.0
    %112 = vmatprep.subr.mxu0 0.0
    %113 = vmatpush1.msra.mxu0 0.0
    %114 = vmatprep.subr.mxu0 0.0
    %115 = vmatpush1.msra.mxu0 0.0
    %116 = vmatprep.subr.mxu0 0.0
    %117 = vmatpush1.msra.mxu0 0.0
    %118 = vmatprep.subr.mxu0 0.0
    %119 = vmatpush1.msra.mxu0 0.0
    %120 = vmatprep.subr.mxu0 0.0
    %121 = vmatpush1.msra.mxu0 0.0
    %122 = vmatprep.subr.mxu0 0.0
    %123 = vmatpush1.msra.mxu0 0.0
    %124 = vmatprep.subr.mxu0 0.0
    %125 = vmatpush1.msra.mxu0 0.0
    %126 = vmatprep.subr.mxu0 0.0
    %127 = vmatpush1.msra.mxu0 0.0
    %128 = vmatprep.subr.mxu0 0.0
    %129 = vmatpush1.msra.mxu0 0.0
    %130 = vmatprep.subr.mxu0 0.0
    %131 = vmatpush1.msra.mxu0 0.0
    %132 = vmatprep.subr.mxu0 0.0
    %133 = vmatpush1.msra.mxu0 0.0
    %134 = vmatprep.subr.mxu0 0.0
    %135 = vmatpush1.msra.mxu0 0.0
    %136 = vmatprep.subr.mxu0 0.0
    %137 = vmatpush1.msra.mxu0 0.0
    %138 = vmatprep.subr.mxu0 0.0
    %139 = vmatpush1.msra.mxu0 0.0
    %140 = vmatprep.subr.mxu0 0.0
    %141 = vmatpush1.msra.mxu0 0.0
    %142 = vmatprep.subr.mxu0 0.0
    %143 = vmatpush1.msra.mxu0 0.0
    %144 = vmatprep.subr.mxu0 0.0
    %145 = vmatpush1.msra.mxu0 0.0
    %146 = vmatprep.subr.mxu0 0.0
    %147 = vmatpush1.msra.mxu0 0.0
    %148 = vmatprep.mubr.f32.mxu0 0.0
    %149 = vmatmul.mubr.f32.gmra.mrb[0].mxu0 %v82
    %v150 = vpop.f32.mrb[0].mxu0
    %v151 = vadd.f32 %v79, %v150
    %v152 = vpop.f32.mrb[0].mxu0
    %153 = vdwg.mxu0
    %v154 = vmul.f32 %v151, 0.2
    %v155 = vmax.f32 %v151, %v154
    %vm156 = vcmask 261120
    %v157 = vsel %vm156, %v155, 0.0
    %v158 = vrot.slane %v157, 4
    %v159 = vadd.f32 %v157, %v158
    %v160 = vrot.slane %v159, 2
    %v161 = vadd.f32 %v159, %v160
    %v162 = vrot.slane %v161, 1
    %v163 = vadd.f32 %v161, %v162
    %v164 = vrcp.pop 8.0
    %v165 = vmul.f32 %v163, %v164
    %v166 = vsub.f32 %v155, %v165
    %v167 = vmul.f32 %v166, %v166
    %v168 = vsel %vm156, %v167, 0.0
    %v169 = vrot.slane %v168, 4
    %v170 = vadd.f32 %v168, %v169
    %v171 = vrot.slane %v170, 2
    %v172 = vadd.f32 %v170, %v171
    %v173 = vrot.slane %v172, 1
    %v174 = vadd.f32 %v172, %v173
    %v175 = vmul.f32 %v174, %v164
    %v176 = vadd.f32 %v175, 1e-05
    %v177 = vrsqrt.pop %v176
    %v178 = vmul.f32 %v166, %v177
    %v179 = vlaneseq
    %v180 = vshrl.u32 %v179, 7
    %v181 = vsub.s32 0, %v180
    %v182 = vrot.slane %v63, %v181
    %v183 = vmul.f32 %v178, %v182
    %v184 = vlaneseq
    %v185 = vshrl.u32 %v184, 7
    %v186 = vsub.s32 0, %v185
    %v187 = vrot.slane %v64, %v186
    %v188 = vadd.f32 %v183, %v187
    %v189 = vlaneseq
    %v190 = vshrl.u32 %v189, 7
    %v191 = vsub.s32 0, %v190
    %v192 = vrot.slane %v65, %v191
    %v194 = vsel %vm156, %v188, 0
    %196 = vmatprep.subr.mxu0 0.0
    %197 = vmatpush1.msra.mxu0 %v40
    %198 = vmatprep.subr.mxu0 0.0
    %199 = vmatpush1.msra.mxu0 %v41
    %200 = vmatprep.subr.mxu0 0.0
    %201 = vmatpush1.msra.mxu0 %v42
    %202 = vmatprep.subr.mxu0 0.0
    %203 = vmatpush1.msra.mxu0 %v43
    %204 = vmatprep.subr.mxu0 0.0
    %205 = vmatpush1.msra.mxu0 0.0
    %206 = vmatprep.subr.mxu0 0.0
    %207 = vmatpush1.msra.mxu0 0.0
    %208 = vmatprep.subr.mxu0 0.0
    %209 = vmatpush1.msra.mxu0 0.0
    %210 = vmatprep.subr.mxu0 0.0
    %211 = vmatpush1.msra.mxu0 0.0
    %212 = vmatprep.subr.mxu0 0.0
    %213 = vmatpush1.msra.mxu0 0.0
    %214 = vmatprep.subr.mxu0 0.0
    %215 = vmatpush1.msra.mxu0 0.0
    %216 = vmatprep.subr.mxu0 0.0
    %217 = vmatpush1.msra.mxu0 0.0
    %218 = vmatprep.subr.mxu0 0.0
    %219 = vmatpush1.msra.mxu0 0.0
    %220 = vmatprep.subr.mxu0 0.0
    %221 = vmatpush1.msra.mxu0 0.0
    %222 = vmatprep.subr.mxu0 0.0
    %223 = vmatpush1.msra.mxu0 0.0
    %224 = vmatprep.subr.mxu0 0.0
    %225 = vmatpush1.msra.mxu0 0.0
    %226 = vmatprep.subr.mxu0 0.0
    %227 = vmatpush1.msra.mxu0 0.0
    %228 = vmatprep.subr.mxu0 0.0
    %229 = vmatpush1.msra.mxu0 0.0
    %230 = vmatprep.subr.mxu0 0.0
    %231 = vmatpush1.msra.mxu0 0.0
    %232 = vmatprep.subr.mxu0 0.0
    %233 = vmatpush1.msra.mxu0 0.0
    %234 = vmatprep.subr.mxu0 0.0
    %235 = vmatpush1.msra.mxu0 0.0
    %236 = vmatprep.subr.mxu0 0.0
    %237 = vmatpush1.msra.mxu0 0.0
    %238 = vmatprep.subr.mxu0 0.0
    %239 = vmatpush1.msra.mxu0 0.0
    %240 = vmatprep.subr.mxu0 0.0
    %241 = vmatpush1.msra.mxu0 0.0
    %242 = vmatprep.subr.mxu0 0.0
    %243 = vmatpush1.msra.mxu0 0.0
    %244 = vmatprep.subr.mxu0 0.0
    %245 = vmatpush1.msra.mxu0 0.0
    %246 = vmatprep.subr.mxu0 0.0
    %247 = vmatpush1.msra.mxu0 0.0
    %248 = vmatprep.subr.mxu0 0.0
    %249 = vmatpush1.msra.mxu0 0.0
    %250 = vmatprep.subr.mxu0 0.0
    %251 = vmatpush1.msra.mxu0 0.0
    %252 = vmatprep.subr.mxu0 0.0
    %253 = vmatpush1.msra.mxu0 0.0
    %254 = vmatprep.subr.mxu0 0.0
    %255 = vmatpush1.msra.mxu0 0.0
    %256 = vmatprep.subr.mxu0 0.0
    %257 = vmatpush1.msra.mxu0 0.0
    %258 = vmatprep.subr.mxu0 0.0
    %259 = vmatpush1.msra.mxu0 0.0
    %260 = vmatprep.mubr.f32.mxu0 0.0
    %261 = vmatmul.mubr.f32.gmra.mrb[0].mxu0 %v194
    %v262 = vpop.f32.mrb[0].mxu0
    %v263 = vadd.f32 %v192, %v262
    %v264 = vpop.f32.mrb[0].mxu0
    %265 = vdwg.mxu0
    %267 = vrot.lane.b32.xlu0 %v263, 124
    %v268 = vpop.permute.xlu0 %267
    %vm269 = vcmask 31744
    %v270 = vsel %vm269, %v263, 0
    %v272 = vsel %vm269, %v268, 0
    %274 = vmatprep.subr.mxu0 0.0
    %275 = vmatpush1.xpose.msra.mxu0 %v272
    %276 = vmatprep.subr.mxu0 0.0
    %277 = vmatpush1.xpose.msra.mxu0 0.0
    %278 = vmatprep.subr.mxu0 0.0
    %279 = vmatpush1.xpose.msra.mxu0 0.0
    %280 = vmatprep.subr.mxu0 0.0
    %281 = vmatpush1.xpose.msra.mxu0 0.0
    %282 = vmatprep.subr.mxu0 0.0
    %283 = vmatpush1.xpose.msra.mxu0 0.0
    %284 = vmatprep.subr.mxu0 0.0
    %285 = vmatpush1.xpose.msra.mxu0 0.0
    %286 = vmatprep.subr.mxu0 0.0
    %287 = vmatpush1.xpose.msra.mxu0 0.0
    %288 = vmatprep.subr.mxu0 0.0
    %289 = vmatpush1.xpose.msra.mxu0 0.0
    %290 = vmatprep.subr.mxu0 0.0
    %291 = vmatpush1.xpose.msra.mxu0 0.0
    %292 = vmatprep.subr.mxu0 0.0
    %293 = vmatpush1.xpose.msra.mxu0 0.0
    %294 = vmatprep.subr.mxu0 0.0
    %295 = vmatpush1.xpose.msra.mxu0 0.0
    %296 = vmatprep.subr.mxu0 0.0
    %297 = vmatpush1.xpose.msra.mxu0 0.0
    %298 = vmatprep.subr.mxu0 0.0
    %299 = vmatpush1.xpose.msra.mxu0 0.0
    %300 = vmatprep.subr.mxu0 0.0
    %301 = vmatpush1.xpose.msra.mxu0 0.0
    %302 = vmatprep.subr.mxu0 0.0
    %303 = vmatpush1.xpose.msra.mxu0 0.0
    %304 = vmatprep.subr.mxu0 0.0
    %305 = vmatpush1.xpose.msra.mxu0 0.0
    %306 = vmatprep.subr.mxu0 0.0
    %307 = vmatpush1.xpose.msra.mxu0 0.0
    %308 = vmatprep.subr.mxu0 0.0
    %309 = vmatpush1.xpose.msra.mxu0 0.0
    %310 = vmatprep.subr.mxu0 0.0
    %311 = vmatpush1.xpose.msra.mxu0 0.0
    %312 = vmatprep.subr.mxu0 0.0
    %313 = vmatpush1.xpose.msra.mxu0 0.0
    %314 = vmatprep.subr.mxu0 0.0
    %315 = vmatpush1.xpose.msra.mxu0 0.0
    %316 = vmatprep.subr.mxu0 0.0
    %317 = vmatpush1.xpose.msra.mxu0 0.0
    %318 = vmatprep.subr.mxu0 0.0
    %319 = vmatpush1.xpose.msra.mxu0 0.0
    %320 = vmatprep.subr.mxu0 0.0
    %321 = vmatpush1.xpose.msra.mxu0 0.0
    %322 = vmatprep.subr.mxu0 0.0
    %323 = vmatpush1.xpose.msra.mxu0 0.0
    %324 = vmatprep.subr.mxu0 0.0
    %325 = vmatpush1.xpose.msra.mxu0 0.0
    %326 = vmatprep.subr.mxu0 0.0
    %327 = vmatpush1.xpose.msra.mxu0 0.0
    %328 = vmatprep.subr.mxu0 0.0
    %329 = vmatpush1.xpose.msra.mxu0 0.0
    %330 = vmatprep.subr.mxu0 0.0
    %331 = vmatpush1.xpose.msra.mxu0 0.0
    %332 = vmatprep.subr.mxu0 0.0
    %333 = vmatpush1.xpose.msra.mxu0 0.0
    %334 = vmatprep.subr.mxu0 0.0
    %335 = vmatpush1.xpose.msra.mxu0 0.0
    %336 = vmatprep.subr.mxu0 0.0
    %337 = vmatpush1.xpose.msra.mxu0 0.0
    %338 = vmatprep.mubr.f32.mxu0 0.0
    %339 = vmatmul.mubr.f32.gmra.mrb[0].mxu0 %v270
    %v340 = vpop.f32.mrb[0].mxu0
    %v341 = vadd.f32 0.0, %v340
    %v342 = vpop.f32.mrb[0].mxu0
    %343 = vdwg.mxu0
    %vm344 = vcmask 64512
    %v345 = vsel %vm344, %v341, -inf
    %346 = vmax.xlane.f32.xlu0 %v345
    %v347 = vpop.xlane.xlu0 %346
    %v348 = vsub.f32 %v341, %v347
    %v349 = vmul.f32 %v348, 1.442695
    %v350 = vpow.pop %v349
    %v351 = vsel %vm344, %v350, 0.0
    %352 = vadd.xlane.f32.xlu0 %v351
    %v353 = vpop.xlane.xlu0 %352
    %v354 = vrcp.pop %v353
    %v355 = vmul.f32 %v350, %v354
    %356 = vrot.lane.b32.xlu0 %v263, 120
    %v357 = vpop.permute.xlu0 %356
    %v360 = vsel %vm344, %v355, 0
    %362 = vmatprep.subr.mxu0 0.0
    %363 = vmatpush1.msra.mxu0 %v357
    %364 = vmatprep.subr.mxu0 0.0
    %365 = vmatpush1.msra.mxu0 0.0
    %366 = vmatprep.subr.mxu0 0.0
    %367 = vmatpush1.msra.mxu0 0.0
    %368 = vmatprep.subr.mxu0 0.0
    %369 = vmatpush1.msra.mxu0 0.0
    %370 = vmatprep.subr.mxu0 0.0
    %371 = vmatpush1.msra.mxu0 0.0
    %372 = vmatprep.subr.mxu0 0.0
    %373 = vmatpush1.msra.mxu0 0.0
    %374 = vmatprep.subr.mxu0 0.0
    %375 = vmatpush1.msra.mxu0 0.0
    %376 = vmatprep.subr.mxu0 0.0
    %377 = vmatpush1.msra.mxu0 0.0
    %378 = vmatprep.subr.mxu0 0.0
    %379 = vmatpush1.msra.mxu0 0.0
    %380 = vmatprep.subr.mxu0 0.0
    %381 = vmatpush1.msra.mxu0 0.0
    %382 = vmatprep.subr.mxu0 0.0
    %383 = vmatpush1.msra.mxu0 0.0
    %384 = vmatprep.subr.mxu0 0.0
    %385 = vmatpush1.msra.mxu0 0.0
    %386 = vmatprep.subr.mxu0 0.0
    %387 = vmatpush1.msra.mxu0 0.0
    %388 = vmatprep.subr.mxu0 0.0
    %389 = vmatpush1.msra.mxu0 0.0
    %390 = vmatprep.subr.mxu0 0.0
    %391 = vmatpush1.msra.mxu0 0.0
    %392 = vmatprep.subr.mxu0 0.0
    %393 = vmatpush1.msra.mxu0 0.0
    %394 = vmatprep.subr.mxu0 0.0
    %395 = vmatpush1.msra.mxu0 0.0
    %396 = vmatprep.subr.mxu0 0.0
    %397 = vmatpush1.msra.mxu0 0.0
    %398 = vmatprep.subr.mxu0 0.0
    %399 = vmatpush1.msra.mxu0 0.0
    %400 = vmatprep.subr.mxu0 0.0
    %401 = vmatpush1.msra.mxu0 0.0
    %402 = vmatprep.subr.mxu0 0.0
    %403 = vmatpush1.msra.mxu0 0.0
    %404 = vmatprep.subr.mxu0 0.0
    %405 = vmatpush1.msra.mxu0 0.0
    %406 = vmatprep.subr.mxu0 0.0
    %407 = vmatpush1.msra.mxu0 0.0
    %408 = vmatprep.subr.mxu0 0.0
    %409 = vmatpush1.msra.mxu0 0.0
    %410 = vmatprep.subr.mxu0 0.0
    %411 = vmatpush1.msra.mxu0 0.0
    %412 = vmatprep.subr.mxu0 0.0
    %413 = vmatpush1.msra.mxu0 0.0
    %414 = vmatprep.subr.mxu0 0.0
    %415 = vmatpush1.msra.mxu0 0.0
    %416 = vmatprep.subr.mxu0 0.0
    %417 = vmatpush1.msra.mxu0 0.0
    %418 = vmatprep.subr.mxu0 0.0
    %419 = vmatpush1.msra.mxu0 0.0
    %420 = vmatprep.subr.mxu0 0.0
    %421 = vmatpush1.msra.mxu0 0.0
    %422 = vmatprep.subr.mxu0 0.0
    %423 = vmatpush1.msra.mxu0 0.0
    %424 = vmatprep.subr.mxu0 0.0
    %425 = vmatpush1.msra.mxu0 0.0
    %426 = vmatprep.mubr.f32.mxu0 0.0
    %427 = vmatmul.mubr.f32.gmra.mrb[0].mxu0 %v360
    %v428 = vpop.f32.mrb[0].mxu0
    %v429 = vadd.f32 0.0, %v428
    %v430 = vpop.f32.mrb[0].mxu0
    %431 = vdwg.mxu0
    %v432 = vstv %s37
    %v433 = vmul.f32 %v432, %v429
    %v434 = vadd.f32 %v433, %v188
    %v435 = vmul.f32 %v434, 0.2
    %v436 = vmax.f32 %v434, %v435
    %v437 = vsel %vm156, %v436, 0.0
    %v438 = vrot.slane %v437, 4
    %v439 = vadd.f32 %v437, %v438
    %v440 = vrot.slane %v439, 2
    %v441 = vadd.f32 %v439, %v440
    %v442 = vrot.slane %v441, 1
    %v443 = vadd.f32 %v441, %v442
    %v444 = vmul.f32 %v443, %v164
    %v445 = vsub.f32 %v436, %v444
    %v446 = vmul.f32 %v445, %v445
    %v447 = vsel %vm156, %v446, 0.0
    %v448 = vrot.slane %v447, 4
    %v449 = vadd.f32 %v447, %v448
    %v450 = vrot.slane %v449, 2
    %v451 = vadd.f32 %v449, %v450
    %v452 = vrot.slane %v451, 1
    %v453 = vadd.f32 %v451, %v452
    %v454 = vmul.f32 %v453, %v164
    %v455 = vadd.f32 %v454, 1e-05
    %v456 = vrsqrt.pop %v455
    %v457 = vmul.f32 %v445, %v456
    %v458 = vlaneseq
    %v459 = vshrl.u32 %v458, 7
    %v460 = vsub.s32 0, %v459
    %v461 = vrot.slane %v66, %v460
    %v462 = vmul.f32 %v457, %v461
    %v463 = vlaneseq
    %v464 = vshrl.u32 %v463, 7
    %v465 = vsub.s32 0, %v464
    %v466 = vrot.slane %v67, %v465
    %v467 = vadd.f32 %v462, %v466
    %v468 = vsel %vm156, %v467, 0.0
    %v469 = vrot.slane %v468, 4
    %v470 = vadd.f32 %v468, %v469
    %v471 = vrot.slane %v470, 2
    %v472 = vadd.f32 %v470, %v471
    %v473 = vrot.slane %v472, 1
    %v474 = vadd.f32 %v472, %v473
    %v475 = vmul.f32 %v474, %v164
    %v476 = vsub.f32 %v467, %v475
    %v477 = vmul.f32 %v476, %v476
    %v478 = vsel %vm156, %v477, 0.0
    %v479 = vrot.slane %v478, 4
    %v480 = vadd.f32 %v478, %v479
    %v481 = vrot.slane %v480, 2
    %v482 = vadd.f32 %v480, %v481
    %v483 = vrot.slane %v482, 1
    %v484 = vadd.f32 %v482, %v483
    %v485 = vmul.f32 %v484, %v164
    %v486 = vadd.f32 %v485, 1e-05
    %v487 = vrsqrt.pop %v486
    %v488 = vmul.f32 %v476, %v487
    %v489 = vlaneseq
    %v490 = vshrl.u32 %v489, 7
    %v491 = vsub.s32 0, %v490
    %v492 = vrot.slane %v68, %v491
    %494 = vrot.lane.b32.xlu0 %v492, 96
    %v495 = vpop.permute.xlu0 %494
    %v497 = vmul.f32 %v488, %v495
    %v498 = vlaneseq
    %v499 = vshrl.u32 %v498, 7
    %v500 = vsub.s32 0, %v499
    %v501 = vrot.slane %v69, %v500
    %503 = vrot.lane.b32.xlu0 %v501, 96
    %v504 = vpop.permute.xlu0 %503
    %v506 = vadd.f32 %v497, %v504
    %v507 = vlaneseq
    %v508 = vshrl.u32 %v507, 7
    %v509 = vsub.s32 0, %v508
    %v510 = vrot.slane %v70, %v509
    %v512 = vsel %vm156, %v506, 0
    %514 = vmatprep.subr.mxu0 0.0
    %515 = vmatpush1.msra.mxu0 %v46
    %516 = vmatprep.subr.mxu0 0.0
    %517 = vmatpush1.msra.mxu0 %v47
    %518 = vmatprep.subr.mxu0 0.0
    %519 = vmatpush1.msra.mxu0 %v48
    %520 = vmatprep.subr.mxu0 0.0
    %521 = vmatpush1.msra.mxu0 %v49
    %522 = vmatprep.subr.mxu0 0.0
    %523 = vmatpush1.msra.mxu0 0.0
    %524 = vmatprep.subr.mxu0 0.0
    %525 = vmatpush1.msra.mxu0 0.0
    %526 = vmatprep.subr.mxu0 0.0
    %527 = vmatpush1.msra.mxu0 0.0
    %528 = vmatprep.subr.mxu0 0.0
    %529 = vmatpush1.msra.mxu0 0.0
    %530 = vmatprep.subr.mxu0 0.0
    %531 = vmatpush1.msra.mxu0 0.0
    %532 = vmatprep.subr.mxu0 0.0
    %533 = vmatpush1.msra.mxu0 0.0
    %534 = vmatprep.subr.mxu0 0.0
    %535 = vmatpush1.msra.mxu0 0.0
    %536 = vmatprep.subr.mxu0 0.0
    %537 = vmatpush1.msra.mxu0 0.0
    %538 = vmatprep.subr.mxu0 0.0
    %539 = vmatpush1.msra.mxu0 0.0
    %540 = vmatprep.subr.mxu0 0.0
    %541 = vmatpush1.msra.mxu0 0.0
    %542 = vmatprep.subr.mxu0 0.0
    %543 = vmatpush1.msra.mxu0 0.0
    %544 = vmatprep.subr.mxu0 0.0
    %545 = vmatpush1.msra.mxu0 0.0
    %546 = vmatprep.subr.mxu0 0.0
    %547 = vmatpush1.msra.mxu0 0.0
    %548 = vmatprep.subr.mxu0 0.0
    %549 = vmatpush1.msra.mxu0 0.0
    %550 = vmatprep.subr.mxu0 0.0
    %551 = vmatpush1.msra.mxu0 0.0
    %552 = vmatprep.subr.mxu0 0.0
    %553 = vmatpush1.msra.mxu0 0.0
    %554 = vmatprep.subr.mxu0 0.0
    %555 = vmatpush1.msra.mxu0 0.0
    %556 = vmatprep.subr.mxu0 0.0
    %557 = vmatpush1.msra.mxu0 0.0
    %558 = vmatprep.subr.mxu0 0.0
    %559 = vmatpush1.msra.mxu0 0.0
    %560 = vmatprep.subr.mxu0 0.0
    %561 = vmatpush1.msra.mxu0 0.0
    %562 = vmatprep.subr.mxu0 0.0
    %563 = vmatpush1.msra.mxu0 0.0
    %564 = vmatprep.subr.mxu0 0.0
    %565 = vmatpush1.msra.mxu0 0.0
    %566 = vmatprep.subr.mxu0 0.0
    %567 = vmatpush1.msra.mxu0 0.0
    %568 = vmatprep.subr.mxu0 0.0
    %569 = vmatpush1.msra.mxu0 0.0
    %570 = vmatprep.subr.mxu0 0.0
    %571 = vmatpush1.msra.mxu0 0.0
    %572 = vmatprep.subr.mxu0 0.0
    %573 = vmatpush1.msra.mxu0 0.0
    %574 = vmatprep.subr.mxu0 0.0
    %575 = vmatpush1.msra.mxu0 0.0
    %576 = vmatprep.subr.mxu0 0.0
    %577 = vmatpush1.msra.mxu0 0.0
    %578 = vmatprep.mubr.f32.mxu0 0.0
    %579 = vmatmul.mubr.f32.gmra.mrb[0].mxu0 %v512
    %v580 = vpop.f32.mrb[0].mxu0
    %v581 = vadd.f32 %v510, %v580
    %v582 = vpop.f32.mrb[0].mxu0
    %583 = vdwg.mxu0
    %v584 = vlaneseq
    %v585 = vshrl.u32 %v584, 7
    %v586 = vsub.s32 0, %v585
    %v587 = vrot.slane %v71, %v586
    %v588 = vadd.f32 %v581, %v587
    %590 = vrot.lane.b32.xlu0 %v587, 32
    %v591 = vpop.permute.xlu0 %590
    %vm593 = vcmask 523264
    %v594 = vsel %vm593, %v588, %v581
    %vm595 = vcmask 785408
    %v596 = vsel %vm595, %v594, %v591
    %v597 = vstv %s36
    %v598 = vmul.f32 %v50, %v597
    %v599 = vmul.f32 %v51, %v597
    %v600 = vmul.f32 %v52, %v597
    %v601 = vmul.f32 %v53, %v597
    %v602 = vmul.f32 %v74, %v597
    %v603 = vld [vmem:[%s1] sm:$0xff]
    %v604 = vmul.f32 %v603, %v597
    %v605 = vlaneseq
    %v606 = vand.u32 %v605, 127
    %vm607 = vcmp.eq.s32.totalorder %v606, 15
    %v608 = vsel %vm607, 1, 0
    %v609 = vcvt.s32.f32 %v608
    %v611 = vsel %vm80, %v609, 0
    %613 = vmatprep.subr.mxu0 0.0
    %614 = vmatpush1.msra.mxu0 %v44
    %615 = vmatprep.subr.mxu0 0.0
    %616 = vmatpush1.msra.mxu0 %v45
    %617 = vmatprep.subr.mxu0 0.0
    %618 = vmatpush1.msra.mxu0 0.0
    %619 = vmatprep.subr.mxu0 0.0
    %620 = vmatpush1.msra.mxu0 0.0
    %621 = vmatprep.subr.mxu0 0.0
    %622 = vmatpush1.msra.mxu0 0.0
    %623 = vmatprep.subr.mxu0 0.0
    %624 = vmatpush1.msra.mxu0 0.0
    %625 = vmatprep.subr.mxu0 0.0
    %626 = vmatpush1.msra.mxu0 0.0
    %627 = vmatprep.subr.mxu0 0.0
    %628 = vmatpush1.msra.mxu0 0.0
    %629 = vmatprep.subr.mxu0 0.0
    %630 = vmatpush1.msra.mxu0 0.0
    %631 = vmatprep.subr.mxu0 0.0
    %632 = vmatpush1.msra.mxu0 0.0
    %633 = vmatprep.subr.mxu0 0.0
    %634 = vmatpush1.msra.mxu0 0.0
    %635 = vmatprep.subr.mxu0 0.0
    %636 = vmatpush1.msra.mxu0 0.0
    %637 = vmatprep.subr.mxu0 0.0
    %638 = vmatpush1.msra.mxu0 0.0
    %639 = vmatprep.subr.mxu0 0.0
    %640 = vmatpush1.msra.mxu0 0.0
    %641 = vmatprep.subr.mxu0 0.0
    %642 = vmatpush1.msra.mxu0 0.0
    %643 = vmatprep.subr.mxu0 0.0
    %644 = vmatpush1.msra.mxu0 0.0
    %645 = vmatprep.subr.mxu0 0.0
    %646 = vmatpush1.msra.mxu0 0.0
    %647 = vmatprep.subr.mxu0 0.0
    %648 = vmatpush1.msra.mxu0 0.0
    %649 = vmatprep.subr.mxu0 0.0
    %650 = vmatpush1.msra.mxu0 0.0
    %651 = vmatprep.subr.mxu0 0.0
    %652 = vmatpush1.msra.mxu0 0.0
    %653 = vmatprep.subr.mxu0 0.0
    %654 = vmatpush1.msra.mxu0 0.0
    %655 = vmatprep.subr.mxu0 0.0
    %656 = vmatpush1.msra.mxu0 0.0
    %657 = vmatprep.subr.mxu0 0.0
    %658 = vmatpush1.msra.mxu0 0.0
    %659 = vmatprep.subr.mxu0 0.0
    %660 = vmatpush1.msra.mxu0 0.0
    %661 = vmatprep.subr.mxu0 0.0
    %662 = vmatpush1.msra.mxu0 0.0
    %663 = vmatprep.subr.mxu0 0.0
    %664 = vmatpush1.msra.mxu0 0.0
    %665 = vmatprep.subr.mxu0 0.0
    %666 = vmatpush1.msra.mxu0 0.0
    %667 = vmatprep.subr.mxu0 0.0
    %668 = vmatpush1.msra.mxu0 0.0
    %669 = vmatprep.subr.mxu0 0.0
    %670 = vmatpush1.msra.mxu0 0.0
    %671 = vmatprep.subr.mxu0 0.0
    %672 = vmatpush1.msra.mxu0 0.0
    %673 = vmatprep.subr.mxu0 0.0
    %674 = vmatpush1.msra.mxu0 0.0
    %675 = vmatprep.subr.mxu0 0.0
    %676 = vmatpush1.msra.mxu0 0.0
    %677 = vmatprep.mubr.f32.mxu0 0.0
    %678 = vmatmul.mubr.f32.gmra.mrb[0].mxu0 %v611
    %v679 = vpop.f32.mrb[0].mxu0
    %v680 = vadd.f32 0.0, %v679
    %v681 = vpop.f32.mrb[0].mxu0
    %682 = vdwg.mxu0
    %v683 = vsel %vm156, %v680, 0.0
    %v684 = vrot.slane %v683, 4
    %v685 = vadd.f32 %v683, %v684
    %v686 = vrot.slane %v685, 2
    %v687 = vadd.f32 %v685, %v686
    %v688 = vrot.slane %v687, 1
    %v689 = vadd.f32 %v687, %v688
    %v690 = vmul.f32 %v689, %v164
    %v691 = vsub.f32 %v680, %v690
    %v692 = vmul.f32 %v691, %v691
    %v693 = vsel %vm156, %v692, 0.0
    %v694 = vrot.slane %v693, 4
    %v695 = vadd.f32 %v693, %v694
    %v696 = vrot.slane %v695, 2
    %v697 = vadd.f32 %v695, %v696
    %v698 = vrot.slane %v697, 1
    %v699 = vadd.f32 %v697, %v698
    %v700 = vmul.f32 %v699, %v164
    %v701 = vadd.f32 %v700, 1e-05
    %v702 = vrsqrt.pop %v701
    %v703 = vmul.f32 %v691, %v702
    %v704 = vmul.f32 %v703, %v492
    %v705 = vadd.f32 %v704, %v501
    %707 = vrot.lane.b32.xlu0 %v467, 32
    %v708 = vpop.permute.xlu0 %707
    %v710 = vsel %vm156, %v705, %v708
    %v712 = vsel %vm593, %v710, 0
    %714 = vmatprep.subr.mxu0 0.0
    %715 = vmatpush1.msra.mxu0 %v54
    %716 = vmatprep.subr.mxu0 0.0
    %717 = vmatpush1.msra.mxu0 %v55
    %718 = vmatprep.subr.mxu0 0.0
    %719 = vmatpush1.msra.mxu0 %v56
    %720 = vmatprep.subr.mxu0 0.0
    %721 = vmatpush1.msra.mxu0 %v57
    %722 = vmatprep.subr.mxu0 0.0
    %723 = vmatpush1.msra.mxu0 %v58
    %724 = vmatprep.subr.mxu0 0.0
    %725 = vmatpush1.msra.mxu0 %v59
    %726 = vmatprep.subr.mxu0 0.0
    %727 = vmatpush1.msra.mxu0 %v60
    %728 = vmatprep.subr.mxu0 0.0
    %729 = vmatpush1.msra.mxu0 %v61
    %730 = vmatprep.subr.mxu0 0.0
    %731 = vmatpush1.msra.mxu0 0.0
    %732 = vmatprep.subr.mxu0 0.0
    %733 = vmatpush1.msra.mxu0 0.0
    %734 = vmatprep.subr.mxu0 0.0
    %735 = vmatpush1.msra.mxu0 0.0
    %736 = vmatprep.subr.mxu0 0.0
    %737 = vmatpush1.msra.mxu0 0.0
    %738 = vmatprep.subr.mxu0 0.0
    %739 = vmatpush1.msra.mxu0 0.0
    %740 = vmatprep.subr.mxu0 0.0
    %741 = vmatpush1.msra.mxu0 0.0
    %742 = vmatprep.subr.mxu0 0.0
    %743 = vmatpush1.msra.mxu0 0.0
    %744 = vmatprep.subr.mxu0 0.0
    %745 = vmatpush1.msra.mxu0 0.0
    %746 = vmatprep.subr.mxu0 0.0
    %747 = vmatpush1.msra.mxu0 0.0
    %748 = vmatprep.subr.mxu0 0.0
    %749 = vmatpush1.msra.mxu0 0.0
    %750 = vmatprep.subr.mxu0 0.0
    %751 = vmatpush1.msra.mxu0 0.0
    %752 = vmatprep.subr.mxu0 0.0
    %753 = vmatpush1.msra.mxu0 0.0
    %754 = vmatprep.subr.mxu0 0.0
    %755 = vmatpush1.msra.mxu0 0.0
    %756 = vmatprep.subr.mxu0 0.0
    %757 = vmatpush1.msra.mxu0 0.0
    %758 = vmatprep.subr.mxu0 0.0
    %759 = vmatpush1.msra.mxu0 0.0
    %760 = vmatprep.subr.mxu0 0.0
    %761 = vmatpush1.msra.mxu0 0.0
    %762 = vmatprep.subr.mxu0 0.0
    %763 = vmatpush1.msra.mxu0 0.0
    %764 = vmatprep.subr.mxu0 0.0
    %765 = vmatpush1.msra.mxu0 0.0
    %766 = vmatprep.subr.mxu0 0.0
    %767 = vmatpush1.msra.mxu0 0.0
    %768 = vmatprep.subr.mxu0 0.0
    %769 = vmatpush1.msra.mxu0 0.0
    %770 = vmatprep.subr.mxu0 0.0
    %771 = vmatpush1.msra.mxu0 0.0
    %772 = vmatprep.subr.mxu0 0.0
    %773 = vmatpush1.msra.mxu0 0.0
    %774 = vmatprep.subr.mxu0 0.0
    %775 = vmatpush1.msra.mxu0 0.0
    %776 = vmatprep.subr.mxu0 0.0
    %777 = vmatpush1.msra.mxu0 0.0
    %778 = vmatprep.mubr.f32.mxu0 0.0
    %779 = vmatmul.mubr.f32.gmra.mrb[0].mxu0 %v712
    %v780 = vpop.f32.mrb[0].mxu0
    %v781 = vadd.f32 %v596, %v780
    %v782 = vpop.f32.mrb[0].mxu0
    %783 = vdwg.mxu0
    %v784 = vxor.u32 %v781, 2147483648
    %v785 = vmul.f32 %v784, 1.442695
    %v786 = vpow.pop %v785
    %v787 = vadd.f32 %v786, 1.0
    %v788 = vrcp.pop %v787
    %v789 = vmul.f32 1.0, %v788
    %791 = vrot.lane.b32.xlu0 %v781, 32
    %v792 = vpop.permute.xlu0 %791
    %v794 = vmul.f32 %v789, %v792
    %796 = vrot.lane.b32.xlu0 %v794, 64
    %v797 = vpop.permute.xlu0 %796
    %v799 = vadd.f32 %v781, %v797
    %v800 = vtanh.pop %v799
    %v801 = vsub.f32 1.0, %v789
    %803 = vrot.lane.b32.xlu0 %v800, 96
    %v804 = vpop.permute.xlu0 %803
    %v806 = vmul.f32 %v801, %v804
    %v807 = vmul.f32 %v789, %v708
    %v808 = vadd.f32 %v806, %v807
    %v809 = vmul.f32 %v808, 0.2
    %v810 = vmax.f32 %v808, %v809
    %vm811 = vcmask 523520
    %v812 = vsel %vm811, %v810, 0.0
    %v813 = vrot.slane %v812, 4
    %v814 = vadd.f32 %v812, %v813
    %v815 = vrot.slane %v814, 2
    %v816 = vadd.f32 %v814, %v815
    %v817 = vrot.slane %v816, 1
    %v818 = vadd.f32 %v816, %v817
    %v819 = vmul.f32 %v818, %v164
    %v820 = vsub.f32 %v810, %v819
    %v821 = vmul.f32 %v820, %v820
    %v822 = vsel %vm811, %v821, 0.0
    %v823 = vrot.slane %v822, 4
    %v824 = vadd.f32 %v822, %v823
    %v825 = vrot.slane %v824, 2
    %v826 = vadd.f32 %v824, %v825
    %v827 = vrot.slane %v826, 1
    %v828 = vadd.f32 %v826, %v827
    %v829 = vmul.f32 %v828, %v164
    %v830 = vadd.f32 %v829, 1e-05
    %v831 = vrsqrt.pop %v830
    %v832 = vmul.f32 %v820, %v831
    %v833 = vlaneseq
    %v834 = vshrl.u32 %v833, 7
    %v835 = vsub.s32 0, %v834
    %v836 = vrot.slane %v72, %v835
    %838 = vrot.lane.b32.xlu0 %v836, 32
    %v839 = vpop.permute.xlu0 %838
    %v841 = vmul.f32 %v832, %v839
    %v842 = vlaneseq
    %v843 = vshrl.u32 %v842, 7
    %v844 = vsub.s32 0, %v843
    %v845 = vrot.slane %v73, %v844
    %847 = vrot.lane.b32.xlu0 %v845, 32
    %v848 = vpop.permute.xlu0 %847
    %v850 = vadd.f32 %v841, %v848
    %v851 = vlaneseq
    %v852 = vshrl.u32 %v851, 7
    %v853 = vsub.s32 0, %v852
    %v854 = vrot.slane %v602, %v853
    %856 = vrot.lane.b32.xlu0 %v850, 96
    %v857 = vpop.permute.xlu0 %856
    %v858 = vsel %vm156, %v857, 0
    %860 = vmatprep.subr.mxu0 0.0
    %861 = vmatpush1.msra.mxu0 %v598
    %862 = vmatprep.subr.mxu0 0.0
    %863 = vmatpush1.msra.mxu0 %v599
    %864 = vmatprep.subr.mxu0 0.0
    %865 = vmatpush1.msra.mxu0 %v600
    %866 = vmatprep.subr.mxu0 0.0
    %867 = vmatpush1.msra.mxu0 %v601
    %868 = vmatprep.subr.mxu0 0.0
    %869 = vmatpush1.msra.mxu0 0.0
    %870 = vmatprep.subr.mxu0 0.0
    %871 = vmatpush1.msra.mxu0 0.0
    %872 = vmatprep.subr.mxu0 0.0
    %873 = vmatpush1.msra.mxu0 0.0
    %874 = vmatprep.subr.mxu0 0.0
    %875 = vmatpush1.msra.mxu0 0.0
    %876 = vmatprep.subr.mxu0 0.0
    %877 = vmatpush1.msra.mxu0 0.0
    %878 = vmatprep.subr.mxu0 0.0
    %879 = vmatpush1.msra.mxu0 0.0
    %880 = vmatprep.subr.mxu0 0.0
    %881 = vmatpush1.msra.mxu0 0.0
    %882 = vmatprep.subr.mxu0 0.0
    %883 = vmatpush1.msra.mxu0 0.0
    %884 = vmatprep.subr.mxu0 0.0
    %885 = vmatpush1.msra.mxu0 0.0
    %886 = vmatprep.subr.mxu0 0.0
    %887 = vmatpush1.msra.mxu0 0.0
    %888 = vmatprep.subr.mxu0 0.0
    %889 = vmatpush1.msra.mxu0 0.0
    %890 = vmatprep.subr.mxu0 0.0
    %891 = vmatpush1.msra.mxu0 0.0
    %892 = vmatprep.subr.mxu0 0.0
    %893 = vmatpush1.msra.mxu0 0.0
    %894 = vmatprep.subr.mxu0 0.0
    %895 = vmatpush1.msra.mxu0 0.0
    %896 = vmatprep.subr.mxu0 0.0
    %897 = vmatpush1.msra.mxu0 0.0
    %898 = vmatprep.subr.mxu0 0.0
    %899 = vmatpush1.msra.mxu0 0.0
    %900 = vmatprep.subr.mxu0 0.0
    %901 = vmatpush1.msra.mxu0 0.0
    %902 = vmatprep.subr.mxu0 0.0
    %903 = vmatpush1.msra.mxu0 0.0
    %904 = vmatprep.subr.mxu0 0.0
    %905 = vmatpush1.msra.mxu0 0.0
    %906 = vmatprep.subr.mxu0 0.0
    %907 = vmatpush1.msra.mxu0 0.0
    %908 = vmatprep.subr.mxu0 0.0
    %909 = vmatpush1.msra.mxu0 0.0
    %910 = vmatprep.subr.mxu0 0.0
    %911 = vmatpush1.msra.mxu0 0.0
    %912 = vmatprep.subr.mxu0 0.0
    %913 = vmatpush1.msra.mxu0 0.0
    %914 = vmatprep.subr.mxu0 0.0
    %915 = vmatpush1.msra.mxu0 0.0
    %916 = vmatprep.subr.mxu0 0.0
    %917 = vmatpush1.msra.mxu0 0.0
    %918 = vmatprep.subr.mxu0 0.0
    %919 = vmatpush1.msra.mxu0 0.0
    %920 = vmatprep.subr.mxu0 0.0
    %921 = vmatpush1.msra.mxu0 0.0
    %922 = vmatprep.subr.mxu0 0.0
    %923 = vmatpush1.msra.mxu0 0.0
    %924 = vmatprep.mubr.f32.mxu0 0.0
    %925 = vmatmul.mubr.f32.gmra.mrb[0].mxu0 %v858
    %v926 = vpop.f32.mrb[0].mxu0
    %v927 = vadd.f32 %v854, %v926
    %v928 = vpop.f32.mrb[0].mxu0
    %929 = vdwg.mxu0
    %v930 = vadd.f32 %v927, %v604
    %v931 = vsel %vm80, %v930, -inf
    %932 = vmax.xlane.f32.xlu0 %v931
    %v933 = vpop.xlane.xlu0 %932
    %v934 = vsub.f32 %v930, %v933
    %v935 = vmul.f32 %v934, 1.442695
    %v936 = vpow.pop %v935
    %v937 = vsel %vm80, %v936, 0.0
    %938 = vadd.xlane.f32.xlu0 %v937
    %v939 = vpop.xlane.xlu0 %938
    %v940 = vrcp.pop %v939
    %v941 = vmul.f32 %v936, %v940
    %942 = vst.msk [vmem:[%s5] sm:$0xff] %vm80, %v941
    %vm943 = vcmp.eq.f32.partialorder %v930, %v933
    %v944 = vsel %vm943, %v606, 16
    %v945 = vsel %vm80, %v944, 2147483647
    %v946 = vand.u32 %v945, 65535
    %v947 = vshra.s32 %v945, 16
    %v948 = vcvt.s32.f32 %v946
    %v949 = vcvt.s32.f32 %v947
    %950 = vmin.xlane.f32.xlu0 %v949
    %v951 = vpop.xlane.xlu0 %950
    %vm952 = vcmp.eq.f32.partialorder %v949, %v951
    %v953 = vsel %vm952, %v948, inf
    %954 = vmin.xlane.f32.xlu0 %v953
    %v955 = vpop.xlane.xlu0 %954
    %v956 = vcvt.f32.s32 %v955
    %v957 = vcvt.f32.s32 %v951
    %v958 = vshll.u32 %v957, 16
    %v959 = vadd.s32 %v958, %v956
    %vm960 = vcmp.eq.s32.totalorder %v606, %v959
    %v961 = vsel %vm960, 1, 0
    %v962 = vcvt.s32.f32 %v961
    %v964 = vsel %vm80, %v962, 0
    %966 = vmatprep.subr.mxu0 0.0
    %967 = vmatpush1.msra.mxu0 %v44
    %968 = vmatprep.subr.mxu0 0.0
    %969 = vmatpush1.msra.mxu0 %v45
    %970 = vmatprep.subr.mxu0 0.0
    %971 = vmatpush1.msra.mxu0 0.0
    %972 = vmatprep.subr.mxu0 0.0
    %973 = vmatpush1.msra.mxu0 0.0
    %974 = vmatprep.subr.mxu0 0.0
    %975 = vmatpush1.msra.mxu0 0.0
    %976 = vmatprep.subr.mxu0 0.0
    %977 = vmatpush1.msra.mxu0 0.0
    %978 = vmatprep.subr.mxu0 0.0
    %979 = vmatpush1.msra.mxu0 0.0
    %980 = vmatprep.subr.mxu0 0.0
    %981 = vmatpush1.msra.mxu0 0.0
    %982 = vmatprep.subr.mxu0 0.0
    %983 = vmatpush1.msra.mxu0 0.0
    %984 = vmatprep.subr.mxu0 0.0
    %985 = vmatpush1.msra.mxu0 0.0
    %986 = vmatprep.subr.mxu0 0.0
    %987 = vmatpush1.msra.mxu0 0.0
    %988 = vmatprep.subr.mxu0 0.0
    %989 = vmatpush1.msra.mxu0 0.0
    %990 = vmatprep.subr.mxu0 0.0
    %991 = vmatpush1.msra.mxu0 0.0
    %992 = vmatprep.subr.mxu0 0.0
    %993 = vmatpush1.msra.mxu0 0.0
    %994 = vmatprep.subr.mxu0 0.0
    %995 = vmatpush1.msra.mxu0 0.0
    %996 = vmatprep.subr.mxu0 0.0
    %997 = vmatpush1.msra.mxu0 0.0
    %998 = vmatprep.subr.mxu0 0.0
    %999 = vmatpush1.msra.mxu0 0.0
    %1000 = vmatprep.subr.mxu0 0.0
    %1001 = vmatpush1.msra.mxu0 0.0
    %1002 = vmatprep.subr.mxu0 0.0
    %1003 = vmatpush1.msra.mxu0 0.0
    %1004 = vmatprep.subr.mxu0 0.0
    %1005 = vmatpush1.msra.mxu0 0.0
    %1006 = vmatprep.subr.mxu0 0.0
    %1007 = vmatpush1.msra.mxu0 0.0
    %1008 = vmatprep.subr.mxu0 0.0
    %1009 = vmatpush1.msra.mxu0 0.0
    %1010 = vmatprep.subr.mxu0 0.0
    %1011 = vmatpush1.msra.mxu0 0.0
    %1012 = vmatprep.subr.mxu0 0.0
    %1013 = vmatpush1.msra.mxu0 0.0
    %1014 = vmatprep.subr.mxu0 0.0
    %1015 = vmatpush1.msra.mxu0 0.0
    %1016 = vmatprep.subr.mxu0 0.0
    %1017 = vmatpush1.msra.mxu0 0.0
    %1018 = vmatprep.subr.mxu0 0.0
    %1019 = vmatpush1.msra.mxu0 0.0
    %1020 = vmatprep.subr.mxu0 0.0
    %1021 = vmatpush1.msra.mxu0 0.0
    %1022 = vmatprep.subr.mxu0 0.0
    %1023 = vmatpush1.msra.mxu0 0.0
    %1024 = vmatprep.subr.mxu0 0.0
    %1025 = vmatpush1.msra.mxu0 0.0
    %1026 = vmatprep.subr.mxu0 0.0
    %1027 = vmatpush1.msra.mxu0 0.0
    %1028 = vmatprep.subr.mxu0 0.0
    %1029 = vmatpush1.msra.mxu0 0.0
    %1030 = vmatprep.mubr.f32.mxu0 0.0
    %1031 = vmatmul.mubr.f32.gmra.mrb[0].mxu0 %v964
    %v1032 = vpop.f32.mrb[0].mxu0
    %v1033 = vadd.f32 0.0, %v1032
    %v1034 = vpop.f32.mrb[0].mxu0
    %1035 = vdwg.mxu0
    %v1036 = vsel %vm156, %v1033, 0.0
    %v1037 = vrot.slane %v1036, 4
    %v1038 = vadd.f32 %v1036, %v1037
    %v1039 = vrot.slane %v1038, 2
    %v1040 = vadd.f32 %v1038, %v1039
    %v1041 = vrot.slane %v1040, 1
    %v1042 = vadd.f32 %v1040, %v1041
    %v1043 = vmul.f32 %v1042, %v164
    %v1044 = vsub.f32 %v1033, %v1043
    %v1045 = vmul.f32 %v1044, %v1044
    %v1046 = vsel %vm156, %v1045, 0.0
    %v1047 = vrot.slane %v1046, 4
    %v1048 = vadd.f32 %v1046, %v1047
    %v1049 = vrot.slane %v1048, 2
    %v1050 = vadd.f32 %v1048, %v1049
    %v1051 = vrot.slane %v1050, 1
    %v1052 = vadd.f32 %v1050, %v1051
    %v1053 = vmul.f32 %v1052, %v164
    %v1054 = vadd.f32 %v1053, 1e-05
    %v1055 = vrsqrt.pop %v1054
    %v1056 = vmul.f32 %v1044, %v1055
    %v1057 = vmul.f32 %v1056, %v492
    %v1058 = vadd.f32 %v1057, %v501
    %v1059 = vsel %vm156, %v1058, %v808
    %v1061 = vsel %vm593, %v1059, 0
    %1063 = vmatprep.subr.mxu0 0.0
    %1064 = vmatpush1.msra.mxu0 %v54
    %1065 = vmatprep.subr.mxu0 0.0
    %1066 = vmatpush1.msra.mxu0 %v55
    %1067 = vmatprep.subr.mxu0 0.0
    %1068 = vmatpush1.msra.mxu0 %v56
    %1069 = vmatprep.subr.mxu0 0.0
    %1070 = vmatpush1.msra.mxu0 %v57
    %1071 = vmatprep.subr.mxu0 0.0
    %1072 = vmatpush1.msra.mxu0 %v58
    %1073 = vmatprep.subr.mxu0 0.0
    %1074 = vmatpush1.msra.mxu0 %v59
    %1075 = vmatprep.subr.mxu0 0.0
    %1076 = vmatpush1.msra.mxu0 %v60
    %1077 = vmatprep.subr.mxu0 0.0
    %1078 = vmatpush1.msra.mxu0 %v61
    %1079 = vmatprep.subr.mxu0 0.0
    %1080 = vmatpush1.msra.mxu0 0.0
    %1081 = vmatprep.subr.mxu0 0.0
    %1082 = vmatpush1.msra.mxu0 0.0
    %1083 = vmatprep.subr.mxu0 0.0
    %1084 = vmatpush1.msra.mxu0 0.0
    %1085 = vmatprep.subr.mxu0 0.0
    %1086 = vmatpush1.msra.mxu0 0.0
    %1087 = vmatprep.subr.mxu0 0.0
    %1088 = vmatpush1.msra.mxu0 0.0
    %1089 = vmatprep.subr.mxu0 0.0
    %1090 = vmatpush1.msra.mxu0 0.0
    %1091 = vmatprep.subr.mxu0 0.0
    %1092 = vmatpush1.msra.mxu0 0.0
    %1093 = vmatprep.subr.mxu0 0.0
    %1094 = vmatpush1.msra.mxu0 0.0
    %1095 = vmatprep.subr.mxu0 0.0
    %1096 = vmatpush1.msra.mxu0 0.0
    %1097 = vmatprep.subr.mxu0 0.0
    %1098 = vmatpush1.msra.mxu0 0.0
    %1099 = vmatprep.subr.mxu0 0.0
    %1100 = vmatpush1.msra.mxu0 0.0
    %1101 = vmatprep.subr.mxu0 0.0
    %1102 = vmatpush1.msra.mxu0 0.0
    %1103 = vmatprep.subr.mxu0 0.0
    %1104 = vmatpush1.msra.mxu0 0.0
    %1105 = vmatprep.subr.mxu0 0.0
    %1106 = vmatpush1.msra.mxu0 0.0
    %1107 = vmatprep.subr.mxu0 0.0
    %1108 = vmatpush1.msra.mxu0 0.0
    %1109 = vmatprep.subr.mxu0 0.0
    %1110 = vmatpush1.msra.mxu0 0.0
    %1111 = vmatprep.subr.mxu0 0.0
    %1112 = vmatpush1.msra.mxu0 0.0
    %1113 = vmatprep.subr.mxu0 0.0
    %1114 = vmatpush1.msra.mxu0 0.0
    %1115 = vmatprep.subr.mxu0 0.0
    %1116 = vmatpush1.msra.mxu0 0.0
    %1117 = vmatprep.subr.mxu0 0.0
    %1118 = vmatpush1.msra.mxu0 0.0
    %1119 = vmatprep.subr.mxu0 0.0
    %1120 = vmatpush1.msra.mxu0 0.0
    %1121 = vmatprep.subr.mxu0 0.0
    %1122 = vmatpush1.msra.mxu0 0.0
    %1123 = vmatprep.subr.mxu0 0.0
    %1124 = vmatpush1.msra.mxu0 0.0
    %1125 = vmatprep.subr.mxu0 0.0
    %1126 = vmatpush1.msra.mxu0 0.0
    %1127 = vmatprep.mubr.f32.mxu0 0.0
    %1128 = vmatmul.mubr.f32.gmra.mrb[0].mxu0 %v1061
    %v1129 = vpop.f32.mrb[0].mxu0
    %v1130 = vadd.f32 %v596, %v1129
    %v1131 = vpop.f32.mrb[0].mxu0
    %1132 = vdwg.mxu0
    %v1133 = vxor.u32 %v1130, 2147483648
    %v1134 = vmul.f32 %v1133, 1.442695
    %v1135 = vpow.pop %v1134
    %v1136 = vadd.f32 %v1135, 1.0
    %v1137 = vrcp.pop %v1136
    %v1138 = vmul.f32 1.0, %v1137
    %1140 = vrot.lane.b32.xlu0 %v1130, 32
    %v1141 = vpop.permute.xlu0 %1140
    %v1143 = vmul.f32 %v1138, %v1141
    %1145 = vrot.lane.b32.xlu0 %v1143, 64
    %v1146 = vpop.permute.xlu0 %1145
    %v1148 = vadd.f32 %v1130, %v1146
    %v1149 = vtanh.pop %v1148
    %v1150 = vsub.f32 1.0, %v1138
    %1152 = vrot.lane.b32.xlu0 %v1149, 96
    %v1153 = vpop.permute.xlu0 %1152
    %v1155 = vmul.f32 %v1150, %v1153
    %v1156 = vmul.f32 %v1138, %v808
    %v1157 = vadd.f32 %v1155, %v1156
    %v1158 = vmul.f32 %v1157, 0.2
    %v1159 = vmax.f32 %v1157, %v1158
    %v1160 = vsel %vm811, %v1159, 0.0
    %v1161 = vrot.slane %v1160, 4
    %v1162 = vadd.f32 %v1160, %v1161
    %v1163 = vrot.slane %v1162, 2
    %v1164 = vadd.f32 %v1162, %v1163
    %v1165 = vrot.slane %v1164, 1
    %v1166 = vadd.f32 %v1164, %v1165
    %v1167 = vmul.f32 %v1166, %v164
    %v1168 = vsub.f32 %v1159, %v1167
    %v1169 = vmul.f32 %v1168, %v1168
    %v1170 = vsel %vm811, %v1169, 0.0
    %v1171 = vrot.slane %v1170, 4
    %v1172 = vadd.f32 %v1170, %v1171
    %v1173 = vrot.slane %v1172, 2
    %v1174 = vadd.f32 %v1172, %v1173
    %v1175 = vrot.slane %v1174, 1
    %v1176 = vadd.f32 %v1174, %v1175
    %v1177 = vmul.f32 %v1176, %v164
    %v1178 = vadd.f32 %v1177, 1e-05
    %v1179 = vrsqrt.pop %v1178
    %v1180 = vmul.f32 %v1168, %v1179
    %v1181 = vmul.f32 %v1180, %v839
    %v1182 = vadd.f32 %v1181, %v848
    %1184 = vrot.lane.b32.xlu0 %v1182, 96
    %v1185 = vpop.permute.xlu0 %1184
    %v1186 = vsel %vm156, %v1185, 0
    %1188 = vmatprep.subr.mxu0 0.0
    %1189 = vmatpush1.msra.mxu0 %v598
    %1190 = vmatprep.subr.mxu0 0.0
    %1191 = vmatpush1.msra.mxu0 %v599
    %1192 = vmatprep.subr.mxu0 0.0
    %1193 = vmatpush1.msra.mxu0 %v600
    %1194 = vmatprep.subr.mxu0 0.0
    %1195 = vmatpush1.msra.mxu0 %v601
    %1196 = vmatprep.subr.mxu0 0.0
    %1197 = vmatpush1.msra.mxu0 0.0
    %1198 = vmatprep.subr.mxu0 0.0
    %1199 = vmatpush1.msra.mxu0 0.0
    %1200 = vmatprep.subr.mxu0 0.0
    %1201 = vmatpush1.msra.mxu0 0.0
    %1202 = vmatprep.subr.mxu0 0.0
    %1203 = vmatpush1.msra.mxu0 0.0
    %1204 = vmatprep.subr.mxu0 0.0
    %1205 = vmatpush1.msra.mxu0 0.0
    %1206 = vmatprep.subr.mxu0 0.0
    %1207 = vmatpush1.msra.mxu0 0.0
    %1208 = vmatprep.subr.mxu0 0.0
    %1209 = vmatpush1.msra.mxu0 0.0
    %1210 = vmatprep.subr.mxu0 0.0
    %1211 = vmatpush1.msra.mxu0 0.0
    %1212 = vmatprep.subr.mxu0 0.0
    %1213 = vmatpush1.msra.mxu0 0.0
    %1214 = vmatprep.subr.mxu0 0.0
    %1215 = vmatpush1.msra.mxu0 0.0
    %1216 = vmatprep.subr.mxu0 0.0
    %1217 = vmatpush1.msra.mxu0 0.0
    %1218 = vmatprep.subr.mxu0 0.0
    %1219 = vmatpush1.msra.mxu0 0.0
    %1220 = vmatprep.subr.mxu0 0.0
    %1221 = vmatpush1.msra.mxu0 0.0
    %1222 = vmatprep.subr.mxu0 0.0
    %1223 = vmatpush1.msra.mxu0 0.0
    %1224 = vmatprep.subr.mxu0 0.0
    %1225 = vmatpush1.msra.mxu0 0.0
    %1226 = vmatprep.subr.mxu0 0.0
    %1227 = vmatpush1.msra.mxu0 0.0
    %1228 = vmatprep.subr.mxu0 0.0
    %1229 = vmatpush1.msra.mxu0 0.0
    %1230 = vmatprep.subr.mxu0 0.0
    %1231 = vmatpush1.msra.mxu0 0.0
    %1232 = vmatprep.subr.mxu0 0.0
    %1233 = vmatpush1.msra.mxu0 0.0
    %1234 = vmatprep.subr.mxu0 0.0
    %1235 = vmatpush1.msra.mxu0 0.0
    %1236 = vmatprep.subr.mxu0 0.0
    %1237 = vmatpush1.msra.mxu0 0.0
    %1238 = vmatprep.subr.mxu0 0.0
    %1239 = vmatpush1.msra.mxu0 0.0
    %1240 = vmatprep.subr.mxu0 0.0
    %1241 = vmatpush1.msra.mxu0 0.0
    %1242 = vmatprep.subr.mxu0 0.0
    %1243 = vmatpush1.msra.mxu0 0.0
    %1244 = vmatprep.subr.mxu0 0.0
    %1245 = vmatpush1.msra.mxu0 0.0
    %1246 = vmatprep.subr.mxu0 0.0
    %1247 = vmatpush1.msra.mxu0 0.0
    %1248 = vmatprep.subr.mxu0 0.0
    %1249 = vmatpush1.msra.mxu0 0.0
    %1250 = vmatprep.subr.mxu0 0.0
    %1251 = vmatpush1.msra.mxu0 0.0
    %1252 = vmatprep.mubr.f32.mxu0 0.0
    %1253 = vmatmul.mubr.f32.gmra.mrb[0].mxu0 %v1186
    %v1254 = vpop.f32.mrb[0].mxu0
    %v1255 = vadd.f32 %v854, %v1254
    %v1256 = vpop.f32.mrb[0].mxu0
    %1257 = vdwg.mxu0
    %1259 = vrot.lane.b32.xlu0 %v604, 112
    %v1260 = vpop.permute.xlu0 %1259
    %v1262 = vadd.f32 %v1255, %v1260
    %v1263 = vsel %vm80, %v1262, -inf
    %1264 = vmax.xlane.f32.xlu0 %v1263
    %v1265 = vpop.xlane.xlu0 %1264
    %v1266 = vsub.f32 %v1262, %v1265
    %v1267 = vmul.f32 %v1266, 1.442695
    %v1268 = vpow.pop %v1267
    %v1269 = vsel %vm80, %v1268, 0.0
    %1270 = vadd.xlane.f32.xlu0 %v1269
    %v1271 = vpop.xlane.xlu0 %1270
    %v1272 = vrcp.pop %v1271
    %v1273 = vmul.f32 %v1268, %v1272
    %1275 = vrot.lane.b32.xlu0 %v1273, 16
    %v1276 = vpop.permute.xlu0 %1275
    %vm1278 = vcmask 261248
    %1279 = vst.msk [vmem:[%s5] sm:$0xff] %vm1278, %v1276
    %vm1280 = vcmp.eq.f32.partialorder %v1262, %v1265
    %v1281 = vsel %vm1280, %v606, 16
    %v1282 = vsel %vm80, %v1281, 2147483647
    %v1283 = vand.u32 %v1282, 65535
    %v1284 = vshra.s32 %v1282, 16
    %v1285 = vcvt.s32.f32 %v1283
    %v1286 = vcvt.s32.f32 %v1284
    %1287 = vmin.xlane.f32.xlu0 %v1286
    %v1288 = vpop.xlane.xlu0 %1287
    %vm1289 = vcmp.eq.f32.partialorder %v1286, %v1288
    %v1290 = vsel %vm1289, %v1285, inf
    %1291 = vmin.xlane.f32.xlu0 %v1290
    %v1292 = vpop.xlane.xlu0 %1291
    %v1293 = vcvt.f32.s32 %v1292
    %v1294 = vcvt.f32.s32 %v1288
    %v1295 = vshll.u32 %v1294, 16
    %v1296 = vadd.s32 %v1295, %v1293
    %vm1297 = vcmp.eq.s32.totalorder %v606, %v1296
    %v1298 = vsel %vm1297, 1, 0
    %v1299 = vcvt.s32.f32 %v1298
    %v1301 = vsel %vm80, %v1299, 0
    %1303 = vmatprep.subr.mxu0 0.0
    %1304 = vmatpush1.msra.mxu0 %v44
    %1305 = vmatprep.subr.mxu0 0.0
    %1306 = vmatpush1.msra.mxu0 %v45
    %1307 = vmatprep.subr.mxu0 0.0
    %1308 = vmatpush1.msra.mxu0 0.0
    %1309 = vmatprep.subr.mxu0 0.0
    %1310 = vmatpush1.msra.mxu0 0.0
    %1311 = vmatprep.subr.mxu0 0.0
    %1312 = vmatpush1.msra.mxu0 0.0
    %1313 = vmatprep.subr.mxu0 0.0
    %1314 = vmatpush1.msra.mxu0 0.0
    %1315 = vmatprep.subr.mxu0 0.0
    %1316 = vmatpush1.msra.mxu0 0.0
    %1317 = vmatprep.subr.mxu0 0.0
    %1318 = vmatpush1.msra.mxu0 0.0
    %1319 = vmatprep.subr.mxu0 0.0
    %1320 = vmatpush1.msra.mxu0 0.0
    %1321 = vmatprep.subr.mxu0 0.0
    %1322 = vmatpush1.msra.mxu0 0.0
    %1323 = vmatprep.subr.mxu0 0.0
    %1324 = vmatpush1.msra.mxu0 0.0
    %1325 = vmatprep.subr.mxu0 0.0
    %1326 = vmatpush1.msra.mxu0 0.0
    %1327 = vmatprep.subr.mxu0 0.0
    %1328 = vmatpush1.msra.mxu0 0.0
    %1329 = vmatprep.subr.mxu0 0.0
    %1330 = vmatpush1.msra.mxu0 0.0
    %1331 = vmatprep.subr.mxu0 0.0
    %1332 = vmatpush1.msra.mxu0 0.0
    %1333 = vmatprep.subr.mxu0 0.0
    %1334 = vmatpush1.msra.mxu0 0.0
    %1335 = vmatprep.subr.mxu0 0.0
    %1336 = vmatpush1.msra.mxu0 0.0
    %1337 = vmatprep.subr.mxu0 0.0
    %1338 = vmatpush1.msra.mxu0 0.0
    %1339 = vmatprep.subr.mxu0 0.0
    %1340 = vmatpush1.msra.mxu0 0.0
    %1341 = vmatprep.subr.mxu0 0.0
    %1342 = vmatpush1.msra.mxu0 0.0
    %1343 = vmatprep.subr.mxu0 0.0
    %1344 = vmatpush1.msra.mxu0 0.0
    %1345 = vmatprep.subr.mxu0 0.0
    %1346 = vmatpush1.msra.mxu0 0.0
    %1347 = vmatprep.subr.mxu0 0.0
    %1348 = vmatpush1.msra.mxu0 0.0
    %1349 = vmatprep.subr.mxu0 0.0
    %1350 = vmatpush1.msra.mxu0 0.0
    %1351 = vmatprep.subr.mxu0 0.0
    %1352 = vmatpush1.msra.mxu0 0.0
    %1353 = vmatprep.subr.mxu0 0.0
    %1354 = vmatpush1.msra.mxu0 0.0
    %1355 = vmatprep.subr.mxu0 0.0
    %1356 = vmatpush1.msra.mxu0 0.0
    %1357 = vmatprep.subr.mxu0 0.0
    %1358 = vmatpush1.msra.mxu0 0.0
    %1359 = vmatprep.subr.mxu0 0.0
    %1360 = vmatpush1.msra.mxu0 0.0
    %1361 = vmatprep.subr.mxu0 0.0
    %1362 = vmatpush1.msra.mxu0 0.0
    %1363 = vmatprep.subr.mxu0 0.0
    %1364 = vmatpush1.msra.mxu0 0.0
    %1365 = vmatprep.subr.mxu0 0.0
    %1366 = vmatpush1.msra.mxu0 0.0
    %1367 = vmatprep.mubr.f32.mxu0 0.0
    %1368 = vmatmul.mubr.f32.gmra.mrb[0].mxu0 %v1301
    %v1369 = vpop.f32.mrb[0].mxu0
    %v1370 = vadd.f32 0.0, %v1369
    %v1371 = vpop.f32.mrb[0].mxu0
    %1372 = vdwg.mxu0
    %v1373 = vsel %vm156, %v1370, 0.0
    %v1374 = vrot.slane %v1373, 4
    %v1375 = vadd.f32 %v1373, %v1374
    %v1376 = vrot.slane %v1375, 2
    %v1377 = vadd.f32 %v1375, %v1376
    %v1378 = vrot.slane %v1377, 1
    %v1379 = vadd.f32 %v1377, %v1378
    %v1380 = vmul.f32 %v1379, %v164
    %v1381 = vsub.f32 %v1370, %v1380
    %v1382 = vmul.f32 %v1381, %v1381
    %v1383 = vsel %vm156, %v1382, 0.0
    %v1384 = vrot.slane %v1383, 4
    %v1385 = vadd.f32 %v1383, %v1384
    %v1386 = vrot.slane %v1385, 2
    %v1387 = vadd.f32 %v1385, %v1386
    %v1388 = vrot.slane %v1387, 1
    %v1389 = vadd.f32 %v1387, %v1388
    %v1390 = vmul.f32 %v1389, %v164
    %v1391 = vadd.f32 %v1390, 1e-05
    %v1392 = vrsqrt.pop %v1391
    %v1393 = vmul.f32 %v1381, %v1392
    %v1394 = vmul.f32 %v1393, %v492
    %v1395 = vadd.f32 %v1394, %v501
    %v1396 = vsel %vm156, %v1395, %v1157
    %v1398 = vsel %vm593, %v1396, 0
    %1400 = vmatprep.subr.mxu0 0.0
    %1401 = vmatpush1.msra.mxu0 %v54
    %1402 = vmatprep.subr.mxu0 0.0
    %1403 = vmatpush1.msra.mxu0 %v55
    %1404 = vmatprep.subr.mxu0 0.0
    %1405 = vmatpush1.msra.mxu0 %v56
    %1406 = vmatprep.subr.mxu0 0.0
    %1407 = vmatpush1.msra.mxu0 %v57
    %1408 = vmatprep.subr.mxu0 0.0
    %1409 = vmatpush1.msra.mxu0 %v58
    %1410 = vmatprep.subr.mxu0 0.0
    %1411 = vmatpush1.msra.mxu0 %v59
    %1412 = vmatprep.subr.mxu0 0.0
    %1413 = vmatpush1.msra.mxu0 %v60
    %1414 = vmatprep.subr.mxu0 0.0
    %1415 = vmatpush1.msra.mxu0 %v61
    %1416 = vmatprep.subr.mxu0 0.0
    %1417 = vmatpush1.msra.mxu0 0.0
    %1418 = vmatprep.subr.mxu0 0.0
    %1419 = vmatpush1.msra.mxu0 0.0
    %1420 = vmatprep.subr.mxu0 0.0
    %1421 = vmatpush1.msra.mxu0 0.0
    %1422 = vmatprep.subr.mxu0 0.0
    %1423 = vmatpush1.msra.mxu0 0.0
    %1424 = vmatprep.subr.mxu0 0.0
    %1425 = vmatpush1.msra.mxu0 0.0
    %1426 = vmatprep.subr.mxu0 0.0
    %1427 = vmatpush1.msra.mxu0 0.0
    %1428 = vmatprep.subr.mxu0 0.0
    %1429 = vmatpush1.msra.mxu0 0.0
    %1430 = vmatprep.subr.mxu0 0.0
    %1431 = vmatpush1.msra.mxu0 0.0
    %1432 = vmatprep.subr.mxu0 0.0
    %1433 = vmatpush1.msra.mxu0 0.0
    %1434 = vmatprep.subr.mxu0 0.0
    %1435 = vmatpush1.msra.mxu0 0.0
    %1436 = vmatprep.subr.mxu0 0.0
    %1437 = vmatpush1.msra.mxu0 0.0
    %1438 = vmatprep.subr.mxu0 0.0
    %1439 = vmatpush1.msra.mxu0 0.0
    %1440 = vmatprep.subr.mxu0 0.0
    %1441 = vmatpush1.msra.mxu0 0.0
    %1442 = vmatprep.subr.mxu0 0.0
    %1443 = vmatpush1.msra.mxu0 0.0
    %1444 = vmatprep.subr.mxu0 0.0
    %1445 = vmatpush1.msra.mxu0 0.0
    %1446 = vmatprep.subr.mxu0 0.0
    %1447 = vmatpush1.msra.mxu0 0.0
    %1448 = vmatprep.subr.mxu0 0.0
    %1449 = vmatpush1.msra.mxu0 0.0
    %1450 = vmatprep.subr.mxu0 0.0
    %1451 = vmatpush1.msra.mxu0 0.0
    %1452 = vmatprep.subr.mxu0 0.0
    %1453 = vmatpush1.msra.mxu0 0.0
    %1454 = vmatprep.subr.mxu0 0.0
    %1455 = vmatpush1.msra.mxu0 0.0
    %1456 = vmatprep.subr.mxu0 0.0
    %1457 = vmatpush1.msra.mxu0 0.0
    %1458 = vmatprep.subr.mxu0 0.0
    %1459 = vmatpush1.msra.mxu0 0.0
    %1460 = vmatprep.subr.mxu0 0.0
    %1461 = vmatpush1.msra.mxu0 0.0
    %1462 = vmatprep.subr.mxu0 0.0
    %1463 = vmatpush1.msra.mxu0 0.0
    %1464 = vmatprep.mubr.f32.mxu0 0.0
    %1465 = vmatmul.mubr.f32.gmra.mrb[0].mxu0 %v1398
    %v1466 = vpop.f32.mrb[0].mxu0
    %v1467 = vadd.f32 %v596, %v1466
    %v1468 = vpop.f32.mrb[0].mxu0
    %1469 = vdwg.mxu0
    %v1470 = vxor.u32 %v1467, 2147483648
    %v1471 = vmul.f32 %v1470, 1.442695
    %v1472 = vpow.pop %v1471
    %v1473 = vadd.f32 %v1472, 1.0
    %v1474 = vrcp.pop %v1473
    %v1475 = vmul.f32 1.0, %v1474
    %1477 = vrot.lane.b32.xlu0 %v1467, 32
    %v1478 = vpop.permute.xlu0 %1477
    %v1480 = vmul.f32 %v1475, %v1478
    %1482 = vrot.lane.b32.xlu0 %v1480, 64
    %v1483 = vpop.permute.xlu0 %1482
    %v1485 = vadd.f32 %v1467, %v1483
    %v1486 = vtanh.pop %v1485
    %v1487 = vsub.f32 1.0, %v1475
    %1489 = vrot.lane.b32.xlu0 %v1486, 96
    %v1490 = vpop.permute.xlu0 %1489
    %v1492 = vmul.f32 %v1487, %v1490
    %v1493 = vmul.f32 %v1475, %v1157
    %v1494 = vadd.f32 %v1492, %v1493
    %v1495 = vmul.f32 %v1494, 0.2
    %v1496 = vmax.f32 %v1494, %v1495
    %v1497 = vsel %vm811, %v1496, 0.0
    %v1498 = vrot.slane %v1497, 4
    %v1499 = vadd.f32 %v1497, %v1498
    %v1500 = vrot.slane %v1499, 2
    %v1501 = vadd.f32 %v1499, %v1500
    %v1502 = vrot.slane %v1501, 1
    %v1503 = vadd.f32 %v1501, %v1502
    %v1504 = vmul.f32 %v1503, %v164
    %v1505 = vsub.f32 %v1496, %v1504
    %v1506 = vmul.f32 %v1505, %v1505
    %v1507 = vsel %vm811, %v1506, 0.0
    %v1508 = vrot.slane %v1507, 4
    %v1509 = vadd.f32 %v1507, %v1508
    %v1510 = vrot.slane %v1509, 2
    %v1511 = vadd.f32 %v1509, %v1510
    %v1512 = vrot.slane %v1511, 1
    %v1513 = vadd.f32 %v1511, %v1512
    %v1514 = vmul.f32 %v1513, %v164
    %v1515 = vadd.f32 %v1514, 1e-05
    %v1516 = vrsqrt.pop %v1515
    %v1517 = vmul.f32 %v1505, %v1516
    %v1518 = vmul.f32 %v1517, %v839
    %v1519 = vadd.f32 %v1518, %v848
    %1521 = vrot.lane.b32.xlu0 %v1519, 96
    %v1522 = vpop.permute.xlu0 %1521
    %v1523 = vsel %vm156, %v1522, 0
    %1525 = vmatprep.subr.mxu0 0.0
    %1526 = vmatpush1.msra.mxu0 %v598
    %1527 = vmatprep.subr.mxu0 0.0
    %1528 = vmatpush1.msra.mxu0 %v599
    %1529 = vmatprep.subr.mxu0 0.0
    %1530 = vmatpush1.msra.mxu0 %v600
    %1531 = vmatprep.subr.mxu0 0.0
    %1532 = vmatpush1.msra.mxu0 %v601
    %1533 = vmatprep.subr.mxu0 0.0
    %1534 = vmatpush1.msra.mxu0 0.0
    %1535 = vmatprep.subr.mxu0 0.0
    %1536 = vmatpush1.msra.mxu0 0.0
    %1537 = vmatprep.subr.mxu0 0.0
    %1538 = vmatpush1.msra.mxu0 0.0
    %1539 = vmatprep.subr.mxu0 0.0
    %1540 = vmatpush1.msra.mxu0 0.0
    %1541 = vmatprep.subr.mxu0 0.0
    %1542 = vmatpush1.msra.mxu0 0.0
    %1543 = vmatprep.subr.mxu0 0.0
    %1544 = vmatpush1.msra.mxu0 0.0
    %1545 = vmatprep.subr.mxu0 0.0
    %1546 = vmatpush1.msra.mxu0 0.0
    %1547 = vmatprep.subr.mxu0 0.0
    %1548 = vmatpush1.msra.mxu0 0.0
    %1549 = vmatprep.subr.mxu0 0.0
    %1550 = vmatpush1.msra.mxu0 0.0
    %1551 = vmatprep.subr.mxu0 0.0
    %1552 = vmatpush1.msra.mxu0 0.0
    %1553 = vmatprep.subr.mxu0 0.0
    %1554 = vmatpush1.msra.mxu0 0.0
    %1555 = vmatprep.subr.mxu0 0.0
    %1556 = vmatpush1.msra.mxu0 0.0
    %1557 = vmatprep.subr.mxu0 0.0
    %1558 = vmatpush1.msra.mxu0 0.0
    %1559 = vmatprep.subr.mxu0 0.0
    %1560 = vmatpush1.msra.mxu0 0.0
    %1561 = vmatprep.subr.mxu0 0.0
    %1562 = vmatpush1.msra.mxu0 0.0
    %1563 = vmatprep.subr.mxu0 0.0
    %1564 = vmatpush1.msra.mxu0 0.0
    %1565 = vmatprep.subr.mxu0 0.0
    %1566 = vmatpush1.msra.mxu0 0.0
    %1567 = vmatprep.subr.mxu0 0.0
    %1568 = vmatpush1.msra.mxu0 0.0
    %1569 = vmatprep.subr.mxu0 0.0
    %1570 = vmatpush1.msra.mxu0 0.0
    %1571 = vmatprep.subr.mxu0 0.0
    %1572 = vmatpush1.msra.mxu0 0.0
    %1573 = vmatprep.subr.mxu0 0.0
    %1574 = vmatpush1.msra.mxu0 0.0
    %1575 = vmatprep.subr.mxu0 0.0
    %1576 = vmatpush1.msra.mxu0 0.0
    %1577 = vmatprep.subr.mxu0 0.0
    %1578 = vmatpush1.msra.mxu0 0.0
    %1579 = vmatprep.subr.mxu0 0.0
    %1580 = vmatpush1.msra.mxu0 0.0
    %1581 = vmatprep.subr.mxu0 0.0
    %1582 = vmatpush1.msra.mxu0 0.0
    %1583 = vmatprep.subr.mxu0 0.0
    %1584 = vmatpush1.msra.mxu0 0.0
    %1585 = vmatprep.subr.mxu0 0.0
    %1586 = vmatpush1.msra.mxu0 0.0
    %1587 = vmatprep.subr.mxu0 0.0
    %1588 = vmatpush1.msra.mxu0 0.0
    %1589 = vmatprep.mubr.f32.mxu0 0.0
    %1590 = vmatmul.mubr.f32.gmra.mrb[0].mxu0 %v1523
    %v1591 = vpop.f32.mrb[0].mxu0
    %v1592 = vadd.f32 %v854, %v1591
    %v1593 = vpop.f32.mrb[0].mxu0
    %1594 = vdwg.mxu0
    %1595 = vrot.lane.b32.xlu0 %v604, 96
    %v1596 = vpop.permute.xlu0 %1595
    %v1598 = vadd.f32 %v1592, %v1596
    %v1599 = vsel %vm80, %v1598, -inf
    %1600 = vmax.xlane.f32.xlu0 %v1599
    %v1601 = vpop.xlane.xlu0 %1600
    %v1602 = vsub.f32 %v1598, %v1601
    %v1603 = vmul.f32 %v1602, 1.442695
    %v1604 = vpow.pop %v1603
    %v1605 = vsel %vm80, %v1604, 0.0
    %1606 = vadd.xlane.f32.xlu0 %v1605
    %v1607 = vpop.xlane.xlu0 %1606
    %v1608 = vrcp.pop %v1607
    %v1609 = vmul.f32 %v1604, %v1608
    %1611 = vrot.lane.b32.xlu0 %v1609, 32
    %v1612 = vpop.permute.xlu0 %1611
    %vm1614 = vcmask 392448
    %1615 = vst.msk [vmem:[%s5] sm:$0xff] %vm1614, %v1612
    %vm1616 = vcmp.eq.f32.partialorder %v1598, %v1601
    %v1617 = vsel %vm1616, %v606, 16
    %v1618 = vsel %vm80, %v1617, 2147483647
    %v1619 = vand.u32 %v1618, 65535
    %v1620 = vshra.s32 %v1618, 16
    %v1621 = vcvt.s32.f32 %v1619
    %v1622 = vcvt.s32.f32 %v1620
    %1623 = vmin.xlane.f32.xlu0 %v1622
    %v1624 = vpop.xlane.xlu0 %1623
    %vm1625 = vcmp.eq.f32.partialorder %v1622, %v1624
    %v1626 = vsel %vm1625, %v1621, inf
    %1627 = vmin.xlane.f32.xlu0 %v1626
    %v1628 = vpop.xlane.xlu0 %1627
    %v1629 = vcvt.f32.s32 %v1628
    %v1630 = vcvt.f32.s32 %v1624
    %v1631 = vshll.u32 %v1630, 16
    %v1632 = vadd.s32 %v1631, %v1629
    %vm1633 = vcmp.eq.s32.totalorder %v606, %v1632
    %v1634 = vsel %vm1633, 1, 0
    %v1635 = vcvt.s32.f32 %v1634
    %v1637 = vsel %vm80, %v1635, 0
    %1639 = vmatprep.subr.mxu0 0.0
    %1640 = vmatpush1.msra.mxu0 %v44
    %1641 = vmatprep.subr.mxu0 0.0
    %1642 = vmatpush1.msra.mxu0 %v45
    %1643 = vmatprep.subr.mxu0 0.0
    %1644 = vmatpush1.msra.mxu0 0.0
    %1645 = vmatprep.subr.mxu0 0.0
    %1646 = vmatpush1.msra.mxu0 0.0
    %1647 = vmatprep.subr.mxu0 0.0
    %1648 = vmatpush1.msra.mxu0 0.0
    %1649 = vmatprep.subr.mxu0 0.0
    %1650 = vmatpush1.msra.mxu0 0.0
    %1651 = vmatprep.subr.mxu0 0.0
    %1652 = vmatpush1.msra.mxu0 0.0
    %1653 = vmatprep.subr.mxu0 0.0
    %1654 = vmatpush1.msra.mxu0 0.0
    %1655 = vmatprep.subr.mxu0 0.0
    %1656 = vmatpush1.msra.mxu0 0.0
    %1657 = vmatprep.subr.mxu0 0.0
    %1658 = vmatpush1.msra.mxu0 0.0
    %1659 = vmatprep.subr.mxu0 0.0
    %1660 = vmatpush1.msra.mxu0 0.0
    %1661 = vmatprep.subr.mxu0 0.0
    %1662 = vmatpush1.msra.mxu0 0.0
    %1663 = vmatprep.subr.mxu0 0.0
    %1664 = vmatpush1.msra.mxu0 0.0
    %1665 = vmatprep.subr.mxu0 0.0
    %1666 = vmatpush1.msra.mxu0 0.0
    %1667 = vmatprep.subr.mxu0 0.0
    %1668 = vmatpush1.msra.mxu0 0.0
    %1669 = vmatprep.subr.mxu0 0.0
    %1670 = vmatpush1.msra.mxu0 0.0
    %1671 = vmatprep.subr.mxu0 0.0
    %1672 = vmatpush1.msra.mxu0 0.0
    %1673 = vmatprep.subr.mxu0 0.0
    %1674 = vmatpush1.msra.mxu0 0.0
    %1675 = vmatprep.subr.mxu0 0.0
    %1676 = vmatpush1.msra.mxu0 0.0
    %1677 = vmatprep.subr.mxu0 0.0
    %1678 = vmatpush1.msra.mxu0 0.0
    %1679 = vmatprep.subr.mxu0 0.0
    %1680 = vmatpush1.msra.mxu0 0.0
    %1681 = vmatprep.subr.mxu0 0.0
    %1682 = vmatpush1.msra.mxu0 0.0
    %1683 = vmatprep.subr.mxu0 0.0
    %1684 = vmatpush1.msra.mxu0 0.0
    %1685 = vmatprep.subr.mxu0 0.0
    %1686 = vmatpush1.msra.mxu0 0.0
    %1687 = vmatprep.subr.mxu0 0.0
    %1688 = vmatpush1.msra.mxu0 0.0
    %1689 = vmatprep.subr.mxu0 0.0
    %1690 = vmatpush1.msra.mxu0 0.0
    %1691 = vmatprep.subr.mxu0 0.0
    %1692 = vmatpush1.msra.mxu0 0.0
    %1693 = vmatprep.subr.mxu0 0.0
    %1694 = vmatpush1.msra.mxu0 0.0
    %1695 = vmatprep.subr.mxu0 0.0
    %1696 = vmatpush1.msra.mxu0 0.0
    %1697 = vmatprep.subr.mxu0 0.0
    %1698 = vmatpush1.msra.mxu0 0.0
    %1699 = vmatprep.subr.mxu0 0.0
    %1700 = vmatpush1.msra.mxu0 0.0
    %1701 = vmatprep.subr.mxu0 0.0
    %1702 = vmatpush1.msra.mxu0 0.0
    %1703 = vmatprep.mubr.f32.mxu0 0.0
    %1704 = vmatmul.mubr.f32.gmra.mrb[0].mxu0 %v1637
    %v1705 = vpop.f32.mrb[0].mxu0
    %v1706 = vadd.f32 0.0, %v1705
    %v1707 = vpop.f32.mrb[0].mxu0
    %1708 = vdwg.mxu0
    %v1709 = vsel %vm156, %v1706, 0.0
    %v1710 = vrot.slane %v1709, 4
    %v1711 = vadd.f32 %v1709, %v1710
    %v1712 = vrot.slane %v1711, 2
    %v1713 = vadd.f32 %v1711, %v1712
    %v1714 = vrot.slane %v1713, 1
    %v1715 = vadd.f32 %v1713, %v1714
    %v1716 = vmul.f32 %v1715, %v164
    %v1717 = vsub.f32 %v1706, %v1716
    %v1718 = vmul.f32 %v1717, %v1717
    %v1719 = vsel %vm156, %v1718, 0.0
    %v1720 = vrot.slane %v1719, 4
    %v1721 = vadd.f32 %v1719, %v1720
    %v1722 = vrot.slane %v1721, 2
    %v1723 = vadd.f32 %v1721, %v1722
    %v1724 = vrot.slane %v1723, 1
    %v1725 = vadd.f32 %v1723, %v1724
    %v1726 = vmul.f32 %v1725, %v164
    %v1727 = vadd.f32 %v1726, 1e-05
    %v1728 = vrsqrt.pop %v1727
    %v1729 = vmul.f32 %v1717, %v1728
    %v1730 = vmul.f32 %v1729, %v492
    %v1731 = vadd.f32 %v1730, %v501
    %v1732 = vsel %vm156, %v1731, %v1494
    %v1734 = vsel %vm593, %v1732, 0
    %1736 = vmatprep.subr.mxu0 0.0
    %1737 = vmatpush1.msra.mxu0 %v54
    %1738 = vmatprep.subr.mxu0 0.0
    %1739 = vmatpush1.msra.mxu0 %v55
    %1740 = vmatprep.subr.mxu0 0.0
    %1741 = vmatpush1.msra.mxu0 %v56
    %1742 = vmatprep.subr.mxu0 0.0
    %1743 = vmatpush1.msra.mxu0 %v57
    %1744 = vmatprep.subr.mxu0 0.0
    %1745 = vmatpush1.msra.mxu0 %v58
    %1746 = vmatprep.subr.mxu0 0.0
    %1747 = vmatpush1.msra.mxu0 %v59
    %1748 = vmatprep.subr.mxu0 0.0
    %1749 = vmatpush1.msra.mxu0 %v60
    %1750 = vmatprep.subr.mxu0 0.0
    %1751 = vmatpush1.msra.mxu0 %v61
    %1752 = vmatprep.subr.mxu0 0.0
    %1753 = vmatpush1.msra.mxu0 0.0
    %1754 = vmatprep.subr.mxu0 0.0
    %1755 = vmatpush1.msra.mxu0 0.0
    %1756 = vmatprep.subr.mxu0 0.0
    %1757 = vmatpush1.msra.mxu0 0.0
    %1758 = vmatprep.subr.mxu0 0.0
    %1759 = vmatpush1.msra.mxu0 0.0
    %1760 = vmatprep.subr.mxu0 0.0
    %1761 = vmatpush1.msra.mxu0 0.0
    %1762 = vmatprep.subr.mxu0 0.0
    %1763 = vmatpush1.msra.mxu0 0.0
    %1764 = vmatprep.subr.mxu0 0.0
    %1765 = vmatpush1.msra.mxu0 0.0
    %1766 = vmatprep.subr.mxu0 0.0
    %1767 = vmatpush1.msra.mxu0 0.0
    %1768 = vmatprep.subr.mxu0 0.0
    %1769 = vmatpush1.msra.mxu0 0.0
    %1770 = vmatprep.subr.mxu0 0.0
    %1771 = vmatpush1.msra.mxu0 0.0
    %1772 = vmatprep.subr.mxu0 0.0
    %1773 = vmatpush1.msra.mxu0 0.0
    %1774 = vmatprep.subr.mxu0 0.0
    %1775 = vmatpush1.msra.mxu0 0.0
    %1776 = vmatprep.subr.mxu0 0.0
    %1777 = vmatpush1.msra.mxu0 0.0
    %1778 = vmatprep.subr.mxu0 0.0
    %1779 = vmatpush1.msra.mxu0 0.0
    %1780 = vmatprep.subr.mxu0 0.0
    %1781 = vmatpush1.msra.mxu0 0.0
    %1782 = vmatprep.subr.mxu0 0.0
    %1783 = vmatpush1.msra.mxu0 0.0
    %1784 = vmatprep.subr.mxu0 0.0
    %1785 = vmatpush1.msra.mxu0 0.0
    %1786 = vmatprep.subr.mxu0 0.0
    %1787 = vmatpush1.msra.mxu0 0.0
    %1788 = vmatprep.subr.mxu0 0.0
    %1789 = vmatpush1.msra.mxu0 0.0
    %1790 = vmatprep.subr.mxu0 0.0
    %1791 = vmatpush1.msra.mxu0 0.0
    %1792 = vmatprep.subr.mxu0 0.0
    %1793 = vmatpush1.msra.mxu0 0.0
    %1794 = vmatprep.subr.mxu0 0.0
    %1795 = vmatpush1.msra.mxu0 0.0
    %1796 = vmatprep.subr.mxu0 0.0
    %1797 = vmatpush1.msra.mxu0 0.0
    %1798 = vmatprep.subr.mxu0 0.0
    %1799 = vmatpush1.msra.mxu0 0.0
    %1800 = vmatprep.mubr.f32.mxu0 0.0
    %1801 = vmatmul.mubr.f32.gmra.mrb[0].mxu0 %v1734
    %v1802 = vpop.f32.mrb[0].mxu0
    %v1803 = vadd.f32 %v596, %v1802
    %v1804 = vpop.f32.mrb[0].mxu0
    %1805 = vdwg.mxu0
    %v1806 = vxor.u32 %v1803, 2147483648
    %v1807 = vmul.f32 %v1806, 1.442695
    %v1808 = vpow.pop %v1807
    %v1809 = vadd.f32 %v1808, 1.0
    %v1810 = vrcp.pop %v1809
    %v1811 = vmul.f32 1.0, %v1810
    %1813 = vrot.lane.b32.xlu0 %v1803, 32
    %v1814 = vpop.permute.xlu0 %1813
    %v1816 = vmul.f32 %v1811, %v1814
    %1818 = vrot.lane.b32.xlu0 %v1816, 64
    %v1819 = vpop.permute.xlu0 %1818
    %v1821 = vadd.f32 %v1803, %v1819
    %v1822 = vtanh.pop %v1821
    %v1823 = vsub.f32 1.0, %v1811
    %1825 = vrot.lane.b32.xlu0 %v1822, 96
    %v1826 = vpop.permute.xlu0 %1825
    %v1828 = vmul.f32 %v1823, %v1826
    %v1829 = vmul.f32 %v1811, %v1494
    %v1830 = vadd.f32 %v1828, %v1829
    %v1831 = vmul.f32 %v1830, 0.2
    %v1832 = vmax.f32 %v1830, %v1831
    %v1833 = vsel %vm811, %v1832, 0.0
    %v1834 = vrot.slane %v1833, 4
    %v1835 = vadd.f32 %v1833, %v1834
    %v1836 = vrot.slane %v1835, 2
    %v1837 = vadd.f32 %v1835, %v1836
    %v1838 = vrot.slane %v1837, 1
    %v1839 = vadd.f32 %v1837, %v1838
    %v1840 = vmul.f32 %v1839, %v164
    %v1841 = vsub.f32 %v1832, %v1840
    %v1842 = vmul.f32 %v1841, %v1841
    %v1843 = vsel %vm811, %v1842, 0.0
    %v1844 = vrot.slane %v1843, 4
    %v1845 = vadd.f32 %v1843, %v1844
    %v1846 = vrot.slane %v1845, 2
    %v1847 = vadd.f32 %v1845, %v1846
    %v1848 = vrot.slane %v1847, 1
    %v1849 = vadd.f32 %v1847, %v1848
    %v1850 = vmul.f32 %v1849, %v164
    %v1851 = vadd.f32 %v1850, 1e-05
    %v1852 = vrsqrt.pop %v1851
    %v1853 = vmul.f32 %v1841, %v1852
    %v1854 = vmul.f32 %v1853, %v839
    %v1855 = vadd.f32 %v1854, %v848
    %1857 = vrot.lane.b32.xlu0 %v1855, 96
    %v1858 = vpop.permute.xlu0 %1857
    %v1859 = vsel %vm156, %v1858, 0
    %1861 = vmatprep.subr.mxu0 0.0
    %1862 = vmatpush1.msra.mxu0 %v598
    %1863 = vmatprep.subr.mxu0 0.0
    %1864 = vmatpush1.msra.mxu0 %v599
    %1865 = vmatprep.subr.mxu0 0.0
    %1866 = vmatpush1.msra.mxu0 %v600
    %1867 = vmatprep.subr.mxu0 0.0
    %1868 = vmatpush1.msra.mxu0 %v601
    %1869 = vmatprep.subr.mxu0 0.0
    %1870 = vmatpush1.msra.mxu0 0.0
    %1871 = vmatprep.subr.mxu0 0.0
    %1872 = vmatpush1.msra.mxu0 0.0
    %1873 = vmatprep.subr.mxu0 0.0
    %1874 = vmatpush1.msra.mxu0 0.0
    %1875 = vmatprep.subr.mxu0 0.0
    %1876 = vmatpush1.msra.mxu0 0.0
    %1877 = vmatprep.subr.mxu0 0.0
    %1878 = vmatpush1.msra.mxu0 0.0
    %1879 = vmatprep.subr.mxu0 0.0
    %1880 = vmatpush1.msra.mxu0 0.0
    %1881 = vmatprep.subr.mxu0 0.0
    %1882 = vmatpush1.msra.mxu0 0.0
    %1883 = vmatprep.subr.mxu0 0.0
    %1884 = vmatpush1.msra.mxu0 0.0
    %1885 = vmatprep.subr.mxu0 0.0
    %1886 = vmatpush1.msra.mxu0 0.0
    %1887 = vmatprep.subr.mxu0 0.0
    %1888 = vmatpush1.msra.mxu0 0.0
    %1889 = vmatprep.subr.mxu0 0.0
    %1890 = vmatpush1.msra.mxu0 0.0
    %1891 = vmatprep.subr.mxu0 0.0
    %1892 = vmatpush1.msra.mxu0 0.0
    %1893 = vmatprep.subr.mxu0 0.0
    %1894 = vmatpush1.msra.mxu0 0.0
    %1895 = vmatprep.subr.mxu0 0.0
    %1896 = vmatpush1.msra.mxu0 0.0
    %1897 = vmatprep.subr.mxu0 0.0
    %1898 = vmatpush1.msra.mxu0 0.0
    %1899 = vmatprep.subr.mxu0 0.0
    %1900 = vmatpush1.msra.mxu0 0.0
    %1901 = vmatprep.subr.mxu0 0.0
    %1902 = vmatpush1.msra.mxu0 0.0
    %1903 = vmatprep.subr.mxu0 0.0
    %1904 = vmatpush1.msra.mxu0 0.0
    %1905 = vmatprep.subr.mxu0 0.0
    %1906 = vmatpush1.msra.mxu0 0.0
    %1907 = vmatprep.subr.mxu0 0.0
    %1908 = vmatpush1.msra.mxu0 0.0
    %1909 = vmatprep.subr.mxu0 0.0
    %1910 = vmatpush1.msra.mxu0 0.0
    %1911 = vmatprep.subr.mxu0 0.0
    %1912 = vmatpush1.msra.mxu0 0.0
    %1913 = vmatprep.subr.mxu0 0.0
    %1914 = vmatpush1.msra.mxu0 0.0
    %1915 = vmatprep.subr.mxu0 0.0
    %1916 = vmatpush1.msra.mxu0 0.0
    %1917 = vmatprep.subr.mxu0 0.0
    %1918 = vmatpush1.msra.mxu0 0.0
    %1919 = vmatprep.subr.mxu0 0.0
    %1920 = vmatpush1.msra.mxu0 0.0
    %1921 = vmatprep.subr.mxu0 0.0
    %1922 = vmatpush1.msra.mxu0 0.0
    %1923 = vmatprep.subr.mxu0 0.0
    %1924 = vmatpush1.msra.mxu0 0.0
    %1925 = vmatprep.mubr.f32.mxu0 0.0
    %1926 = vmatmul.mubr.f32.gmra.mrb[0].mxu0 %v1859
    %v1927 = vpop.f32.mrb[0].mxu0
    %v1928 = vadd.f32 %v854, %v1927
    %v1929 = vpop.f32.mrb[0].mxu0
    %1930 = vdwg.mxu0
    %1931 = vrot.lane.b32.xlu0 %v604, 80
    %v1932 = vpop.permute.xlu0 %1931
    %v1934 = vadd.f32 %v1928, %v1932
    %v1935 = vsel %vm80, %v1934, -inf
    %1936 = vmax.xlane.f32.xlu0 %v1935
    %v1937 = vpop.xlane.xlu0 %1936
    %v1938 = vsub.f32 %v1934, %v1937
    %v1939 = vmul.f32 %v1938, 1.442695
    %v1940 = vpow.pop %v1939
    %v1941 = vsel %vm80, %v1940, 0.0
    %1942 = vadd.xlane.f32.xlu0 %v1941
    %v1943 = vpop.xlane.xlu0 %1942
    %v1944 = vrcp.pop %v1943
    %v1945 = vmul.f32 %v1940, %v1944
    %1947 = vrot.lane.b32.xlu0 %v1945, 48
    %v1948 = vpop.permute.xlu0 %1947
    %vm1950 = vcmask 523648
    %1951 = vst.msk [vmem:[%s5] sm:$0xff] %vm1950, %v1948
    %vm1952 = vcmp.eq.f32.partialorder %v1934, %v1937
    %v1953 = vsel %vm1952, %v606, 16
    %v1954 = vsel %vm80, %v1953, 2147483647
    %v1955 = vand.u32 %v1954, 65535
    %v1956 = vshra.s32 %v1954, 16
    %v1957 = vcvt.s32.f32 %v1955
    %v1958 = vcvt.s32.f32 %v1956
    %1959 = vmin.xlane.f32.xlu0 %v1958
    %v1960 = vpop.xlane.xlu0 %1959
    %vm1961 = vcmp.eq.f32.partialorder %v1958, %v1960
    %v1962 = vsel %vm1961, %v1957, inf
    %1963 = vmin.xlane.f32.xlu0 %v1962
    %v1964 = vpop.xlane.xlu0 %1963
    %v1965 = vcvt.f32.s32 %v1964
    %v1966 = vcvt.f32.s32 %v1960
    %v1967 = vshll.u32 %v1966, 16
    %v1968 = vadd.s32 %v1967, %v1965
    %vm1969 = vcmp.eq.s32.totalorder %v606, %v1968
    %v1970 = vsel %vm1969, 1, 0
    %v1971 = vcvt.s32.f32 %v1970
    %v1973 = vsel %vm80, %v1971, 0
    %1975 = vmatprep.subr.mxu0 0.0
    %1976 = vmatpush1.msra.mxu0 %v44
    %1977 = vmatprep.subr.mxu0 0.0
    %1978 = vmatpush1.msra.mxu0 %v45
    %1979 = vmatprep.subr.mxu0 0.0
    %1980 = vmatpush1.msra.mxu0 0.0
    %1981 = vmatprep.subr.mxu0 0.0
    %1982 = vmatpush1.msra.mxu0 0.0
    %1983 = vmatprep.subr.mxu0 0.0
    %1984 = vmatpush1.msra.mxu0 0.0
    %1985 = vmatprep.subr.mxu0 0.0
    %1986 = vmatpush1.msra.mxu0 0.0
    %1987 = vmatprep.subr.mxu0 0.0
    %1988 = vmatpush1.msra.mxu0 0.0
    %1989 = vmatprep.subr.mxu0 0.0
    %1990 = vmatpush1.msra.mxu0 0.0
    %1991 = vmatprep.subr.mxu0 0.0
    %1992 = vmatpush1.msra.mxu0 0.0
    %1993 = vmatprep.subr.mxu0 0.0
    %1994 = vmatpush1.msra.mxu0 0.0
    %1995 = vmatprep.subr.mxu0 0.0
    %1996 = vmatpush1.msra.mxu0 0.0
    %1997 = vmatprep.subr.mxu0 0.0
    %1998 = vmatpush1.msra.mxu0 0.0
    %1999 = vmatprep.subr.mxu0 0.0
    %2000 = vmatpush1.msra.mxu0 0.0
    %2001 = vmatprep.subr.mxu0 0.0
    %2002 = vmatpush1.msra.mxu0 0.0
    %2003 = vmatprep.subr.mxu0 0.0
    %2004 = vmatpush1.msra.mxu0 0.0
    %2005 = vmatprep.subr.mxu0 0.0
    %2006 = vmatpush1.msra.mxu0 0.0
    %2007 = vmatprep.subr.mxu0 0.0
    %2008 = vmatpush1.msra.mxu0 0.0
    %2009 = vmatprep.subr.mxu0 0.0
    %2010 = vmatpush1.msra.mxu0 0.0
    %2011 = vmatprep.subr.mxu0 0.0
    %2012 = vmatpush1.msra.mxu0 0.0
    %2013 = vmatprep.subr.mxu0 0.0
    %2014 = vmatpush1.msra.mxu0 0.0
    %2015 = vmatprep.subr.mxu0 0.0
    %2016 = vmatpush1.msra.mxu0 0.0
    %2017 = vmatprep.subr.mxu0 0.0
    %2018 = vmatpush1.msra.mxu0 0.0
    %2019 = vmatprep.subr.mxu0 0.0
    %2020 = vmatpush1.msra.mxu0 0.0
    %2021 = vmatprep.subr.mxu0 0.0
    %2022 = vmatpush1.msra.mxu0 0.0
    %2023 = vmatprep.subr.mxu0 0.0
    %2024 = vmatpush1.msra.mxu0 0.0
    %2025 = vmatprep.subr.mxu0 0.0
    %2026 = vmatpush1.msra.mxu0 0.0
    %2027 = vmatprep.subr.mxu0 0.0
    %2028 = vmatpush1.msra.mxu0 0.0
    %2029 = vmatprep.subr.mxu0 0.0
    %2030 = vmatpush1.msra.mxu0 0.0
    %2031 = vmatprep.subr.mxu0 0.0
    %2032 = vmatpush1.msra.mxu0 0.0
    %2033 = vmatprep.subr.mxu0 0.0
    %2034 = vmatpush1.msra.mxu0 0.0
    %2035 = vmatprep.subr.mxu0 0.0
    %2036 = vmatpush1.msra.mxu0 0.0
    %2037 = vmatprep.subr.mxu0 0.0
    %2038 = vmatpush1.msra.mxu0 0.0
    %2039 = vmatprep.mubr.f32.mxu0 0.0
    %2040 = vmatmul.mubr.f32.gmra.mrb[0].mxu0 %v1973
    %v2041 = vpop.f32.mrb[0].mxu0
    %v2042 = vadd.f32 0.0, %v2041
    %v2043 = vpop.f32.mrb[0].mxu0
    %2044 = vdwg.mxu0
    %v2045 = vsel %vm156, %v2042, 0.0
    %v2046 = vrot.slane %v2045, 4
    %v2047 = vadd.f32 %v2045, %v2046
    %v2048 = vrot.slane %v2047, 2
    %v2049 = vadd.f32 %v2047, %v2048
    %v2050 = vrot.slane %v2049, 1
    %v2051 = vadd.f32 %v2049, %v2050
    %v2052 = vmul.f32 %v2051, %v164
    %v2053 = vsub.f32 %v2042, %v2052
    %v2054 = vmul.f32 %v2053, %v2053
    %v2055 = vsel %vm156, %v2054, 0.0
    %v2056 = vrot.slane %v2055, 4
    %v2057 = vadd.f32 %v2055, %v2056
    %v2058 = vrot.slane %v2057, 2
    %v2059 = vadd.f32 %v2057, %v2058
    %v2060 = vrot.slane %v2059, 1
    %v2061 = vadd.f32 %v2059, %v2060
    %v2062 = vmul.f32 %v2061, %v164
    %v2063 = vadd.f32 %v2062, 1e-05
    %v2064 = vrsqrt.pop %v2063
    %v2065 = vmul.f32 %v2053, %v2064
    %v2066 = vmul.f32 %v2065, %v492
    %v2067 = vadd.f32 %v2066, %v501
    %v2068 = vsel %vm156, %v2067, %v1830
    %v2070 = vsel %vm593, %v2068, 0
    %2072 = vmatprep.subr.mxu0 0.0
    %2073 = vmatpush1.msra.mxu0 %v54
    %2074 = vmatprep.subr.mxu0 0.0
    %2075 = vmatpush1.msra.mxu0 %v55
    %2076 = vmatprep.subr.mxu0 0.0
    %2077 = vmatpush1.msra.mxu0 %v56
    %2078 = vmatprep.subr.mxu0 0.0
    %2079 = vmatpush1.msra.mxu0 %v57
    %2080 = vmatprep.subr.mxu0 0.0
    %2081 = vmatpush1.msra.mxu0 %v58
    %2082 = vmatprep.subr.mxu0 0.0
    %2083 = vmatpush1.msra.mxu0 %v59
    %2084 = vmatprep.subr.mxu0 0.0
    %2085 = vmatpush1.msra.mxu0 %v60
    %2086 = vmatprep.subr.mxu0 0.0
    %2087 = vmatpush1.msra.mxu0 %v61
    %2088 = vmatprep.subr.mxu0 0.0
    %2089 = vmatpush1.msra.mxu0 0.0
    %2090 = vmatprep.subr.mxu0 0.0
    %2091 = vmatpush1.msra.mxu0 0.0
    %2092 = vmatprep.subr.mxu0 0.0
    %2093 = vmatpush1.msra.mxu0 0.0
    %2094 = vmatprep.subr.mxu0 0.0
    %2095 = vmatpush1.msra.mxu0 0.0
    %2096 = vmatprep.subr.mxu0 0.0
    %2097 = vmatpush1.msra.mxu0 0.0
    %2098 = vmatprep.subr.mxu0 0.0
    %2099 = vmatpush1.msra.mxu0 0.0
    %2100 = vmatprep.subr.mxu0 0.0
    %2101 = vmatpush1.msra.mxu0 0.0
    %2102 = vmatprep.subr.mxu0 0.0
    %2103 = vmatpush1.msra.mxu0 0.0
    %2104 = vmatprep.subr.mxu0 0.0
    %2105 = vmatpush1.msra.mxu0 0.0
    %2106 = vmatprep.subr.mxu0 0.0
    %2107 = vmatpush1.msra.mxu0 0.0
    %2108 = vmatprep.subr.mxu0 0.0
    %2109 = vmatpush1.msra.mxu0 0.0
    %2110 = vmatprep.subr.mxu0 0.0
    %2111 = vmatpush1.msra.mxu0 0.0
    %2112 = vmatprep.subr.mxu0 0.0
    %2113 = vmatpush1.msra.mxu0 0.0
    %2114 = vmatprep.subr.mxu0 0.0
    %2115 = vmatpush1.msra.mxu0 0.0
    %2116 = vmatprep.subr.mxu0 0.0
    %2117 = vmatpush1.msra.mxu0 0.0
    %2118 = vmatprep.subr.mxu0 0.0
    %2119 = vmatpush1.msra.mxu0 0.0
    %2120 = vmatprep.subr.mxu0 0.0
    %2121 = vmatpush1.msra.mxu0 0.0
    %2122 = vmatprep.subr.mxu0 0.0
    %2123 = vmatpush1.msra.mxu0 0.0
    %2124 = vmatprep.subr.mxu0 0.0
    %2125 = vmatpush1.msra.mxu0 0.0
    %2126 = vmatprep.subr.mxu0 0.0
    %2127 = vmatpush1.msra.mxu0 0.0
    %2128 = vmatprep.subr.mxu0 0.0
    %2129 = vmatpush1.msra.mxu0 0.0
    %2130 = vmatprep.subr.mxu0 0.0
    %2131 = vmatpush1.msra.mxu0 0.0
    %2132 = vmatprep.subr.mxu0 0.0
    %2133 = vmatpush1.msra.mxu0 0.0
    %2134 = vmatprep.subr.mxu0 0.0
    %2135 = vmatpush1.msra.mxu0 0.0
    %2136 = vmatprep.mubr.f32.mxu0 0.0
    %2137 = vmatmul.mubr.f32.gmra.mrb[0].mxu0 %v2070
    %v2138 = vpop.f32.mrb[0].mxu0
    %v2139 = vadd.f32 %v596, %v2138
    %v2140 = vpop.f32.mrb[0].mxu0
    %2141 = vdwg.mxu0
    %v2142 = vxor.u32 %v2139, 2147483648
    %v2143 = vmul.f32 %v2142, 1.442695
    %v2144 = vpow.pop %v2143
    %v2145 = vadd.f32 %v2144, 1.0
    %v2146 = vrcp.pop %v2145
    %v2147 = vmul.f32 1.0, %v2146
    %2149 = vrot.lane.b32.xlu0 %v2139, 32
    %v2150 = vpop.permute.xlu0 %2149
    %v2152 = vmul.f32 %v2147, %v2150
    %2154 = vrot.lane.b32.xlu0 %v2152, 64
    %v2155 = vpop.permute.xlu0 %2154
    %v2157 = vadd.f32 %v2139, %v2155
    %v2158 = vtanh.pop %v2157
    %v2159 = vsub.f32 1.0, %v2147
    %2161 = vrot.lane.b32.xlu0 %v2158, 96
    %v2162 = vpop.permute.xlu0 %2161
    %v2164 = vmul.f32 %v2159, %v2162
    %v2165 = vmul.f32 %v2147, %v1830
    %v2166 = vadd.f32 %v2164, %v2165
    %v2167 = vmul.f32 %v2166, 0.2
    %v2168 = vmax.f32 %v2166, %v2167
    %v2169 = vsel %vm811, %v2168, 0.0
    %v2170 = vrot.slane %v2169, 4
    %v2171 = vadd.f32 %v2169, %v2170
    %v2172 = vrot.slane %v2171, 2
    %v2173 = vadd.f32 %v2171, %v2172
    %v2174 = vrot.slane %v2173, 1
    %v2175 = vadd.f32 %v2173, %v2174
    %v2176 = vmul.f32 %v2175, %v164
    %v2177 = vsub.f32 %v2168, %v2176
    %v2178 = vmul.f32 %v2177, %v2177
    %v2179 = vsel %vm811, %v2178, 0.0
    %v2180 = vrot.slane %v2179, 4
    %v2181 = vadd.f32 %v2179, %v2180
    %v2182 = vrot.slane %v2181, 2
    %v2183 = vadd.f32 %v2181, %v2182
    %v2184 = vrot.slane %v2183, 1
    %v2185 = vadd.f32 %v2183, %v2184
    %v2186 = vmul.f32 %v2185, %v164
    %v2187 = vadd.f32 %v2186, 1e-05
    %v2188 = vrsqrt.pop %v2187
    %v2189 = vmul.f32 %v2177, %v2188
    %v2190 = vmul.f32 %v2189, %v839
    %v2191 = vadd.f32 %v2190, %v848
    %2193 = vrot.lane.b32.xlu0 %v2191, 96
    %v2194 = vpop.permute.xlu0 %2193
    %v2195 = vsel %vm156, %v2194, 0
    %2197 = vmatprep.subr.mxu0 0.0
    %2198 = vmatpush1.msra.mxu0 %v598
    %2199 = vmatprep.subr.mxu0 0.0
    %2200 = vmatpush1.msra.mxu0 %v599
    %2201 = vmatprep.subr.mxu0 0.0
    %2202 = vmatpush1.msra.mxu0 %v600
    %2203 = vmatprep.subr.mxu0 0.0
    %2204 = vmatpush1.msra.mxu0 %v601
    %2205 = vmatprep.subr.mxu0 0.0
    %2206 = vmatpush1.msra.mxu0 0.0
    %2207 = vmatprep.subr.mxu0 0.0
    %2208 = vmatpush1.msra.mxu0 0.0
    %2209 = vmatprep.subr.mxu0 0.0
    %2210 = vmatpush1.msra.mxu0 0.0
    %2211 = vmatprep.subr.mxu0 0.0
    %2212 = vmatpush1.msra.mxu0 0.0
    %2213 = vmatprep.subr.mxu0 0.0
    %2214 = vmatpush1.msra.mxu0 0.0
    %2215 = vmatprep.subr.mxu0 0.0
    %2216 = vmatpush1.msra.mxu0 0.0
    %2217 = vmatprep.subr.mxu0 0.0
    %2218 = vmatpush1.msra.mxu0 0.0
    %2219 = vmatprep.subr.mxu0 0.0
    %2220 = vmatpush1.msra.mxu0 0.0
    %2221 = vmatprep.subr.mxu0 0.0
    %2222 = vmatpush1.msra.mxu0 0.0
    %2223 = vmatprep.subr.mxu0 0.0
    %2224 = vmatpush1.msra.mxu0 0.0
    %2225 = vmatprep.subr.mxu0 0.0
    %2226 = vmatpush1.msra.mxu0 0.0
    %2227 = vmatprep.subr.mxu0 0.0
    %2228 = vmatpush1.msra.mxu0 0.0
    %2229 = vmatprep.subr.mxu0 0.0
    %2230 = vmatpush1.msra.mxu0 0.0
    %2231 = vmatprep.subr.mxu0 0.0
    %2232 = vmatpush1.msra.mxu0 0.0
    %2233 = vmatprep.subr.mxu0 0.0
    %2234 = vmatpush1.msra.mxu0 0.0
    %2235 = vmatprep.subr.mxu0 0.0
    %2236 = vmatpush1.msra.mxu0 0.0
    %2237 = vmatprep.subr.mxu0 0.0
    %2238 = vmatpush1.msra.mxu0 0.0
    %2239 = vmatprep.subr.mxu0 0.0
    %2240 = vmatpush1.msra.mxu0 0.0
    %2241 = vmatprep.subr.mxu0 0.0
    %2242 = vmatpush1.msra.mxu0 0.0
    %2243 = vmatprep.subr.mxu0 0.0
    %2244 = vmatpush1.msra.mxu0 0.0
    %2245 = vmatprep.subr.mxu0 0.0
    %2246 = vmatpush1.msra.mxu0 0.0
    %2247 = vmatprep.subr.mxu0 0.0
    %2248 = vmatpush1.msra.mxu0 0.0
    %2249 = vmatprep.subr.mxu0 0.0
    %2250 = vmatpush1.msra.mxu0 0.0
    %2251 = vmatprep.subr.mxu0 0.0
    %2252 = vmatpush1.msra.mxu0 0.0
    %2253 = vmatprep.subr.mxu0 0.0
    %2254 = vmatpush1.msra.mxu0 0.0
    %2255 = vmatprep.subr.mxu0 0.0
    %2256 = vmatpush1.msra.mxu0 0.0
    %2257 = vmatprep.subr.mxu0 0.0
    %2258 = vmatpush1.msra.mxu0 0.0
    %2259 = vmatprep.subr.mxu0 0.0
    %2260 = vmatpush1.msra.mxu0 0.0
    %2261 = vmatprep.mubr.f32.mxu0 0.0
    %2262 = vmatmul.mubr.f32.gmra.mrb[0].mxu0 %v2195
    %v2263 = vpop.f32.mrb[0].mxu0
    %v2264 = vadd.f32 %v854, %v2263
    %v2265 = vpop.f32.mrb[0].mxu0
    %2266 = vdwg.mxu0
    %2267 = vrot.lane.b32.xlu0 %v604, 64
    %v2268 = vpop.permute.xlu0 %2267
    %v2270 = vadd.f32 %v2264, %v2268
    %v2271 = vsel %vm80, %v2270, -inf
    %2272 = vmax.xlane.f32.xlu0 %v2271
    %v2273 = vpop.xlane.xlu0 %2272
    %v2274 = vsub.f32 %v2270, %v2273
    %v2275 = vmul.f32 %v2274, 1.442695
    %v2276 = vpow.pop %v2275
    %v2277 = vsel %vm80, %v2276, 0.0
    %2278 = vadd.xlane.f32.xlu0 %v2277
    %v2279 = vpop.xlane.xlu0 %2278
    %v2280 = vrcp.pop %v2279
    %v2281 = vmul.f32 %v2276, %v2280
    %2283 = vrot.lane.b32.xlu0 %v2281, 64
    %v2284 = vpop.permute.xlu0 %2283
    %vm2286 = vcmask 654848
    %2287 = vst.msk [vmem:[%s5] sm:$0xff] %vm2286, %v2284
    %vm2288 = vcmp.eq.f32.partialorder %v2270, %v2273
    %v2289 = vsel %vm2288, %v606, 16
    %v2290 = vsel %vm80, %v2289, 2147483647
    %v2291 = vand.u32 %v2290, 65535
    %v2292 = vshra.s32 %v2290, 16
    %v2293 = vcvt.s32.f32 %v2291
    %v2294 = vcvt.s32.f32 %v2292
    %2295 = vmin.xlane.f32.xlu0 %v2294
    %v2296 = vpop.xlane.xlu0 %2295
    %vm2297 = vcmp.eq.f32.partialorder %v2294, %v2296
    %v2298 = vsel %vm2297, %v2293, inf
    %2299 = vmin.xlane.f32.xlu0 %v2298
    %v2300 = vpop.xlane.xlu0 %2299
    %v2301 = vcvt.f32.s32 %v2300
    %v2302 = vcvt.f32.s32 %v2296
    %v2303 = vshll.u32 %v2302, 16
    %v2304 = vadd.s32 %v2303, %v2301
    %vm2305 = vcmp.eq.s32.totalorder %v606, %v2304
    %v2306 = vsel %vm2305, 1, 0
    %v2307 = vcvt.s32.f32 %v2306
    %v2309 = vsel %vm80, %v2307, 0
    %2311 = vmatprep.subr.mxu0 0.0
    %2312 = vmatpush1.msra.mxu0 %v44
    %2313 = vmatprep.subr.mxu0 0.0
    %2314 = vmatpush1.msra.mxu0 %v45
    %2315 = vmatprep.subr.mxu0 0.0
    %2316 = vmatpush1.msra.mxu0 0.0
    %2317 = vmatprep.subr.mxu0 0.0
    %2318 = vmatpush1.msra.mxu0 0.0
    %2319 = vmatprep.subr.mxu0 0.0
    %2320 = vmatpush1.msra.mxu0 0.0
    %2321 = vmatprep.subr.mxu0 0.0
    %2322 = vmatpush1.msra.mxu0 0.0
    %2323 = vmatprep.subr.mxu0 0.0
    %2324 = vmatpush1.msra.mxu0 0.0
    %2325 = vmatprep.subr.mxu0 0.0
    %2326 = vmatpush1.msra.mxu0 0.0
    %2327 = vmatprep.subr.mxu0 0.0
    %2328 = vmatpush1.msra.mxu0 0.0
    %2329 = vmatprep.subr.mxu0 0.0
    %2330 = vmatpush1.msra.mxu0 0.0
    %2331 = vmatprep.subr.mxu0 0.0
    %2332 = vmatpush1.msra.mxu0 0.0
    %2333 = vmatprep.subr.mxu0 0.0
    %2334 = vmatpush1.msra.mxu0 0.0
    %2335 = vmatprep.subr.mxu0 0.0
    %2336 = vmatpush1.msra.mxu0 0.0
    %2337 = vmatprep.subr.mxu0 0.0
    %2338 = vmatpush1.msra.mxu0 0.0
    %2339 = vmatprep.subr.mxu0 0.0
    %2340 = vmatpush1.msra.mxu0 0.0
    %2341 = vmatprep.subr.mxu0 0.0
    %2342 = vmatpush1.msra.mxu0 0.0
    %2343 = vmatprep.subr.mxu0 0.0
    %2344 = vmatpush1.msra.mxu0 0.0
    %2345 = vmatprep.subr.mxu0 0.0
    %2346 = vmatpush1.msra.mxu0 0.0
    %2347 = vmatprep.subr.mxu0 0.0
    %2348 = vmatpush1.msra.mxu0 0.0
    %2349 = vmatprep.subr.mxu0 0.0
    %2350 = vmatpush1.msra.mxu0 0.0
    %2351 = vmatprep.subr.mxu0 0.0
    %2352 = vmatpush1.msra.mxu0 0.0
    %2353 = vmatprep.subr.mxu0 0.0
    %2354 = vmatpush1.msra.mxu0 0.0
    %2355 = vmatprep.subr.mxu0 0.0
    %2356 = vmatpush1.msra.mxu0 0.0
    %2357 = vmatprep.subr.mxu0 0.0
    %2358 = vmatpush1.msra.mxu0 0.0
    %2359 = vmatprep.subr.mxu0 0.0
    %2360 = vmatpush1.msra.mxu0 0.0
    %2361 = vmatprep.subr.mxu0 0.0
    %2362 = vmatpush1.msra.mxu0 0.0
    %2363 = vmatprep.subr.mxu0 0.0
    %2364 = vmatpush1.msra.mxu0 0.0
    %2365 = vmatprep.subr.mxu0 0.0
    %2366 = vmatpush1.msra.mxu0 0.0
    %2367 = vmatprep.subr.mxu0 0.0
    %2368 = vmatpush1.msra.mxu0 0.0
    %2369 = vmatprep.subr.mxu0 0.0
    %2370 = vmatpush1.msra.mxu0 0.0
    %2371 = vmatprep.subr.mxu0 0.0
    %2372 = vmatpush1.msra.mxu0 0.0
    %2373 = vmatprep.subr.mxu0 0.0
    %2374 = vmatpush1.msra.mxu0 0.0
    %2375 = vmatprep.mubr.f32.mxu0 0.0
    %2376 = vmatmul.mubr.f32.gmra.mrb[0].mxu0 %v2309
    %v2377 = vpop.f32.mrb[0].mxu0
    %v2378 = vadd.f32 0.0, %v2377
    %v2379 = vpop.f32.mrb[0].mxu0
    %2380 = vdwg.mxu0
    %v2381 = vsel %vm156, %v2378, 0.0
    %v2382 = vrot.slane %v2381, 4
    %v2383 = vadd.f32 %v2381, %v2382
    %v2384 = vrot.slane %v2383, 2
    %v2385 = vadd.f32 %v2383, %v2384
    %v2386 = vrot.slane %v2385, 1
    %v2387 = vadd.f32 %v2385, %v2386
    %v2388 = vmul.f32 %v2387, %v164
    %v2389 = vsub.f32 %v2378, %v2388
    %v2390 = vmul.f32 %v2389, %v2389
    %v2391 = vsel %vm156, %v2390, 0.0
    %v2392 = vrot.slane %v2391, 4
    %v2393 = vadd.f32 %v2391, %v2392
    %v2394 = vrot.slane %v2393, 2
    %v2395 = vadd.f32 %v2393, %v2394
    %v2396 = vrot.slane %v2395, 1
    %v2397 = vadd.f32 %v2395, %v2396
    %v2398 = vmul.f32 %v2397, %v164
    %v2399 = vadd.f32 %v2398, 1e-05
    %v2400 = vrsqrt.pop %v2399
    %v2401 = vmul.f32 %v2389, %v2400
    %v2402 = vmul.f32 %v2401, %v492
    %v2403 = vadd.f32 %v2402, %v501
    %v2404 = vsel %vm156, %v2403, %v2166
    %v2406 = vsel %vm593, %v2404, 0
    %2408 = vmatprep.subr.mxu0 0.0
    %2409 = vmatpush1.msra.mxu0 %v54
    %2410 = vmatprep.subr.mxu0 0.0
    %2411 = vmatpush1.msra.mxu0 %v55
    %2412 = vmatprep.subr.mxu0 0.0
    %2413 = vmatpush1.msra.mxu0 %v56
    %2414 = vmatprep.subr.mxu0 0.0
    %2415 = vmatpush1.msra.mxu0 %v57
    %2416 = vmatprep.subr.mxu0 0.0
    %2417 = vmatpush1.msra.mxu0 %v58
    %2418 = vmatprep.subr.mxu0 0.0
    %2419 = vmatpush1.msra.mxu0 %v59
    %2420 = vmatprep.subr.mxu0 0.0
    %2421 = vmatpush1.msra.mxu0 %v60
    %2422 = vmatprep.subr.mxu0 0.0
    %2423 = vmatpush1.msra.mxu0 %v61
    %2424 = vmatprep.subr.mxu0 0.0
    %2425 = vmatpush1.msra.mxu0 0.0
    %2426 = vmatprep.subr.mxu0 0.0
    %2427 = vmatpush1.msra.mxu0 0.0
    %2428 = vmatprep.subr.mxu0 0.0
    %2429 = vmatpush1.msra.mxu0 0.0
    %2430 = vmatprep.subr.mxu0 0.0
    %2431 = vmatpush1.msra.mxu0 0.0
    %2432 = vmatprep.subr.mxu0 0.0
    %2433 = vmatpush1.msra.mxu0 0.0
    %2434 = vmatprep.subr.mxu0 0.0
    %2435 = vmatpush1.msra.mxu0 0.0
    %2436 = vmatprep.subr.mxu0 0.0
    %2437 = vmatpush1.msra.mxu0 0.0
    %2438 = vmatprep.subr.mxu0 0.0
    %2439 = vmatpush1.msra.mxu0 0.0
    %2440 = vmatprep.subr.mxu0 0.0
    %2441 = vmatpush1.msra.mxu0 0.0
    %2442 = vmatprep.subr.mxu0 0.0
    %2443 = vmatpush1.msra.mxu0 0.0
    %2444 = vmatprep.subr.mxu0 0.0
    %2445 = vmatpush1.msra.mxu0 0.0
    %2446 = vmatprep.subr.mxu0 0.0
    %2447 = vmatpush1.msra.mxu0 0.0
    %2448 = vmatprep.subr.mxu0 0.0
    %2449 = vmatpush1.msra.mxu0 0.0
    %2450 = vmatprep.subr.mxu0 0.0
    %2451 = vmatpush1.msra.mxu0 0.0
    %2452 = vmatprep.subr.mxu0 0.0
    %2453 = vmatpush1.msra.mxu0 0.0
    %2454 = vmatprep.subr.mxu0 0.0
    %2455 = vmatpush1.msra.mxu0 0.0
    %2456 = vmatprep.subr.mxu0 0.0
    %2457 = vmatpush1.msra.mxu0 0.0
    %2458 = vmatprep.subr.mxu0 0.0
    %2459 = vmatpush1.msra.mxu0 0.0
    %2460 = vmatprep.subr.mxu0 0.0
    %2461 = vmatpush1.msra.mxu0 0.0
    %2462 = vmatprep.subr.mxu0 0.0
    %2463 = vmatpush1.msra.mxu0 0.0
    %2464 = vmatprep.subr.mxu0 0.0
    %2465 = vmatpush1.msra.mxu0 0.0
    %2466 = vmatprep.subr.mxu0 0.0
    %2467 = vmatpush1.msra.mxu0 0.0
    %2468 = vmatprep.subr.mxu0 0.0
    %2469 = vmatpush1.msra.mxu0 0.0
    %2470 = vmatprep.subr.mxu0 0.0
    %2471 = vmatpush1.msra.mxu0 0.0
    %2472 = vmatprep.mubr.f32.mxu0 0.0
    %2473 = vmatmul.mubr.f32.gmra.mrb[0].mxu0 %v2406
    %v2474 = vpop.f32.mrb[0].mxu0
    %v2475 = vadd.f32 %v596, %v2474
    %v2476 = vpop.f32.mrb[0].mxu0
    %2477 = vdwg.mxu0
    %v2478 = vxor.u32 %v2475, 2147483648
    %v2479 = vmul.f32 %v2478, 1.442695
    %v2480 = vpow.pop %v2479
    %v2481 = vadd.f32 %v2480, 1.0
    %v2482 = vrcp.pop %v2481
    %v2483 = vmul.f32 1.0, %v2482
    %2485 = vrot.lane.b32.xlu0 %v2475, 32
    %v2486 = vpop.permute.xlu0 %2485
    %v2488 = vmul.f32 %v2483, %v2486
    %2490 = vrot.lane.b32.xlu0 %v2488, 64
    %v2491 = vpop.permute.xlu0 %2490
    %v2493 = vadd.f32 %v2475, %v2491
    %v2494 = vtanh.pop %v2493
    %v2495 = vsub.f32 1.0, %v2483
    %2497 = vrot.lane.b32.xlu0 %v2494, 96
    %v2498 = vpop.permute.xlu0 %2497
    %v2500 = vmul.f32 %v2495, %v2498
    %v2501 = vmul.f32 %v2483, %v2166
    %v2502 = vadd.f32 %v2500, %v2501
    %v2503 = vmul.f32 %v2502, 0.2
    %v2504 = vmax.f32 %v2502, %v2503
    %v2505 = vsel %vm811, %v2504, 0.0
    %v2506 = vrot.slane %v2505, 4
    %v2507 = vadd.f32 %v2505, %v2506
    %v2508 = vrot.slane %v2507, 2
    %v2509 = vadd.f32 %v2507, %v2508
    %v2510 = vrot.slane %v2509, 1
    %v2511 = vadd.f32 %v2509, %v2510
    %v2512 = vmul.f32 %v2511, %v164
    %v2513 = vsub.f32 %v2504, %v2512
    %v2514 = vmul.f32 %v2513, %v2513
    %v2515 = vsel %vm811, %v2514, 0.0
    %v2516 = vrot.slane %v2515, 4
    %v2517 = vadd.f32 %v2515, %v2516
    %v2518 = vrot.slane %v2517, 2
    %v2519 = vadd.f32 %v2517, %v2518
    %v2520 = vrot.slane %v2519, 1
    %v2521 = vadd.f32 %v2519, %v2520
    %v2522 = vmul.f32 %v2521, %v164
    %v2523 = vadd.f32 %v2522, 1e-05
    %v2524 = vrsqrt.pop %v2523
    %v2525 = vmul.f32 %v2513, %v2524
    %v2526 = vmul.f32 %v2525, %v839
    %v2527 = vadd.f32 %v2526, %v848
    %2529 = vrot.lane.b32.xlu0 %v2527, 96
    %v2530 = vpop.permute.xlu0 %2529
    %v2531 = vsel %vm156, %v2530, 0
    %2533 = vmatprep.subr.mxu0 0.0
    %2534 = vmatpush1.msra.mxu0 %v598
    %2535 = vmatprep.subr.mxu0 0.0
    %2536 = vmatpush1.msra.mxu0 %v599
    %2537 = vmatprep.subr.mxu0 0.0
    %2538 = vmatpush1.msra.mxu0 %v600
    %2539 = vmatprep.subr.mxu0 0.0
    %2540 = vmatpush1.msra.mxu0 %v601
    %2541 = vmatprep.subr.mxu0 0.0
    %2542 = vmatpush1.msra.mxu0 0.0
    %2543 = vmatprep.subr.mxu0 0.0
    %2544 = vmatpush1.msra.mxu0 0.0
    %2545 = vmatprep.subr.mxu0 0.0
    %2546 = vmatpush1.msra.mxu0 0.0
    %2547 = vmatprep.subr.mxu0 0.0
    %2548 = vmatpush1.msra.mxu0 0.0
    %2549 = vmatprep.subr.mxu0 0.0
    %2550 = vmatpush1.msra.mxu0 0.0
    %2551 = vmatprep.subr.mxu0 0.0
    %2552 = vmatpush1.msra.mxu0 0.0
    %2553 = vmatprep.subr.mxu0 0.0
    %2554 = vmatpush1.msra.mxu0 0.0
    %2555 = vmatprep.subr.mxu0 0.0
    %2556 = vmatpush1.msra.mxu0 0.0
    %2557 = vmatprep.subr.mxu0 0.0
    %2558 = vmatpush1.msra.mxu0 0.0
    %2559 = vmatprep.subr.mxu0 0.0
    %2560 = vmatpush1.msra.mxu0 0.0
    %2561 = vmatprep.subr.mxu0 0.0
    %2562 = vmatpush1.msra.mxu0 0.0
    %2563 = vmatprep.subr.mxu0 0.0
    %2564 = vmatpush1.msra.mxu0 0.0
    %2565 = vmatprep.subr.mxu0 0.0
    %2566 = vmatpush1.msra.mxu0 0.0
    %2567 = vmatprep.subr.mxu0 0.0
    %2568 = vmatpush1.msra.mxu0 0.0
    %2569 = vmatprep.subr.mxu0 0.0
    %2570 = vmatpush1.msra.mxu0 0.0
    %2571 = vmatprep.subr.mxu0 0.0
    %2572 = vmatpush1.msra.mxu0 0.0
    %2573 = vmatprep.subr.mxu0 0.0
    %2574 = vmatpush1.msra.mxu0 0.0
    %2575 = vmatprep.subr.mxu0 0.0
    %2576 = vmatpush1.msra.mxu0 0.0
    %2577 = vmatprep.subr.mxu0 0.0
    %2578 = vmatpush1.msra.mxu0 0.0
    %2579 = vmatprep.subr.mxu0 0.0
    %2580 = vmatpush1.msra.mxu0 0.0
    %2581 = vmatprep.subr.mxu0 0.0
    %2582 = vmatpush1.msra.mxu0 0.0
    %2583 = vmatprep.subr.mxu0 0.0
    %2584 = vmatpush1.msra.mxu0 0.0
    %2585 = vmatprep.subr.mxu0 0.0
    %2586 = vmatpush1.msra.mxu0 0.0
    %2587 = vmatprep.subr.mxu0 0.0
    %2588 = vmatpush1.msra.mxu0 0.0
    %2589 = vmatprep.subr.mxu0 0.0
    %2590 = vmatpush1.msra.mxu0 0.0
    %2591 = vmatprep.subr.mxu0 0.0
    %2592 = vmatpush1.msra.mxu0 0.0
    %2593 = vmatprep.subr.mxu0 0.0
    %2594 = vmatpush1.msra.mxu0 0.0
    %2595 = vmatprep.subr.mxu0 0.0
    %2596 = vmatpush1.msra.mxu0 0.0
    %2597 = vmatprep.mubr.f32.mxu0 0.0
    %2598 = vmatmul.mubr.f32.gmra.mrb[0].mxu0 %v2531
    %v2599 = vpop.f32.mrb[0].mxu0
    %v2600 = vadd.f32 %v854, %v2599
    %v2601 = vpop.f32.mrb[0].mxu0
    %2602 = vdwg.mxu0
    %2603 = vrot.lane.b32.xlu0 %v604, 48
    %v2604 = vpop.permute.xlu0 %2603
    %v2606 = vadd.f32 %v2600, %v2604
    %v2607 = vsel %vm80, %v2606, -inf
    %2608 = vmax.xlane.f32.xlu0 %v2607
    %v2609 = vpop.xlane.xlu0 %2608
    %v2610 = vsub.f32 %v2606, %v2609
    %v2611 = vmul.f32 %v2610, 1.442695
    %v2612 = vpow.pop %v2611
    %v2613 = vsel %vm80, %v2612, 0.0
    %2614 = vadd.xlane.f32.xlu0 %v2613
    %v2615 = vpop.xlane.xlu0 %2614
    %v2616 = vrcp.pop %v2615
    %v2617 = vmul.f32 %v2612, %v2616
    %2619 = vrot.lane.b32.xlu0 %v2617, 80
    %v2620 = vpop.permute.xlu0 %2619
    %vm2622 = vcmask 786048
    %2623 = vst.msk [vmem:[%s5] sm:$0xff] %vm2622, %v2620
    %vm2624 = vcmp.eq.f32.partialorder %v2606, %v2609
    %v2625 = vsel %vm2624, %v606, 16
    %v2626 = vsel %vm80, %v2625, 2147483647
    %v2627 = vand.u32 %v2626, 65535
    %v2628 = vshra.s32 %v2626, 16
    %v2629 = vcvt.s32.f32 %v2627
    %v2630 = vcvt.s32.f32 %v2628
    %2631 = vmin.xlane.f32.xlu0 %v2630
    %v2632 = vpop.xlane.xlu0 %2631
    %vm2633 = vcmp.eq.f32.partialorder %v2630, %v2632
    %v2634 = vsel %vm2633, %v2629, inf
    %2635 = vmin.xlane.f32.xlu0 %v2634
    %v2636 = vpop.xlane.xlu0 %2635
    %v2637 = vcvt.f32.s32 %v2636
    %v2638 = vcvt.f32.s32 %v2632
    %v2639 = vshll.u32 %v2638, 16
    %v2640 = vadd.s32 %v2639, %v2637
    %vm2641 = vcmp.eq.s32.totalorder %v606, %v2640
    %v2642 = vsel %vm2641, 1, 0
    %v2643 = vcvt.s32.f32 %v2642
    %v2645 = vsel %vm80, %v2643, 0
    %2647 = vmatprep.subr.mxu0 0.0
    %2648 = vmatpush1.msra.mxu0 %v44
    %2649 = vmatprep.subr.mxu0 0.0
    %2650 = vmatpush1.msra.mxu0 %v45
    %2651 = vmatprep.subr.mxu0 0.0
    %2652 = vmatpush1.msra.mxu0 0.0
    %2653 = vmatprep.subr.mxu0 0.0
    %2654 = vmatpush1.msra.mxu0 0.0
    %2655 = vmatprep.subr.mxu0 0.0
    %2656 = vmatpush1.msra.mxu0 0.0
    %2657 = vmatprep.subr.mxu0 0.0
    %2658 = vmatpush1.msra.mxu0 0.0
    %2659 = vmatprep.subr.mxu0 0.0
    %2660 = vmatpush1.msra.mxu0 0.0
    %2661 = vmatprep.subr.mxu0 0.0
    %2662 = vmatpush1.msra.mxu0 0.0
    %2663 = vmatprep.subr.mxu0 0.0
    %2664 = vmatpush1.msra.mxu0 0.0
    %2665 = vmatprep.subr.mxu0 0.0
    %2666 = vmatpush1.msra.mxu0 0.0
    %2667 = vmatprep.subr.mxu0 0.0
    %2668 = vmatpush1.msra.mxu0 0.0
    %2669 = vmatprep.subr.mxu0 0.0
    %2670 = vmatpush1.msra.mxu0 0.0
    %2671 = vmatprep.subr.mxu0 0.0
    %2672 = vmatpush1.msra.mxu0 0.0
    %2673 = vmatprep.subr.mxu0 0.0
    %2674 = vmatpush1.msra.mxu0 0.0
    %2675 = vmatprep.subr.mxu0 0.0
    %2676 = vmatpush1.msra.mxu0 0.0
    %2677 = vmatprep.subr.mxu0 0.0
    %2678 = vmatpush1.msra.mxu0 0.0
    %2679 = vmatprep.subr.mxu0 0.0
    %2680 = vmatpush1.msra.mxu0 0.0
    %2681 = vmatprep.subr.mxu0 0.0
    %2682 = vmatpush1.msra.mxu0 0.0
    %2683 = vmatprep.subr.mxu0 0.0
    %2684 = vmatpush1.msra.mxu0 0.0
    %2685 = vmatprep.subr.mxu0 0.0
    %2686 = vmatpush1.msra.mxu0 0.0
    %2687 = vmatprep.subr.mxu0 0.0
    %2688 = vmatpush1.msra.mxu0 0.0
    %2689 = vmatprep.subr.mxu0 0.0
    %2690 = vmatpush1.msra.mxu0 0.0
    %2691 = vmatprep.subr.mxu0 0.0
    %2692 = vmatpush1.msra.mxu0 0.0
    %2693 = vmatprep.subr.mxu0 0.0
    %2694 = vmatpush1.msra.mxu0 0.0
    %2695 = vmatprep.subr.mxu0 0.0
    %2696 = vmatpush1.msra.mxu0 0.0
    %2697 = vmatprep.subr.mxu0 0.0
    %2698 = vmatpush1.msra.mxu0 0.0
    %2699 = vmatprep.subr.mxu0 0.0
    %2700 = vmatpush1.msra.mxu0 0.0
    %2701 = vmatprep.subr.mxu0 0.0
    %2702 = vmatpush1.msra.mxu0 0.0
    %2703 = vmatprep.subr.mxu0 0.0
    %2704 = vmatpush1.msra.mxu0 0.0
    %2705 = vmatprep.subr.mxu0 0.0
    %2706 = vmatpush1.msra.mxu0 0.0
    %2707 = vmatprep.subr.mxu0 0.0
    %2708 = vmatpush1.msra.mxu0 0.0
    %2709 = vmatprep.subr.mxu0 0.0
    %2710 = vmatpush1.msra.mxu0 0.0
    %2711 = vmatprep.mubr.f32.mxu0 0.0
    %2712 = vmatmul.mubr.f32.gmra.mrb[0].mxu0 %v2645
    %v2713 = vpop.f32.mrb[0].mxu0
    %v2714 = vadd.f32 0.0, %v2713
    %v2715 = vpop.f32.mrb[0].mxu0
    %2716 = vdwg.mxu0
    %v2717 = vsel %vm156, %v2714, 0.0
    %v2718 = vrot.slane %v2717, 4
    %v2719 = vadd.f32 %v2717, %v2718
    %v2720 = vrot.slane %v2719, 2
    %v2721 = vadd.f32 %v2719, %v2720
    %v2722 = vrot.slane %v2721, 1
    %v2723 = vadd.f32 %v2721, %v2722
    %v2724 = vmul.f32 %v2723, %v164
    %v2725 = vsub.f32 %v2714, %v2724
    %v2726 = vmul.f32 %v2725, %v2725
    %v2727 = vsel %vm156, %v2726, 0.0
    %v2728 = vrot.slane %v2727, 4
    %v2729 = vadd.f32 %v2727, %v2728
    %v2730 = vrot.slane %v2729, 2
    %v2731 = vadd.f32 %v2729, %v2730
    %v2732 = vrot.slane %v2731, 1
    %v2733 = vadd.f32 %v2731, %v2732
    %v2734 = vmul.f32 %v2733, %v164
    %v2735 = vadd.f32 %v2734, 1e-05
    %v2736 = vrsqrt.pop %v2735
    %v2737 = vmul.f32 %v2725, %v2736
    %v2738 = vmul.f32 %v2737, %v492
    %v2739 = vadd.f32 %v2738, %v501
    %v2740 = vsel %vm156, %v2739, %v2502
    %v2742 = vsel %vm593, %v2740, 0
    %2744 = vmatprep.subr.mxu0 0.0
    %2745 = vmatpush1.msra.mxu0 %v54
    %2746 = vmatprep.subr.mxu0 0.0
    %2747 = vmatpush1.msra.mxu0 %v55
    %2748 = vmatprep.subr.mxu0 0.0
    %2749 = vmatpush1.msra.mxu0 %v56
    %2750 = vmatprep.subr.mxu0 0.0
    %2751 = vmatpush1.msra.mxu0 %v57
    %2752 = vmatprep.subr.mxu0 0.0
    %2753 = vmatpush1.msra.mxu0 %v58
    %2754 = vmatprep.subr.mxu0 0.0
    %2755 = vmatpush1.msra.mxu0 %v59
    %2756 = vmatprep.subr.mxu0 0.0
    %2757 = vmatpush1.msra.mxu0 %v60
    %2758 = vmatprep.subr.mxu0 0.0
    %2759 = vmatpush1.msra.mxu0 %v61
    %2760 = vmatprep.subr.mxu0 0.0
    %2761 = vmatpush1.msra.mxu0 0.0
    %2762 = vmatprep.subr.mxu0 0.0
    %2763 = vmatpush1.msra.mxu0 0.0
    %2764 = vmatprep.subr.mxu0 0.0
    %2765 = vmatpush1.msra.mxu0 0.0
    %2766 = vmatprep.subr.mxu0 0.0
    %2767 = vmatpush1.msra.mxu0 0.0
    %2768 = vmatprep.subr.mxu0 0.0
    %2769 = vmatpush1.msra.mxu0 0.0
    %2770 = vmatprep.subr.mxu0 0.0
    %2771 = vmatpush1.msra.mxu0 0.0
    %2772 = vmatprep.subr.mxu0 0.0
    %2773 = vmatpush1.msra.mxu0 0.0
    %2774 = vmatprep.subr.mxu0 0.0
    %2775 = vmatpush1.msra.mxu0 0.0
    %2776 = vmatprep.subr.mxu0 0.0
    %2777 = vmatpush1.msra.mxu0 0.0
    %2778 = vmatprep.subr.mxu0 0.0
    %2779 = vmatpush1.msra.mxu0 0.0
    %2780 = vmatprep.subr.mxu0 0.0
    %2781 = vmatpush1.msra.mxu0 0.0
    %2782 = vmatprep.subr.mxu0 0.0
    %2783 = vmatpush1.msra.mxu0 0.0
    %2784 = vmatprep.subr.mxu0 0.0
    %2785 = vmatpush1.msra.mxu0 0.0
    %2786 = vmatprep.subr.mxu0 0.0
    %2787 = vmatpush1.msra.mxu0 0.0
    %2788 = vmatprep.subr.mxu0 0.0
    %2789 = vmatpush1.msra.mxu0 0.0
    %2790 = vmatprep.subr.mxu0 0.0
    %2791 = vmatpush1.msra.mxu0 0.0
    %2792 = vmatprep.subr.mxu0 0.0
    %2793 = vmatpush1.msra.mxu0 0.0
    %2794 = vmatprep.subr.mxu0 0.0
    %2795 = vmatpush1.msra.mxu0 0.0
    %2796 = vmatprep.subr.mxu0 0.0
    %2797 = vmatpush1.msra.mxu0 0.0
    %2798 = vmatprep.subr.mxu0 0.0
    %2799 = vmatpush1.msra.mxu0 0.0
    %2800 = vmatprep.subr.mxu0 0.0
    %2801 = vmatpush1.msra.mxu0 0.0
    %2802 = vmatprep.subr.mxu0 0.0
    %2803 = vmatpush1.msra.mxu0 0.0
    %2804 = vmatprep.subr.mxu0 0.0
    %2805 = vmatpush1.msra.mxu0 0.0
    %2806 = vmatprep.subr.mxu0 0.0
    %2807 = vmatpush1.msra.mxu0 0.0
    %2808 = vmatprep.mubr.f32.mxu0 0.0
    %2809 = vmatmul.mubr.f32.gmra.mrb[0].mxu0 %v2742
    %v2810 = vpop.f32.mrb[0].mxu0
    %v2811 = vadd.f32 %v596, %v2810
    %v2812 = vpop.f32.mrb[0].mxu0
    %2813 = vdwg.mxu0
    %v2814 = vxor.u32 %v2811, 2147483648
    %v2815 = vmul.f32 %v2814, 1.442695
    %v2816 = vpow.pop %v2815
    %v2817 = vadd.f32 %v2816, 1.0
    %v2818 = vrcp.pop %v2817
    %v2819 = vmul.f32 1.0, %v2818
    %2821 = vrot.lane.b32.xlu0 %v2811, 32
    %v2822 = vpop.permute.xlu0 %2821
    %v2824 = vmul.f32 %v2819, %v2822
    %2826 = vrot.lane.b32.xlu0 %v2824, 64
    %v2827 = vpop.permute.xlu0 %2826
    %v2829 = vadd.f32 %v2811, %v2827
    %v2830 = vtanh.pop %v2829
    %v2831 = vsub.f32 1.0, %v2819
    %2833 = vrot.lane.b32.xlu0 %v2830, 96
    %v2834 = vpop.permute.xlu0 %2833
    %v2836 = vmul.f32 %v2831, %v2834
    %v2837 = vmul.f32 %v2819, %v2502
    %v2838 = vadd.f32 %v2836, %v2837
    %v2839 = vmul.f32 %v2838, 0.2
    %v2840 = vmax.f32 %v2838, %v2839
    %v2841 = vsel %vm811, %v2840, 0.0
    %v2842 = vrot.slane %v2841, 4
    %v2843 = vadd.f32 %v2841, %v2842
    %v2844 = vrot.slane %v2843, 2
    %v2845 = vadd.f32 %v2843, %v2844
    %v2846 = vrot.slane %v2845, 1
    %v2847 = vadd.f32 %v2845, %v2846
    %v2848 = vmul.f32 %v2847, %v164
    %v2849 = vsub.f32 %v2840, %v2848
    %v2850 = vmul.f32 %v2849, %v2849
    %v2851 = vsel %vm811, %v2850, 0.0
    %v2852 = vrot.slane %v2851, 4
    %v2853 = vadd.f32 %v2851, %v2852
    %v2854 = vrot.slane %v2853, 2
    %v2855 = vadd.f32 %v2853, %v2854
    %v2856 = vrot.slane %v2855, 1
    %v2857 = vadd.f32 %v2855, %v2856
    %v2858 = vmul.f32 %v2857, %v164
    %v2859 = vadd.f32 %v2858, 1e-05
    %v2860 = vrsqrt.pop %v2859
    %v2861 = vmul.f32 %v2849, %v2860
    %v2862 = vmul.f32 %v2861, %v839
    %v2863 = vadd.f32 %v2862, %v848
    %2865 = vrot.lane.b32.xlu0 %v2863, 96
    %v2866 = vpop.permute.xlu0 %2865
    %v2867 = vsel %vm156, %v2866, 0
    %2869 = vmatprep.subr.mxu0 0.0
    %2870 = vmatpush1.msra.mxu0 %v598
    %2871 = vmatprep.subr.mxu0 0.0
    %2872 = vmatpush1.msra.mxu0 %v599
    %2873 = vmatprep.subr.mxu0 0.0
    %2874 = vmatpush1.msra.mxu0 %v600
    %2875 = vmatprep.subr.mxu0 0.0
    %2876 = vmatpush1.msra.mxu0 %v601
    %2877 = vmatprep.subr.mxu0 0.0
    %2878 = vmatpush1.msra.mxu0 0.0
    %2879 = vmatprep.subr.mxu0 0.0
    %2880 = vmatpush1.msra.mxu0 0.0
    %2881 = vmatprep.subr.mxu0 0.0
    %2882 = vmatpush1.msra.mxu0 0.0
    %2883 = vmatprep.subr.mxu0 0.0
    %2884 = vmatpush1.msra.mxu0 0.0
    %2885 = vmatprep.subr.mxu0 0.0
    %2886 = vmatpush1.msra.mxu0 0.0
    %2887 = vmatprep.subr.mxu0 0.0
    %2888 = vmatpush1.msra.mxu0 0.0
    %2889 = vmatprep.subr.mxu0 0.0
    %2890 = vmatpush1.msra.mxu0 0.0
    %2891 = vmatprep.subr.mxu0 0.0
    %2892 = vmatpush1.msra.mxu0 0.0
    %2893 = vmatprep.subr.mxu0 0.0
    %2894 = vmatpush1.msra.mxu0 0.0
    %2895 = vmatprep.subr.mxu0 0.0
    %2896 = vmatpush1.msra.mxu0 0.0
    %2897 = vmatprep.subr.mxu0 0.0
    %2898 = vmatpush1.msra.mxu0 0.0
    %2899 = vmatprep.subr.mxu0 0.0
    %2900 = vmatpush1.msra.mxu0 0.0
    %2901 = vmatprep.subr.mxu0 0.0
    %2902 = vmatpush1.msra.mxu0 0.0
    %2903 = vmatprep.subr.mxu0 0.0
    %2904 = vmatpush1.msra.mxu0 0.0
    %2905 = vmatprep.subr.mxu0 0.0
    %2906 = vmatpush1.msra.mxu0 0.0
    %2907 = vmatprep.subr.mxu0 0.0
    %2908 = vmatpush1.msra.mxu0 0.0
    %2909 = vmatprep.subr.mxu0 0.0
    %2910 = vmatpush1.msra.mxu0 0.0
    %2911 = vmatprep.subr.mxu0 0.0
    %2912 = vmatpush1.msra.mxu0 0.0
    %2913 = vmatprep.subr.mxu0 0.0
    %2914 = vmatpush1.msra.mxu0 0.0
    %2915 = vmatprep.subr.mxu0 0.0
    %2916 = vmatpush1.msra.mxu0 0.0
    %2917 = vmatprep.subr.mxu0 0.0
    %2918 = vmatpush1.msra.mxu0 0.0
    %2919 = vmatprep.subr.mxu0 0.0
    %2920 = vmatpush1.msra.mxu0 0.0
    %2921 = vmatprep.subr.mxu0 0.0
    %2922 = vmatpush1.msra.mxu0 0.0
    %2923 = vmatprep.subr.mxu0 0.0
    %2924 = vmatpush1.msra.mxu0 0.0
    %2925 = vmatprep.subr.mxu0 0.0
    %2926 = vmatpush1.msra.mxu0 0.0
    %2927 = vmatprep.subr.mxu0 0.0
    %2928 = vmatpush1.msra.mxu0 0.0
    %2929 = vmatprep.subr.mxu0 0.0
    %2930 = vmatpush1.msra.mxu0 0.0
    %2931 = vmatprep.subr.mxu0 0.0
    %2932 = vmatpush1.msra.mxu0 0.0
    %2933 = vmatprep.mubr.f32.mxu0 0.0
    %2934 = vmatmul.mubr.f32.gmra.mrb[0].mxu0 %v2867
    %v2935 = vpop.f32.mrb[0].mxu0
    %v2936 = vadd.f32 %v854, %v2935
    %v2937 = vpop.f32.mrb[0].mxu0
    %2938 = vdwg.mxu0
    %2939 = vrot.lane.b32.xlu0 %v604, 32
    %v2940 = vpop.permute.xlu0 %2939
    %v2942 = vadd.f32 %v2936, %v2940
    %v2943 = vsel %vm80, %v2942, -inf
    %2944 = vmax.xlane.f32.xlu0 %v2943
    %v2945 = vpop.xlane.xlu0 %2944
    %v2946 = vsub.f32 %v2942, %v2945
    %v2947 = vmul.f32 %v2946, 1.442695
    %v2948 = vpow.pop %v2947
    %v2949 = vsel %vm80, %v2948, 0.0
    %2950 = vadd.xlane.f32.xlu0 %v2949
    %v2951 = vpop.xlane.xlu0 %2950
    %v2952 = vrcp.pop %v2951
    %v2953 = vmul.f32 %v2948, %v2952
    %2955 = vrot.lane.b32.xlu0 %v2953, 96
    %v2956 = vpop.permute.xlu0 %2955
    %vm2958 = vcmask 917248
    %2959 = vst.msk [vmem:[%s5] sm:$0xff] %vm2958, %v2956
    %vm2960 = vcmp.eq.f32.partialorder %v2942, %v2945
    %v2961 = vsel %vm2960, %v606, 16
    %v2962 = vsel %vm80, %v2961, 2147483647
    %v2963 = vand.u32 %v2962, 65535
    %v2964 = vshra.s32 %v2962, 16
    %v2965 = vcvt.s32.f32 %v2963
    %v2966 = vcvt.s32.f32 %v2964
    %2967 = vmin.xlane.f32.xlu0 %v2966
    %v2968 = vpop.xlane.xlu0 %2967
    %vm2969 = vcmp.eq.f32.partialorder %v2966, %v2968
    %v2970 = vsel %vm2969, %v2965, inf
    %2971 = vmin.xlane.f32.xlu0 %v2970
    %v2972 = vpop.xlane.xlu0 %2971
    %v2973 = vcvt.f32.s32 %v2972
    %v2974 = vcvt.f32.s32 %v2968
    %v2975 = vshll.u32 %v2974, 16
    %v2976 = vadd.s32 %v2975, %v2973
    %vm2977 = vcmp.eq.s32.totalorder %v606, %v2976
    %v2978 = vsel %vm2977, 1, 0
    %v2979 = vcvt.s32.f32 %v2978
    %v2981 = vsel %vm80, %v2979, 0
    %2983 = vmatprep.subr.mxu0 0.0
    %2984 = vmatpush1.msra.mxu0 %v44
    %2985 = vmatprep.subr.mxu0 0.0
    %2986 = vmatpush1.msra.mxu0 %v45
    %2987 = vmatprep.subr.mxu0 0.0
    %2988 = vmatpush1.msra.mxu0 0.0
    %2989 = vmatprep.subr.mxu0 0.0
    %2990 = vmatpush1.msra.mxu0 0.0
    %2991 = vmatprep.subr.mxu0 0.0
    %2992 = vmatpush1.msra.mxu0 0.0
    %2993 = vmatprep.subr.mxu0 0.0
    %2994 = vmatpush1.msra.mxu0 0.0
    %2995 = vmatprep.subr.mxu0 0.0
    %2996 = vmatpush1.msra.mxu0 0.0
    %2997 = vmatprep.subr.mxu0 0.0
    %2998 = vmatpush1.msra.mxu0 0.0
    %2999 = vmatprep.subr.mxu0 0.0
    %3000 = vmatpush1.msra.mxu0 0.0
    %3001 = vmatprep.subr.mxu0 0.0
    %3002 = vmatpush1.msra.mxu0 0.0
    %3003 = vmatprep.subr.mxu0 0.0
    %3004 = vmatpush1.msra.mxu0 0.0
    %3005 = vmatprep.subr.mxu0 0.0
    %3006 = vmatpush1.msra.mxu0 0.0
    %3007 = vmatprep.subr.mxu0 0.0
    %3008 = vmatpush1.msra.mxu0 0.0
    %3009 = vmatprep.subr.mxu0 0.0
    %3010 = vmatpush1.msra.mxu0 0.0
    %3011 = vmatprep.subr.mxu0 0.0
    %3012 = vmatpush1.msra.mxu0 0.0
    %3013 = vmatprep.subr.mxu0 0.0
    %3014 = vmatpush1.msra.mxu0 0.0
    %3015 = vmatprep.subr.mxu0 0.0
    %3016 = vmatpush1.msra.mxu0 0.0
    %3017 = vmatprep.subr.mxu0 0.0
    %3018 = vmatpush1.msra.mxu0 0.0
    %3019 = vmatprep.subr.mxu0 0.0
    %3020 = vmatpush1.msra.mxu0 0.0
    %3021 = vmatprep.subr.mxu0 0.0
    %3022 = vmatpush1.msra.mxu0 0.0
    %3023 = vmatprep.subr.mxu0 0.0
    %3024 = vmatpush1.msra.mxu0 0.0
    %3025 = vmatprep.subr.mxu0 0.0
    %3026 = vmatpush1.msra.mxu0 0.0
    %3027 = vmatprep.subr.mxu0 0.0
    %3028 = vmatpush1.msra.mxu0 0.0
    %3029 = vmatprep.subr.mxu0 0.0
    %3030 = vmatpush1.msra.mxu0 0.0
    %3031 = vmatprep.subr.mxu0 0.0
    %3032 = vmatpush1.msra.mxu0 0.0
    %3033 = vmatprep.subr.mxu0 0.0
    %3034 = vmatpush1.msra.mxu0 0.0
    %3035 = vmatprep.subr.mxu0 0.0
    %3036 = vmatpush1.msra.mxu0 0.0
    %3037 = vmatprep.subr.mxu0 0.0
    %3038 = vmatpush1.msra.mxu0 0.0
    %3039 = vmatprep.subr.mxu0 0.0
    %3040 = vmatpush1.msra.mxu0 0.0
    %3041 = vmatprep.subr.mxu0 0.0
    %3042 = vmatpush1.msra.mxu0 0.0
    %3043 = vmatprep.subr.mxu0 0.0
    %3044 = vmatpush1.msra.mxu0 0.0
    %3045 = vmatprep.subr.mxu0 0.0
    %3046 = vmatpush1.msra.mxu0 0.0
    %3047 = vmatprep.mubr.f32.mxu0 0.0
    %3048 = vmatmul.mubr.f32.gmra.mrb[0].mxu0 %v2981
    %v3049 = vpop.f32.mrb[0].mxu0
    %v3050 = vadd.f32 0.0, %v3049
    %v3051 = vpop.f32.mrb[0].mxu0
    %3052 = vdwg.mxu0
    %v3053 = vsel %vm156, %v3050, 0.0
    %v3054 = vrot.slane %v3053, 4
    %v3055 = vadd.f32 %v3053, %v3054
    %v3056 = vrot.slane %v3055, 2
    %v3057 = vadd.f32 %v3055, %v3056
    %v3058 = vrot.slane %v3057, 1
    %v3059 = vadd.f32 %v3057, %v3058
    %v3060 = vmul.f32 %v3059, %v164
    %v3061 = vsub.f32 %v3050, %v3060
    %v3062 = vmul.f32 %v3061, %v3061
    %v3063 = vsel %vm156, %v3062, 0.0
    %v3064 = vrot.slane %v3063, 4
    %v3065 = vadd.f32 %v3063, %v3064
    %v3066 = vrot.slane %v3065, 2
    %v3067 = vadd.f32 %v3065, %v3066
    %v3068 = vrot.slane %v3067, 1
    %v3069 = vadd.f32 %v3067, %v3068
    %v3070 = vmul.f32 %v3069, %v164
    %v3071 = vadd.f32 %v3070, 1e-05
    %v3072 = vrsqrt.pop %v3071
    %v3073 = vmul.f32 %v3061, %v3072
    %v3074 = vmul.f32 %v3073, %v492
    %v3075 = vadd.f32 %v3074, %v501
    %v3076 = vsel %vm156, %v3075, %v2838
    %v3078 = vsel %vm593, %v3076, 0
    %3080 = vmatprep.subr.mxu0 0.0
    %3081 = vmatpush1.msra.mxu0 %v54
    %3082 = vmatprep.subr.mxu0 0.0
    %3083 = vmatpush1.msra.mxu0 %v55
    %3084 = vmatprep.subr.mxu0 0.0
    %3085 = vmatpush1.msra.mxu0 %v56
    %3086 = vmatprep.subr.mxu0 0.0
    %3087 = vmatpush1.msra.mxu0 %v57
    %3088 = vmatprep.subr.mxu0 0.0
    %3089 = vmatpush1.msra.mxu0 %v58
    %3090 = vmatprep.subr.mxu0 0.0
    %3091 = vmatpush1.msra.mxu0 %v59
    %3092 = vmatprep.subr.mxu0 0.0
    %3093 = vmatpush1.msra.mxu0 %v60
    %3094 = vmatprep.subr.mxu0 0.0
    %3095 = vmatpush1.msra.mxu0 %v61
    %3096 = vmatprep.subr.mxu0 0.0
    %3097 = vmatpush1.msra.mxu0 0.0
    %3098 = vmatprep.subr.mxu0 0.0
    %3099 = vmatpush1.msra.mxu0 0.0
    %3100 = vmatprep.subr.mxu0 0.0
    %3101 = vmatpush1.msra.mxu0 0.0
    %3102 = vmatprep.subr.mxu0 0.0
    %3103 = vmatpush1.msra.mxu0 0.0
    %3104 = vmatprep.subr.mxu0 0.0
    %3105 = vmatpush1.msra.mxu0 0.0
    %3106 = vmatprep.subr.mxu0 0.0
    %3107 = vmatpush1.msra.mxu0 0.0
    %3108 = vmatprep.subr.mxu0 0.0
    %3109 = vmatpush1.msra.mxu0 0.0
    %3110 = vmatprep.subr.mxu0 0.0
    %3111 = vmatpush1.msra.mxu0 0.0
    %3112 = vmatprep.subr.mxu0 0.0
    %3113 = vmatpush1.msra.mxu0 0.0
    %3114 = vmatprep.subr.mxu0 0.0
    %3115 = vmatpush1.msra.mxu0 0.0
    %3116 = vmatprep.subr.mxu0 0.0
    %3117 = vmatpush1.msra.mxu0 0.0
    %3118 = vmatprep.subr.mxu0 0.0
    %3119 = vmatpush1.msra.mxu0 0.0
    %3120 = vmatprep.subr.mxu0 0.0
    %3121 = vmatpush1.msra.mxu0 0.0
    %3122 = vmatprep.subr.mxu0 0.0
    %3123 = vmatpush1.msra.mxu0 0.0
    %3124 = vmatprep.subr.mxu0 0.0
    %3125 = vmatpush1.msra.mxu0 0.0
    %3126 = vmatprep.subr.mxu0 0.0
    %3127 = vmatpush1.msra.mxu0 0.0
    %3128 = vmatprep.subr.mxu0 0.0
    %3129 = vmatpush1.msra.mxu0 0.0
    %3130 = vmatprep.subr.mxu0 0.0
    %3131 = vmatpush1.msra.mxu0 0.0
    %3132 = vmatprep.subr.mxu0 0.0
    %3133 = vmatpush1.msra.mxu0 0.0
    %3134 = vmatprep.subr.mxu0 0.0
    %3135 = vmatpush1.msra.mxu0 0.0
    %3136 = vmatprep.subr.mxu0 0.0
    %3137 = vmatpush1.msra.mxu0 0.0
    %3138 = vmatprep.subr.mxu0 0.0
    %3139 = vmatpush1.msra.mxu0 0.0
    %3140 = vmatprep.subr.mxu0 0.0
    %3141 = vmatpush1.msra.mxu0 0.0
    %3142 = vmatprep.subr.mxu0 0.0
    %3143 = vmatpush1.msra.mxu0 0.0
    %3144 = vmatprep.mubr.f32.mxu0 0.0
    %3145 = vmatmul.mubr.f32.gmra.mrb[0].mxu0 %v3078
    %v3146 = vpop.f32.mrb[0].mxu0
    %v3147 = vadd.f32 %v596, %v3146
    %v3148 = vpop.f32.mrb[0].mxu0
    %3149 = vdwg.mxu0
    %v3150 = vxor.u32 %v3147, 2147483648
    %v3151 = vmul.f32 %v3150, 1.442695
    %v3152 = vpow.pop %v3151
    %v3153 = vadd.f32 %v3152, 1.0
    %v3154 = vrcp.pop %v3153
    %v3155 = vmul.f32 1.0, %v3154
    %3157 = vrot.lane.b32.xlu0 %v3147, 32
    %v3158 = vpop.permute.xlu0 %3157
    %v3160 = vmul.f32 %v3155, %v3158
    %3162 = vrot.lane.b32.xlu0 %v3160, 64
    %v3163 = vpop.permute.xlu0 %3162
    %v3165 = vadd.f32 %v3147, %v3163
    %v3166 = vtanh.pop %v3165
    %v3167 = vsub.f32 1.0, %v3155
    %3169 = vrot.lane.b32.xlu0 %v3166, 96
    %v3170 = vpop.permute.xlu0 %3169
    %v3172 = vmul.f32 %v3167, %v3170
    %v3173 = vmul.f32 %v3155, %v2838
    %v3174 = vadd.f32 %v3172, %v3173
    %v3175 = vmul.f32 %v3174, 0.2
    %v3176 = vmax.f32 %v3174, %v3175
    %v3177 = vsel %vm811, %v3176, 0.0
    %v3178 = vrot.slane %v3177, 4
    %v3179 = vadd.f32 %v3177, %v3178
    %v3180 = vrot.slane %v3179, 2
    %v3181 = vadd.f32 %v3179, %v3180
    %v3182 = vrot.slane %v3181, 1
    %v3183 = vadd.f32 %v3181, %v3182
    %v3184 = vmul.f32 %v3183, %v164
    %v3185 = vsub.f32 %v3176, %v3184
    %v3186 = vmul.f32 %v3185, %v3185
    %v3187 = vsel %vm811, %v3186, 0.0
    %v3188 = vrot.slane %v3187, 4
    %v3189 = vadd.f32 %v3187, %v3188
    %v3190 = vrot.slane %v3189, 2
    %v3191 = vadd.f32 %v3189, %v3190
    %v3192 = vrot.slane %v3191, 1
    %v3193 = vadd.f32 %v3191, %v3192
    %v3194 = vmul.f32 %v3193, %v164
    %v3195 = vadd.f32 %v3194, 1e-05
    %v3196 = vrsqrt.pop %v3195
    %v3197 = vmul.f32 %v3185, %v3196
    %v3198 = vmul.f32 %v3197, %v839
    %v3199 = vadd.f32 %v3198, %v848
    %3201 = vrot.lane.b32.xlu0 %v3199, 96
    %v3202 = vpop.permute.xlu0 %3201
    %v3203 = vsel %vm156, %v3202, 0
    %3205 = vmatprep.subr.mxu0 0.0
    %3206 = vmatpush1.msra.mxu0 %v598
    %3207 = vmatprep.subr.mxu0 0.0
    %3208 = vmatpush1.msra.mxu0 %v599
    %3209 = vmatprep.subr.mxu0 0.0
    %3210 = vmatpush1.msra.mxu0 %v600
    %3211 = vmatprep.subr.mxu0 0.0
    %3212 = vmatpush1.msra.mxu0 %v601
    %3213 = vmatprep.subr.mxu0 0.0
    %3214 = vmatpush1.msra.mxu0 0.0
    %3215 = vmatprep.subr.mxu0 0.0
    %3216 = vmatpush1.msra.mxu0 0.0
    %3217 = vmatprep.subr.mxu0 0.0
    %3218 = vmatpush1.msra.mxu0 0.0
    %3219 = vmatprep.subr.mxu0 0.0
    %3220 = vmatpush1.msra.mxu0 0.0
    %3221 = vmatprep.subr.mxu0 0.0
    %3222 = vmatpush1.msra.mxu0 0.0
    %3223 = vmatprep.subr.mxu0 0.0
    %3224 = vmatpush1.msra.mxu0 0.0
    %3225 = vmatprep.subr.mxu0 0.0
    %3226 = vmatpush1.msra.mxu0 0.0
    %3227 = vmatprep.subr.mxu0 0.0
    %3228 = vmatpush1.msra.mxu0 0.0
    %3229 = vmatprep.subr.mxu0 0.0
    %3230 = vmatpush1.msra.mxu0 0.0
    %3231 = vmatprep.subr.mxu0 0.0
    %3232 = vmatpush1.msra.mxu0 0.0
    %3233 = vmatprep.subr.mxu0 0.0
    %3234 = vmatpush1.msra.mxu0 0.0
    %3235 = vmatprep.subr.mxu0 0.0
    %3236 = vmatpush1.msra.mxu0 0.0
    %3237 = vmatprep.subr.mxu0 0.0
    %3238 = vmatpush1.msra.mxu0 0.0
    %3239 = vmatprep.subr.mxu0 0.0
    %3240 = vmatpush1.msra.mxu0 0.0
    %3241 = vmatprep.subr.mxu0 0.0
    %3242 = vmatpush1.msra.mxu0 0.0
    %3243 = vmatprep.subr.mxu0 0.0
    %3244 = vmatpush1.msra.mxu0 0.0
    %3245 = vmatprep.subr.mxu0 0.0
    %3246 = vmatpush1.msra.mxu0 0.0
    %3247 = vmatprep.subr.mxu0 0.0
    %3248 = vmatpush1.msra.mxu0 0.0
    %3249 = vmatprep.subr.mxu0 0.0
    %3250 = vmatpush1.msra.mxu0 0.0
    %3251 = vmatprep.subr.mxu0 0.0
    %3252 = vmatpush1.msra.mxu0 0.0
    %3253 = vmatprep.subr.mxu0 0.0
    %3254 = vmatpush1.msra.mxu0 0.0
    %3255 = vmatprep.subr.mxu0 0.0
    %3256 = vmatpush1.msra.mxu0 0.0
    %3257 = vmatprep.subr.mxu0 0.0
    %3258 = vmatpush1.msra.mxu0 0.0
    %3259 = vmatprep.subr.mxu0 0.0
    %3260 = vmatpush1.msra.mxu0 0.0
    %3261 = vmatprep.subr.mxu0 0.0
    %3262 = vmatpush1.msra.mxu0 0.0
    %3263 = vmatprep.subr.mxu0 0.0
    %3264 = vmatpush1.msra.mxu0 0.0
    %3265 = vmatprep.subr.mxu0 0.0
    %3266 = vmatpush1.msra.mxu0 0.0
    %3267 = vmatprep.subr.mxu0 0.0
    %3268 = vmatpush1.msra.mxu0 0.0
    %3269 = vmatprep.mubr.f32.mxu0 0.0
    %3270 = vmatmul.mubr.f32.gmra.mrb[0].mxu0 %v3203
    %v3271 = vpop.f32.mrb[0].mxu0
    %v3272 = vadd.f32 %v854, %v3271
    %v3273 = vpop.f32.mrb[0].mxu0
    %3274 = vdwg.mxu0
    %3275 = vrot.lane.b32.xlu0 %v604, 16
    %v3276 = vpop.permute.xlu0 %3275
    %v3278 = vadd.f32 %v3272, %v3276
    %v3279 = vsel %vm80, %v3278, -inf
    %3280 = vmax.xlane.f32.xlu0 %v3279
    %v3281 = vpop.xlane.xlu0 %3280
    %v3282 = vsub.f32 %v3278, %v3281
    %v3283 = vmul.f32 %v3282, 1.442695
    %v3284 = vpow.pop %v3283
    %v3285 = vsel %vm80, %v3284, 0.0
    %3286 = vadd.xlane.f32.xlu0 %v3285
    %v3287 = vpop.xlane.xlu0 %3286
    %v3288 = vrcp.pop %v3287
    %v3289 = vmul.f32 %v3284, %v3288
    %3291 = vrot.lane.b32.xlu0 %v3289, 112
    %v3292 = vpop.permute.xlu0 %3291
    %vm3294 = vcmask 1048448
    %3295 = vst.msk [vmem:[%s5] sm:$0xff] %vm3294, %v3292
    // Predicated region
    $region26: #{run_generator.1} parent=1 // pred_check
      _
    $region27: #{run_generator.1} parent=1 // pred_check_branch
      %3297 = sbr.rel (0) target = $region29
    $region28: #{run_generator.1} parent=1 // pred_region
      _
    $region29: #{run_generator.1} parent=1 // pred_fallthru
      _
    // Predicated region
    $region30: #{run_generator.1} parent=1 // pred_check
      _
    $region31: #{run_generator.1} parent=1 // pred_check_branch
      %3299 = sbr.rel (0) target = $region33
    $region32: #{run_generator.1} parent=1 // pred_region
      _
    $region33: #{run_generator.1} parent=1 // pred_fallthru
      _
    %3300 = vsyncpa [#allocation3], 1

</llo_original>
